<compile_context>
chip_gen: v5e
topology: v5e:2x2
jax: 0.10.0
libtpu: 0.0.40
codegen_flags: <defaults>
</compile_context>

<pallas_src>
import jax
import jax.numpy as jnp
import numpy as np
from jax.experimental import pallas as pl
from jax.experimental.pallas import tpu as pltpu


# Leading/trailing pad rows in the flat conv2-input scratch.  Keeps the real
# data sublane-aligned while making all 9 tap slices start at offset >= 0.
_PAD = 8


# ----------------------------------------------------------------------------
# Fused kernel: conv1(1x1)+bn1+relu -> conv2(3x3,p=1)+bn2+relu
#               -> conv3(1x1)+bn3 + residual -> relu
# ----------------------------------------------------------------------------
def _bottleneck_kernel(xu_ref, xc_ref, xd_ref,
                       w1_ref, b1_ref, w2_ref, b2_ref, w3_ref, b3_ref,
                       o_ref, h1_ref):
    # xu_ref: (1, 1, W, Cin)        row just above the tile (clamped index)
    # xc_ref: (1, TH, W, Cin)       the tile itself (also the residual)
    # xd_ref: (1, 1, W, Cin)        row just below the tile (clamped index)
    # w1_ref: (Cin, width) bf16     BN1 scale folded in;  b1_ref: (1, width) f32
    # w2_ref: (3, 3*width, width)   HWIO packed [kh, kw*width+ci, co], BN2 folded
    # w3_ref: (width, Cout) bf16;   b3_ref: (1, Cout) f32
    # o_ref : (1, TH, W, Cout)
    # h1_ref: VMEM scratch (_PAD + (TH+2)*W + _PAD, width) bf16 -- flat (h, w)
    #         row-major layout of the conv1 output incl. the 1-row H halos.
    f32 = jnp.float32
    TH = xc_ref.shape[1]
    W = xc_ref.shape[2]
    cin = xc_ref.shape[3]
    width = w1_ref.shape[1]
    M = TH * W

    h_idx = pl.program_id(1)
    n_h = pl.num_programs(1)

    w1 = w1_ref[...]
    b1 = b1_ref[...]

    def conv1(x2d):  # (m, Cin) bf16 -> (m, width) bf16  (conv1 + bn1 + relu)
        y = jnp.dot(x2d, w1, preferred_element_type=f32) + b1
        return jnp.maximum(y, 0.0).astype(h1_ref.dtype)

    # Center rows of the tile -> scratch rows [PAD+W, PAD+(TH+1)*W) (aligned,
    # full-width store, no reshape needed).
    h1_ref[_PAD + W:_PAD + (TH + 1) * W, :] = conv1(xc_ref[...].reshape(M, cin))

    # Top halo row -> scratch rows [PAD, PAD+W): real data unless this is the
    # image top (then it is conv2's H zero padding).
    @pl.when(h_idx > 0)
    def _():
        h1_ref[_PAD:_PAD + W, :] = conv1(xu_ref[...].reshape(W, cin))

    @pl.when(h_idx == 0)
    def _():
        h1_ref[_PAD:_PAD + W, :] = jnp.zeros((W, width), h1_ref.dtype)

    # Bottom halo row -> scratch rows [PAD+(TH+1)*W, PAD+(TH+2)*W).
    @pl.when(h_idx < n_h - 1)
    def _():
        h1_ref[_PAD + (TH + 1) * W:_PAD + (TH + 2) * W, :] = conv1(
            xd_ref[...].reshape(W, cin))

    @pl.when(h_idx == n_h - 1)
    def _():
        h1_ref[_PAD + (TH + 1) * W:_PAD + (TH + 2) * W, :] = jnp.zeros(
            (W, width), h1_ref.dtype)

    # conv2 (3x3, padding=1, stride=1) + bn2 + relu as 9 matmuls with K=width.
    # For tap (kh, kw) the operand element of output pixel (t, w) is
    # h1[t+kh-1, w+kw-1] = scratch[_PAD + kh*W + (kw-1) + (t*W + w)], i.e. a
    # contiguous slice of the flat scratch.  The kw=0 / kw=2 taps wrap across
    # the row boundary at the first / last column -- exactly where conv2's W
    # zero padding lives -- so those columns are masked to zero.
    col = jax.lax.broadcasted_iota(jnp.int32, (TH, W, 1), 1).reshape(M, 1)
    not_first_col = col > 0
    not_last_col = col < (W - 1)

    acc2 = None
    for kh in range(3):
        for kw in range(3):
            start = _PAD + kh * W + kw - 1
            a = h1_ref[start:start + M, :]
            if kw == 0:
                a = jnp.where(not_first_col, a, jnp.zeros((), a.dtype))
            elif kw == 2:
                a = jnp.where(not_last_col, a, jnp.zeros((), a.dtype))
            p = jnp.dot(a, w2_ref[kh, kw * width:(kw + 1) * width, :],
                        preferred_element_type=f32)
            acc2 = p if acc2 is None else acc2 + p
    h2 = jnp.maximum(acc2 + b2_ref[...], 0.0).astype(h1_ref.dtype)

    # conv3 (1x1) + bn3 + identity residual + relu.
    y = jnp.dot(h2, w3_ref[...], preferred_element_type=f32) + b3_ref[...]
    y = y + xc_ref[...].reshape(M, cin).astype(f32)
    o_ref[...] = jnp.maximum(y, 0.0).astype(o_ref.dtype).reshape(o_ref.shape)


# ----------------------------------------------------------------------------
# Tiling / VMEM budgeting
# ----------------------------------------------------------------------------
def _tpu_vmem_capacity_bytes():
    try:
        info = pltpu.get_tpu_info()
        cap = getattr(info, "vmem_capacity_bytes", None)
        if cap:
            return int(cap)
    except Exception:
        pass
    return 64 * 1024 * 1024  # conservative fallback (v7x per-TensorCore VMEM)


def _vmem_bytes_estimate(tile_h, W, cin, width, cout):
    """Rough per-grid-step working set: double-buffered in/out blocks,
    resident (double-buffered) weights, conv2-input scratch and the largest
    live compute temporaries."""
    bf, f4 = 2, 4
    m = tile_h * W
    blocks = 2 * (m * cin + 2 * W * cin) * bf          # x tile + halo rows
    blocks += 2 * m * cout * bf                        # output tile
    weights = 2 * ((cin * width + 9 * width * width + width * cout) * bf
                   + (2 * width + cout) * f4)
    scratch = ((tile_h + 2) * W + 2 * _PAD) * width * bf
    temps = m * (width * f4           # conv2 f32 accumulator
                 + cout * f4          # conv3 f32 result
                 + cin * f4           # f32 residual
                 + 2 * width * bf     # h2 + one masked conv2 operand
                 + width * f4         # conv1 pre-relu f32
                 + 2 * f4)            # column-index iota / masks
    return blocks + weights + scratch + temps


def _pick_tile_h(N, H, W, cin, width, cout, budget_bytes):
    """Largest divisor of H whose working set fits the VMEM budget.
    If N == 1, prefer >= 2 H-steps so both TensorCores get work."""
    divs = [t for t in range(1, H + 1) if H % t == 0]
    feas = [t for t in divs
            if _vmem_bytes_estimate(t, W, cin, width, cout) <= budget_bytes]
    if not feas:
        feas = [1]
    if N >= 2:
        return max(feas)
    multi = [t for t in feas if H // t >= 2]
    return max(multi) if multi else max(feas)


# ----------------------------------------------------------------------------
# Wrapper
# ----------------------------------------------------------------------------
def bottleneck_forward(x, fp, *, tile_h=None, interpret=False):
    """x: (N, H, W, Cin) bf16 NHWC; fp: folded params from init_params."""
    N, H, W, cin = x.shape
    width = fp["w1"].shape[1]
    cout = fp["w3"].shape[1]
    assert cin == cout, "identity residual requires inplanes == planes*expansion"

    vmem_cap = _tpu_vmem_capacity_bytes()
    tile_budget = min(int(0.70 * vmem_cap), 100 * 1024 * 1024)
    if tile_h is None:
        tile_h = _pick_tile_h(N, H, W, cin, width, cout, tile_budget)
    assert H % tile_h == 0
    n_h = H // tile_h
    grid = (N, n_h)

    est = _vmem_bytes_estimate(tile_h, W, cin, width, cout)
    vmem_limit = int(min(0.90 * vmem_cap, max(3.0 * est, 48 * 1024 * 1024)))

    flops = 2 * N * H * W * (cin * width + 9 * width * width + width * cout)
    bytes_accessed = int(
        x.size * x.dtype.itemsize                 # activations in
        + N * n_h * 2 * W * cin * 2               # halo row re-reads
        + N * H * W * cout * 2                    # output (bf16)
        + sum(int(np.prod(fp[k].shape)) * 2 for k in ("w1", "w2k", "w3"))
        + sum(int(np.prod(fp[k].shape)) * 4 for k in ("b1", "b2", "b3")))

    kernel = pl.pallas_call(
        _bottleneck_kernel,
        out_shape=jax.ShapeDtypeStruct((N, H, W, cout), x.dtype),
        grid_spec=pltpu.PrefetchScalarGridSpec(
            num_scalar_prefetch=0,
            grid=grid,
            in_specs=[
                # row above the tile (clamped at the top; masked in-kernel)
                pl.BlockSpec((1, 1, W, cin),
                             lambda n, h: (n, jnp.maximum(h * tile_h - 1, 0), 0, 0)),
                # the tile itself (also used as the residual)
                pl.BlockSpec((1, tile_h, W, cin), lambda n, h: (n, h, 0, 0)),
                # row below the tile (clamped at the bottom; masked in-kernel)
                pl.BlockSpec((1, 1, W, cin),
                             lambda n, h: (n, jnp.minimum((h + 1) * tile_h, H - 1), 0, 0)),
                pl.BlockSpec((cin, width), lambda n, h: (0, 0)),             # w1
                pl.BlockSpec((1, width), lambda n, h: (0, 0)),               # b1
                pl.BlockSpec((3, 3 * width, width), lambda n, h: (0, 0, 0)),  # w2 packed
                pl.BlockSpec((1, width), lambda n, h: (0, 0)),               # b2
                pl.BlockSpec((width, cout), lambda n, h: (0, 0)),            # w3
                pl.BlockSpec((1, cout), lambda n, h: (0, 0)),                # b3
            ],
            out_specs=pl.BlockSpec((1, tile_h, W, cout), lambda n, h: (n, h, 0, 0)),
            scratch_shapes=[
                pltpu.VMEM(((tile_h + 2) * W + 2 * _PAD, width), jnp.bfloat16)],
        ),
        compiler_params=pltpu.CompilerParams(
            dimension_semantics=("parallel", "parallel"),
            vmem_limit_bytes=vmem_limit,
        ),
        cost_estimate=pl.CostEstimate(
            flops=flops, transcendentals=0, bytes_accessed=bytes_accessed),
        interpret=interpret,
    )
    return kernel(x, x, x,
                  fp["w1"], fp["b1"], fp["w2k"], fp["b2"], fp["w3"], fp["b3"])


# ----------------------------------------------------------------------------
# Parameter setup (BN folded into weights) + pure-JAX reference
# ----------------------------------------------------------------------------
def fold_bn(gamma, beta, mean, var, eps=1e-5):
    scale = gamma / jnp.sqrt(var + eps)
    bias = beta - mean * scale
    return scale, bias


def init_params(key, inplanes, planes, base_width=64, cardinality=1):
    width = int(np.floor(planes * (base_width / 64))) * cardinality
    outplanes = planes * 4
    ks = jax.random.split(key, 6)

    def bn_params(k, c):
        k1, k2, k3, k4 = jax.random.split(k, 4)
        gamma = 1.0 + 0.1 * jax.random.normal(k1, (c,), jnp.float32)
        beta = 0.1 * jax.random.normal(k2, (c,), jnp.float32)
        mean = 0.1 * jax.random.normal(k3, (c,), jnp.float32)
        var = 1.0 + 0.1 * jax.random.uniform(k4, (c,), jnp.float32)
        return gamma, beta, mean, var

    # PyTorch layouts converted: conv1 (width, Cin, 1, 1) -> (Cin, width);
    # conv2 (width, width, 3, 3) -> HWIO (3, 3, width, width);
    # conv3 (outplanes, width, 1, 1) -> (width, outplanes).
    w1 = 0.1 * jax.random.normal(ks[0], (inplanes, width), jnp.float32)
    s1, b1 = fold_bn(*bn_params(ks[1], width))
    w2 = 0.1 * jax.random.normal(ks[2], (3, 3, width, width), jnp.float32)
    s2, b2 = fold_bn(*bn_params(ks[3], width))
    w3 = 0.1 * jax.random.normal(ks[4], (width, outplanes), jnp.float32)
    s3, b3 = fold_bn(*bn_params(ks[5], outplanes))

    fp = {
        "w1": (w1 * s1[None, :]).astype(jnp.bfloat16),
        "b1": b1.reshape(1, -1).astype(jnp.float32),
        "w2hwio": (w2 * s2[None, None, None, :]).astype(jnp.bfloat16),
        "b2": b2.reshape(1, -1).astype(jnp.float32),
        "w3": (w3 * s3[None, :]).astype(jnp.bfloat16),
        "b3": b3.reshape(1, -1).astype(jnp.float32),
    }
    # Pack conv2 weights for the fused kernel: [kh, kw*width + ci, co].
    fp["w2k"] = fp["w2hwio"].reshape(3, 3 * width, width)
    return fp, width, outplanes


def bottleneck_reference(x, fp):
    """Pure-JAX reference with the same bf16 quantization points."""
    f32 = jnp.float32
    N, H, W, cin = x.shape
    width = fp["w1"].shape[1]
    cout = fp["w3"].shape[1]
    h1 = jnp.dot(x.reshape(-1, cin), fp["w1"], preferred_element_type=f32) + fp["b1"]
    h1 = jnp.maximum(h1, 0.0).astype(jnp.bfloat16).reshape(N, H, W, width)
    h2 = jax.lax.conv_general_dilated(
        h1, fp["w2hwio"], (1, 1), ((1, 1), (1, 1)),
        dimension_numbers=("NHWC", "HWIO", "NHWC"),
        preferred_element_type=f32)
    h2 = jnp.maximum(h2 + fp["b2"], 0.0).astype(jnp.bfloat16)
    y = jnp.dot(h2.reshape(-1, width), fp["w3"], preferred_element_type=f32) + fp["b3"]
    y = y + x.reshape(-1, cin).astype(f32)
    return jnp.maximum(y, 0.0).astype(x.dtype).reshape(N, H, W, cout)


if __name__ == "__main__":
    # Small shapes: batch=2, planes=8 -> width=8, outplanes=32, inplanes=32,
    # spatial 16x16 (identity residual requires inplanes == planes * 4).
    N, H, W = 2, 16, 16
    planes = 8
    inplanes = planes * 4  # 32

    key = jax.random.PRNGKey(0)
    kx, kp = jax.random.split(key)
    x = jax.random.normal(kx, (N, H, W, inplanes), jnp.float32).astype(jnp.bfloat16)
    params, width, outplanes = init_params(kp, inplanes, planes)

    fwd = jax.jit(bottleneck_forward)
    out = jax.block_until_ready(fwd(x, params))

    ref = jax.block_until_ready(jax.jit(bottleneck_reference)(x, params))
    np.testing.assert_allclose(np.asarray(out, np.float32),
                               np.asarray(ref, np.float32),
                               rtol=1e-2, atol=1e-2)
    assert out.shape == (N, H, W, outplanes)
    print("KERNEL_OK")
</pallas_src>

<mosaic_0001>
module attributes {stable_mosaic.version = 11 : i64} {
  func.func @_bottleneck_kernel(%arg0: i32, %arg1: i32, %arg2: memref<1x1x16x32xbf16, #tpu.memory_space<vmem>>, %arg3: memref<1x16x16x32xbf16, #tpu.memory_space<vmem>>, %arg4: memref<1x1x16x32xbf16, #tpu.memory_space<vmem>>, %arg5: memref<32x8xbf16, #tpu.memory_space<vmem>>, %arg6: memref<1x8xf32, #tpu.memory_space<vmem>>, %arg7: memref<3x24x8xbf16, #tpu.memory_space<vmem>>, %arg8: memref<1x8xf32, #tpu.memory_space<vmem>>, %arg9: memref<8x32xbf16, #tpu.memory_space<vmem>>, %arg10: memref<1x32xf32, #tpu.memory_space<vmem>>, %arg11: memref<1x16x16x32xbf16, #tpu.memory_space<vmem>>, %arg12: memref<304x8xbf16, #tpu.memory_space<vmem>>) attributes {dimension_semantics = [#tpu.dimension_semantics<parallel>, #tpu.dimension_semantics<parallel>], iteration_bounds = array<i64: 2, 1>, scalar_prefetch = 0 : i64, scratch_operands = 1 : i64, tpu.core_type = #tpu.core_type<tc>, window_params = [{transform_indices = @transform_0, window_bounds = array<i64: 1, 1, 16, 32>}, {transform_indices = @transform_1, window_bounds = array<i64: 1, 16, 16, 32>}, {transform_indices = @transform_2, window_bounds = array<i64: 1, 1, 16, 32>}, {pipeline_mode = #tpu.pipeline_mode<synchronous>, transform_indices = @transform_3, window_bounds = array<i64: 32, 8>}, {pipeline_mode = #tpu.pipeline_mode<synchronous>, transform_indices = @transform_4, window_bounds = array<i64: 1, 8>}, {pipeline_mode = #tpu.pipeline_mode<synchronous>, transform_indices = @transform_5, window_bounds = array<i64: 3, 24, 8>}, {pipeline_mode = #tpu.pipeline_mode<synchronous>, transform_indices = @transform_6, window_bounds = array<i64: 1, 8>}, {pipeline_mode = #tpu.pipeline_mode<synchronous>, transform_indices = @transform_7, window_bounds = array<i64: 8, 32>}, {pipeline_mode = #tpu.pipeline_mode<synchronous>, transform_indices = @transform_8, window_bounds = array<i64: 1, 32>}, {transform_indices = @transform_9, window_bounds = array<i64: 1, 16, 16, 32>}]} {
    %c0 = arith.constant 0 : index
    %c0_0 = arith.constant 0 : index
    %0 = vector.load %arg5[%c0, %c0_0] : memref<32x8xbf16, #tpu.memory_space<vmem>>, vector<32x8xbf16>
    %c0_1 = arith.constant 0 : index
    %c0_2 = arith.constant 0 : index
    %1 = vector.load %arg6[%c0_1, %c0_2] : memref<1x8xf32, #tpu.memory_space<vmem>>, vector<1x8xf32>
    %c0_3 = arith.constant 0 : index
    %c0_4 = arith.constant 0 : index
    %c0_5 = arith.constant 0 : index
    %c0_6 = arith.constant 0 : index
    %2 = vector.load %arg3[%c0_3, %c0_4, %c0_5, %c0_6] : memref<1x16x16x32xbf16, #tpu.memory_space<vmem>>, vector<1x16x16x32xbf16>
    %3 = vector.shape_cast %2 : vector<1x16x16x32xbf16> to vector<256x32xbf16>
    %cst = arith.constant dense<0.000000e+00> : vector<256x8xf32>
    %4 = tpu.matmul %3, %0, %cst {dimension_numbers = #tpu.dot_dimension_numbers<[1], [0], [0], [1], [0, 0, 1, 1], [], []>} : vector<256x32xbf16>, vector<32x8xbf16>, vector<256x8xf32> -> vector<256x8xf32>
    %5 = vector.broadcast %1 : vector<1x8xf32> to vector<256x8xf32>
    %6 = arith.addf %4, %5 : vector<256x8xf32>
    %cst_7 = arith.constant 0.000000e+00 : f32
    %7 = vector.broadcast %cst_7 : f32 to vector<256x8xf32>
    %8 = arith.maximumf %6, %7 : vector<256x8xf32>
    %9 = arith.truncf %8 : vector<256x8xf32> to vector<256x8xbf16>
    %c24 = arith.constant 24 : index
    %c0_8 = arith.constant 0 : index
    %10 = vector.load %arg12[%c24, %c0_8] : memref<304x8xbf16, #tpu.memory_space<vmem>>, vector<256x8xbf16>
    tpu.vector_store %arg12[%c24, %c0_8], %9 {strides = array<i32>} : memref<304x8xbf16, #tpu.memory_space<vmem>>, vector<256x8xbf16>,
    %c0_i32 = arith.constant 0 : i32
    %11 = arith.cmpi sgt, %arg1, %c0_i32 : i32
    %12 = arith.extui %11 : i1 to i32
    %c0_i32_9 = arith.constant 0 : i32
    %13 = arith.cmpi ne, %12, %c0_i32_9 : i32
    scf.if %13 {
      %c0_83 = arith.constant 0 : index
      %c0_84 = arith.constant 0 : index
      %c0_85 = arith.constant 0 : index
      %c0_86 = arith.constant 0 : index
      %117 = vector.load %arg2[%c0_83, %c0_84, %c0_85, %c0_86] : memref<1x1x16x32xbf16, #tpu.memory_space<vmem>>, vector<1x1x16x32xbf16>
      %118 = vector.shape_cast %117 : vector<1x1x16x32xbf16> to vector<16x32xbf16>
      %cst_87 = arith.constant dense<0.000000e+00> : vector<16x8xf32>
      %119 = tpu.matmul %118, %0, %cst_87 {dimension_numbers = #tpu.dot_dimension_numbers<[1], [0], [0], [1], [0, 0, 1, 1], [], []>} : vector<16x32xbf16>, vector<32x8xbf16>, vector<16x8xf32> -> vector<16x8xf32>
      %120 = vector.broadcast %1 : vector<1x8xf32> to vector<16x8xf32>
      %121 = arith.addf %119, %120 : vector<16x8xf32>
      %cst_88 = arith.constant 0.000000e+00 : f32
      %122 = vector.broadcast %cst_88 : f32 to vector<16x8xf32>
      %123 = arith.maximumf %121, %122 : vector<16x8xf32>
      %124 = arith.truncf %123 : vector<16x8xf32> to vector<16x8xbf16>
      %c8_89 = arith.constant 8 : index
      %c0_90 = arith.constant 0 : index
      %125 = vector.load %arg12[%c8_89, %c0_90] : memref<304x8xbf16, #tpu.memory_space<vmem>>, vector<16x8xbf16>
      tpu.vector_store %arg12[%c8_89, %c0_90], %124 {strides = array<i32>} : memref<304x8xbf16, #tpu.memory_space<vmem>>, vector<16x8xbf16>,
    } else {
    }
    %c0_i32_10 = arith.constant 0 : i32
    %14 = arith.cmpi eq, %arg1, %c0_i32_10 : i32
    %15 = arith.extui %14 : i1 to i32
    %c0_i32_11 = arith.constant 0 : i32
    %16 = arith.cmpi ne, %15, %c0_i32_11 : i32
    scf.if %16 {
      %cst_83 = arith.constant 0.000000e+00 : bf16
      %117 = vector.broadcast %cst_83 : bf16 to vector<16x8xbf16>
      %c8_84 = arith.constant 8 : index
      %c0_85 = arith.constant 0 : index
      %118 = vector.load %arg12[%c8_84, %c0_85] : memref<304x8xbf16, #tpu.memory_space<vmem>>, vector<16x8xbf16>
      tpu.vector_store %arg12[%c8_84, %c0_85], %117 {strides = array<i32>} : memref<304x8xbf16, #tpu.memory_space<vmem>>, vector<16x8xbf16>,
    } else {
    }
    %c0_i32_12 = arith.constant 0 : i32
    %17 = arith.cmpi slt, %arg1, %c0_i32_12 : i32
    %18 = arith.extui %17 : i1 to i32
    %c0_i32_13 = arith.constant 0 : i32
    %19 = arith.cmpi ne, %18, %c0_i32_13 : i32
    scf.if %19 {
      %c0_83 = arith.constant 0 : index
      %c0_84 = arith.constant 0 : index
      %c0_85 = arith.constant 0 : index
      %c0_86 = arith.constant 0 : index
      %117 = vector.load %arg4[%c0_83, %c0_84, %c0_85, %c0_86] : memref<1x1x16x32xbf16, #tpu.memory_space<vmem>>, vector<1x1x16x32xbf16>
      %118 = vector.shape_cast %117 : vector<1x1x16x32xbf16> to vector<16x32xbf16>
      %cst_87 = arith.constant dense<0.000000e+00> : vector<16x8xf32>
      %119 = tpu.matmul %118, %0, %cst_87 {dimension_numbers = #tpu.dot_dimension_numbers<[1], [0], [0], [1], [0, 0, 1, 1], [], []>} : vector<16x32xbf16>, vector<32x8xbf16>, vector<16x8xf32> -> vector<16x8xf32>
      %120 = vector.broadcast %1 : vector<1x8xf32> to vector<16x8xf32>
      %121 = arith.addf %119, %120 : vector<16x8xf32>
      %cst_88 = arith.constant 0.000000e+00 : f32
      %122 = vector.broadcast %cst_88 : f32 to vector<16x8xf32>
      %123 = arith.maximumf %121, %122 : vector<16x8xf32>
      %124 = arith.truncf %123 : vector<16x8xf32> to vector<16x8xbf16>
      %c280 = arith.constant 280 : index
      %c0_89 = arith.constant 0 : index
      %125 = vector.load %arg12[%c280, %c0_89] : memref<304x8xbf16, #tpu.memory_space<vmem>>, vector<16x8xbf16>
      tpu.vector_store %arg12[%c280, %c0_89], %124 {strides = array<i32>} : memref<304x8xbf16, #tpu.memory_space<vmem>>, vector<16x8xbf16>,
    } else {
    }
    %c0_i32_14 = arith.constant 0 : i32
    %20 = arith.cmpi eq, %arg1, %c0_i32_14 : i32
    %21 = arith.extui %20 : i1 to i32
    %c0_i32_15 = arith.constant 0 : i32
    %22 = arith.cmpi ne, %21, %c0_i32_15 : i32
    scf.if %22 {
      %cst_83 = arith.constant 0.000000e+00 : bf16
      %117 = vector.broadcast %cst_83 : bf16 to vector<16x8xbf16>
      %c280 = arith.constant 280 : index
      %c0_84 = arith.constant 0 : index
      %118 = vector.load %arg12[%c280, %c0_84] : memref<304x8xbf16, #tpu.memory_space<vmem>>, vector<16x8xbf16>
      tpu.vector_store %arg12[%c280, %c0_84], %117 {strides = array<i32>} : memref<304x8xbf16, #tpu.memory_space<vmem>>, vector<16x8xbf16>,
    } else {
    }
    %23 = tpu.iota {dimensions = array<i32: 1>} : vector<16x16x1xi32>
    %24 = vector.shape_cast %23 : vector<16x16x1xi32> to vector<256x1xi32>
    %c0_i32_16 = arith.constant 0 : i32
    %25 = vector.broadcast %c0_i32_16 : i32 to vector<256x1xi32>
    %26 = arith.cmpi sgt, %24, %25 : vector<256x1xi32>
    %c15_i32 = arith.constant 15 : i32
    %27 = vector.broadcast %c15_i32 : i32 to vector<256x1xi32>
    %28 = arith.cmpi slt, %24, %27 : vector<256x1xi32>
    %c7 = arith.constant 7 : index
    %c0_17 = arith.constant 0 : index
    %29 = vector.load %arg12[%c7, %c0_17] : memref<304x8xbf16, #tpu.memory_space<vmem>>, vector<256x8xbf16>
    %cst_18 = arith.constant 0.000000e+00 : bf16
    %30 = vector.shape_cast %26 : vector<256x1xi1> to vector<256x1xi1>
    %31 = vector.broadcast %30 : vector<256x1xi1> to vector<256x8xi1>
    %32 = vector.broadcast %cst_18 : bf16 to vector<256x8xbf16>
    %33 = arith.select %31, %29, %32 : vector<256x8xi1>, vector<256x8xbf16>
    %c0_19 = arith.constant 0 : index
    %c0_20 = arith.constant 0 : index
    %c0_21 = arith.constant 0 : index
    %34 = vector.load %arg7[%c0_19, %c0_20, %c0_21] : memref<3x24x8xbf16, #tpu.memory_space<vmem>>, vector<1x8x8xbf16>
    %35 = vector.shape_cast %34 : vector<1x8x8xbf16> to vector<8x8xbf16>
    %cst_22 = arith.constant dense<0.000000e+00> : vector<256x8xf32>
    %36 = tpu.matmul %33, %35, %cst_22 {dimension_numbers = #tpu.dot_dimension_numbers<[1], [0], [0], [1], [0, 0, 1, 1], [], []>} : vector<256x8xbf16>, vector<8x8xbf16>, vector<256x8xf32> -> vector<256x8xf32>
    %c8 = arith.constant 8 : index
    %c0_23 = arith.constant 0 : index
    %37 = vector.load %arg12[%c8, %c0_23] : memref<304x8xbf16, #tpu.memory_space<vmem>>, vector<256x8xbf16>
    %c0_24 = arith.constant 0 : index
    %c8_25 = arith.constant 8 : index
    %c0_26 = arith.constant 0 : index
    %38 = vector.load %arg7[%c0_24, %c8_25, %c0_26] : memref<3x24x8xbf16, #tpu.memory_space<vmem>>, vector<1x8x8xbf16>
    %39 = vector.shape_cast %38 : vector<1x8x8xbf16> to vector<8x8xbf16>
    %cst_27 = arith.constant dense<0.000000e+00> : vector<256x8xf32>
    %40 = tpu.matmul %37, %39, %cst_27 {dimension_numbers = #tpu.dot_dimension_numbers<[1], [0], [0], [1], [0, 0, 1, 1], [], []>} : vector<256x8xbf16>, vector<8x8xbf16>, vector<256x8xf32> -> vector<256x8xf32>
    %41 = arith.addf %36, %40 : vector<256x8xf32>
    %c9 = arith.constant 9 : index
    %c0_28 = arith.constant 0 : index
    %42 = vector.load %arg12[%c9, %c0_28] : memref<304x8xbf16, #tpu.memory_space<vmem>>, vector<256x8xbf16>
    %cst_29 = arith.constant 0.000000e+00 : bf16
    %43 = vector.shape_cast %28 : vector<256x1xi1> to vector<256x1xi1>
    %44 = vector.broadcast %43 : vector<256x1xi1> to vector<256x8xi1>
    %45 = vector.broadcast %cst_29 : bf16 to vector<256x8xbf16>
    %46 = arith.select %44, %42, %45 : vector<256x8xi1>, vector<256x8xbf16>
    %c0_30 = arith.constant 0 : index
    %c16 = arith.constant 16 : index
    %c0_31 = arith.constant 0 : index
    %47 = vector.load %arg7[%c0_30, %c16, %c0_31] : memref<3x24x8xbf16, #tpu.memory_space<vmem>>, vector<1x8x8xbf16>
    %48 = vector.shape_cast %47 : vector<1x8x8xbf16> to vector<8x8xbf16>
    %cst_32 = arith.constant dense<0.000000e+00> : vector<256x8xf32>
    %49 = tpu.matmul %46, %48, %cst_32 {dimension_numbers = #tpu.dot_dimension_numbers<[1], [0], [0], [1], [0, 0, 1, 1], [], []>} : vector<256x8xbf16>, vector<8x8xbf16>, vector<256x8xf32> -> vector<256x8xf32>
    %50 = arith.addf %41, %49 : vector<256x8xf32>
    %c23 = arith.constant 23 : index
    %c0_33 = arith.constant 0 : index
    %51 = vector.load %arg12[%c23, %c0_33] : memref<304x8xbf16, #tpu.memory_space<vmem>>, vector<256x8xbf16>
    %cst_34 = arith.constant 0.000000e+00 : bf16
    %52 = vector.shape_cast %26 : vector<256x1xi1> to vector<256x1xi1>
    %53 = vector.broadcast %52 : vector<256x1xi1> to vector<256x8xi1>
    %54 = vector.broadcast %cst_34 : bf16 to vector<256x8xbf16>
    %55 = arith.select %53, %51, %54 : vector<256x8xi1>, vector<256x8xbf16>
    %c1 = arith.constant 1 : index
    %c0_35 = arith.constant 0 : index
    %c0_36 = arith.constant 0 : index
    %56 = vector.load %arg7[%c1, %c0_35, %c0_36] : memref<3x24x8xbf16, #tpu.memory_space<vmem>>, vector<1x8x8xbf16>
    %57 = vector.shape_cast %56 : vector<1x8x8xbf16> to vector<8x8xbf16>
    %cst_37 = arith.constant dense<0.000000e+00> : vector<256x8xf32>
    %58 = tpu.matmul %55, %57, %cst_37 {dimension_numbers = #tpu.dot_dimension_numbers<[1], [0], [0], [1], [0, 0, 1, 1], [], []>} : vector<256x8xbf16>, vector<8x8xbf16>, vector<256x8xf32> -> vector<256x8xf32>
    %59 = arith.addf %50, %58 : vector<256x8xf32>
    %c24_38 = arith.constant 24 : index
    %c0_39 = arith.constant 0 : index
    %60 = vector.load %arg12[%c24_38, %c0_39] : memref<304x8xbf16, #tpu.memory_space<vmem>>, vector<256x8xbf16>
    %c1_40 = arith.constant 1 : index
    %c8_41 = arith.constant 8 : index
    %c0_42 = arith.constant 0 : index
    %61 = vector.load %arg7[%c1_40, %c8_41, %c0_42] : memref<3x24x8xbf16, #tpu.memory_space<vmem>>, vector<1x8x8xbf16>
    %62 = vector.shape_cast %61 : vector<1x8x8xbf16> to vector<8x8xbf16>
    %cst_43 = arith.constant dense<0.000000e+00> : vector<256x8xf32>
    %63 = tpu.matmul %60, %62, %cst_43 {dimension_numbers = #tpu.dot_dimension_numbers<[1], [0], [0], [1], [0, 0, 1, 1], [], []>} : vector<256x8xbf16>, vector<8x8xbf16>, vector<256x8xf32> -> vector<256x8xf32>
    %64 = arith.addf %59, %63 : vector<256x8xf32>
    %c25 = arith.constant 25 : index
    %c0_44 = arith.constant 0 : index
    %65 = vector.load %arg12[%c25, %c0_44] : memref<304x8xbf16, #tpu.memory_space<vmem>>, vector<256x8xbf16>
    %cst_45 = arith.constant 0.000000e+00 : bf16
    %66 = vector.shape_cast %28 : vector<256x1xi1> to vector<256x1xi1>
    %67 = vector.broadcast %66 : vector<256x1xi1> to vector<256x8xi1>
    %68 = vector.broadcast %cst_45 : bf16 to vector<256x8xbf16>
    %69 = arith.select %67, %65, %68 : vector<256x8xi1>, vector<256x8xbf16>
    %c1_46 = arith.constant 1 : index
    %c16_47 = arith.constant 16 : index
    %c0_48 = arith.constant 0 : index
    %70 = vector.load %arg7[%c1_46, %c16_47, %c0_48] : memref<3x24x8xbf16, #tpu.memory_space<vmem>>, vector<1x8x8xbf16>
    %71 = vector.shape_cast %70 : vector<1x8x8xbf16> to vector<8x8xbf16>
    %cst_49 = arith.constant dense<0.000000e+00> : vector<256x8xf32>
    %72 = tpu.matmul %69, %71, %cst_49 {dimension_numbers = #tpu.dot_dimension_numbers<[1], [0], [0], [1], [0, 0, 1, 1], [], []>} : vector<256x8xbf16>, vector<8x8xbf16>, vector<256x8xf32> -> vector<256x8xf32>
    %73 = arith.addf %64, %72 : vector<256x8xf32>
    %c39 = arith.constant 39 : index
    %c0_50 = arith.constant 0 : index
    %74 = vector.load %arg12[%c39, %c0_50] : memref<304x8xbf16, #tpu.memory_space<vmem>>, vector<256x8xbf16>
    %cst_51 = arith.constant 0.000000e+00 : bf16
    %75 = vector.shape_cast %26 : vector<256x1xi1> to vector<256x1xi1>
    %76 = vector.broadcast %75 : vector<256x1xi1> to vector<256x8xi1>
    %77 = vector.broadcast %cst_51 : bf16 to vector<256x8xbf16>
    %78 = arith.select %76, %74, %77 : vector<256x8xi1>, vector<256x8xbf16>
    %c2 = arith.constant 2 : index
    %c0_52 = arith.constant 0 : index
    %c0_53 = arith.constant 0 : index
    %79 = vector.load %arg7[%c2, %c0_52, %c0_53] : memref<3x24x8xbf16, #tpu.memory_space<vmem>>, vector<1x8x8xbf16>
    %80 = vector.shape_cast %79 : vector<1x8x8xbf16> to vector<8x8xbf16>
    %cst_54 = arith.constant dense<0.000000e+00> : vector<256x8xf32>
    %81 = tpu.matmul %78, %80, %cst_54 {dimension_numbers = #tpu.dot_dimension_numbers<[1], [0], [0], [1], [0, 0, 1, 1], [], []>} : vector<256x8xbf16>, vector<8x8xbf16>, vector<256x8xf32> -> vector<256x8xf32>
    %82 = arith.addf %73, %81 : vector<256x8xf32>
    %c40 = arith.constant 40 : index
    %c0_55 = arith.constant 0 : index
    %83 = vector.load %arg12[%c40, %c0_55] : memref<304x8xbf16, #tpu.memory_space<vmem>>, vector<256x8xbf16>
    %c2_56 = arith.constant 2 : index
    %c8_57 = arith.constant 8 : index
    %c0_58 = arith.constant 0 : index
    %84 = vector.load %arg7[%c2_56, %c8_57, %c0_58] : memref<3x24x8xbf16, #tpu.memory_space<vmem>>, vector<1x8x8xbf16>
    %85 = vector.shape_cast %84 : vector<1x8x8xbf16> to vector<8x8xbf16>
    %cst_59 = arith.constant dense<0.000000e+00> : vector<256x8xf32>
    %86 = tpu.matmul %83, %85, %cst_59 {dimension_numbers = #tpu.dot_dimension_numbers<[1], [0], [0], [1], [0, 0, 1, 1], [], []>} : vector<256x8xbf16>, vector<8x8xbf16>, vector<256x8xf32> -> vector<256x8xf32>
    %87 = arith.addf %82, %86 : vector<256x8xf32>
    %c41 = arith.constant 41 : index
    %c0_60 = arith.constant 0 : index
    %88 = vector.load %arg12[%c41, %c0_60] : memref<304x8xbf16, #tpu.memory_space<vmem>>, vector<256x8xbf16>
    %cst_61 = arith.constant 0.000000e+00 : bf16
    %89 = vector.shape_cast %28 : vector<256x1xi1> to vector<256x1xi1>
    %90 = vector.broadcast %89 : vector<256x1xi1> to vector<256x8xi1>
    %91 = vector.broadcast %cst_61 : bf16 to vector<256x8xbf16>
    %92 = arith.select %90, %88, %91 : vector<256x8xi1>, vector<256x8xbf16>
    %c2_62 = arith.constant 2 : index
    %c16_63 = arith.constant 16 : index
    %c0_64 = arith.constant 0 : index
    %93 = vector.load %arg7[%c2_62, %c16_63, %c0_64] : memref<3x24x8xbf16, #tpu.memory_space<vmem>>, vector<1x8x8xbf16>
    %94 = vector.shape_cast %93 : vector<1x8x8xbf16> to vector<8x8xbf16>
    %cst_65 = arith.constant dense<0.000000e+00> : vector<256x8xf32>
    %95 = tpu.matmul %92, %94, %cst_65 {dimension_numbers = #tpu.dot_dimension_numbers<[1], [0], [0], [1], [0, 0, 1, 1], [], []>} : vector<256x8xbf16>, vector<8x8xbf16>, vector<256x8xf32> -> vector<256x8xf32>
    %96 = arith.addf %87, %95 : vector<256x8xf32>
    %c0_66 = arith.constant 0 : index
    %c0_67 = arith.constant 0 : index
    %97 = vector.load %arg8[%c0_66, %c0_67] : memref<1x8xf32, #tpu.memory_space<vmem>>, vector<1x8xf32>
    %98 = vector.broadcast %97 : vector<1x8xf32> to vector<256x8xf32>
    %99 = arith.addf %96, %98 : vector<256x8xf32>
    %cst_68 = arith.constant 0.000000e+00 : f32
    %100 = vector.broadcast %cst_68 : f32 to vector<256x8xf32>
    %101 = arith.maximumf %99, %100 : vector<256x8xf32>
    %102 = arith.truncf %101 : vector<256x8xf32> to vector<256x8xbf16>
    %c0_69 = arith.constant 0 : index
    %c0_70 = arith.constant 0 : index
    %103 = vector.load %arg9[%c0_69, %c0_70] : memref<8x32xbf16, #tpu.memory_space<vmem>>, vector<8x32xbf16>
    %cst_71 = arith.constant dense<0.000000e+00> : vector<256x32xf32>
    %104 = tpu.matmul %102, %103, %cst_71 {dimension_numbers = #tpu.dot_dimension_numbers<[1], [0], [0], [1], [0, 0, 1, 1], [], []>} : vector<256x8xbf16>, vector<8x32xbf16>, vector<256x32xf32> -> vector<256x32xf32>
    %c0_72 = arith.constant 0 : index
    %c0_73 = arith.constant 0 : index
    %105 = vector.load %arg10[%c0_72, %c0_73] : memref<1x32xf32, #tpu.memory_space<vmem>>, vector<1x32xf32>
    %106 = vector.broadcast %105 : vector<1x32xf32> to vector<256x32xf32>
    %107 = arith.addf %104, %106 : vector<256x32xf32>
    %c0_74 = arith.constant 0 : index
    %c0_75 = arith.constant 0 : index
    %c0_76 = arith.constant 0 : index
    %c0_77 = arith.constant 0 : index
    %108 = vector.load %arg3[%c0_74, %c0_75, %c0_76, %c0_77] : memref<1x16x16x32xbf16, #tpu.memory_space<vmem>>, vector<1x16x16x32xbf16>
    %109 = vector.shape_cast %108 : vector<1x16x16x32xbf16> to vector<256x32xbf16>
    %110 = arith.extf %109 : vector<256x32xbf16> to vector<256x32xf32>
    %111 = arith.addf %107, %110 : vector<256x32xf32>
    %cst_78 = arith.constant 0.000000e+00 : f32
    %112 = vector.broadcast %cst_78 : f32 to vector<256x32xf32>
    %113 = arith.maximumf %111, %112 : vector<256x32xf32>
    %114 = arith.truncf %113 : vector<256x32xf32> to vector<256x32xbf16>
    %115 = vector.shape_cast %114 : vector<256x32xbf16> to vector<1x16x16x32xbf16>
    %c0_79 = arith.constant 0 : index
    %c0_80 = arith.constant 0 : index
    %c0_81 = arith.constant 0 : index
    %c0_82 = arith.constant 0 : index
    %116 = vector.load %arg11[%c0_79, %c0_80, %c0_81, %c0_82] : memref<1x16x16x32xbf16, #tpu.memory_space<vmem>>, vector<1x16x16x32xbf16>
    tpu.vector_store %arg11[%c0_79, %c0_80, %c0_81, %c0_82], %115 {strides = array<i32>} : memref<1x16x16x32xbf16, #tpu.memory_space<vmem>>, vector<1x16x16x32xbf16>,
    return
  }
  func.func @transform_0(%arg0: i32, %arg1: i32) -> (i32, i32, i32, i32) {
    %c16_i32 = arith.constant 16 : i32
    %0 = arith.muli %arg1, %c16_i32 : i32
    %c1_i32 = arith.constant 1 : i32
    %1 = arith.subi %0, %c1_i32 : i32
    %c0_i32 = arith.constant 0 : i32
    %2 = arith.maxsi %1, %c0_i32 : i32
    %c0_i32_0 = arith.constant 0 : i32
    %c0_i32_1 = arith.constant 0 : i32
    %c0_i32_2 = arith.constant 0 : i32
    return %arg0, %2, %c0_i32_0, %c0_i32_1 : i32, i32, i32, i32
  }
  func.func @transform_1(%arg0: i32, %arg1: i32) -> (i32, i32, i32, i32) {
    %c0_i32 = arith.constant 0 : i32
    %c0_i32_0 = arith.constant 0 : i32
    %c0_i32_1 = arith.constant 0 : i32
    return %arg0, %arg1, %c0_i32, %c0_i32_0 : i32, i32, i32, i32
  }
  func.func @transform_2(%arg0: i32, %arg1: i32) -> (i32, i32, i32, i32) {
    %c1_i32 = arith.constant 1 : i32
    %0 = arith.addi %arg1, %c1_i32 : i32
    %c16_i32 = arith.constant 16 : i32
    %1 = arith.muli %0, %c16_i32 : i32
    %c15_i32 = arith.constant 15 : i32
    %2 = arith.minsi %1, %c15_i32 : i32
    %c0_i32 = arith.constant 0 : i32
    %c0_i32_0 = arith.constant 0 : i32
    %c0_i32_1 = arith.constant 0 : i32
    return %arg0, %2, %c0_i32, %c0_i32_0 : i32, i32, i32, i32
  }
  func.func @transform_3(%arg0: i32, %arg1: i32) -> (i32, i32) {
    %c0_i32 = arith.constant 0 : i32
    %c0_i32_0 = arith.constant 0 : i32
    %c0_i32_1 = arith.constant 0 : i32
    return %c0_i32, %c0_i32_0 : i32, i32
  }
  func.func @transform_4(%arg0: i32, %arg1: i32) -> (i32, i32) {
    %c0_i32 = arith.constant 0 : i32
    %c0_i32_0 = arith.constant 0 : i32
    %c0_i32_1 = arith.constant 0 : i32
    return %c0_i32, %c0_i32_0 : i32, i32
  }
  func.func @transform_5(%arg0: i32, %arg1: i32) -> (i32, i32, i32) {
    %c0_i32 = arith.constant 0 : i32
    %c0_i32_0 = arith.constant 0 : i32
    %c0_i32_1 = arith.constant 0 : i32
    %c0_i32_2 = arith.constant 0 : i32
    return %c0_i32, %c0_i32_0, %c0_i32_1 : i32, i32, i32
  }
  func.func @transform_6(%arg0: i32, %arg1: i32) -> (i32, i32) {
    %c0_i32 = arith.constant 0 : i32
    %c0_i32_0 = arith.constant 0 : i32
    %c0_i32_1 = arith.constant 0 : i32
    return %c0_i32, %c0_i32_0 : i32, i32
  }
  func.func @transform_7(%arg0: i32, %arg1: i32) -> (i32, i32) {
    %c0_i32 = arith.constant 0 : i32
    %c0_i32_0 = arith.constant 0 : i32
    %c0_i32_1 = arith.constant 0 : i32
    return %c0_i32, %c0_i32_0 : i32, i32
  }
  func.func @transform_8(%arg0: i32, %arg1: i32) -> (i32, i32) {
    %c0_i32 = arith.constant 0 : i32
    %c0_i32_0 = arith.constant 0 : i32
    %c0_i32_1 = arith.constant 0 : i32
    return %c0_i32, %c0_i32_0 : i32, i32
  }
  func.func @transform_9(%arg0: i32, %arg1: i32) -> (i32, i32, i32, i32) {
    %c0_i32 = arith.constant 0 : i32
    %c0_i32_0 = arith.constant 0 : i32
    %c0_i32_1 = arith.constant 0 : i32
    return %arg0, %arg1, %c0_i32, %c0_i32_0 : i32, i32, i32, i32
  }
}

</mosaic_0001>

<llo_original>
// kernel: bottleneck_forward.1
$region0: #{bottleneck_forward.1}
  #allocation0 [shape = 'u32[]', space=smem, size = 0x4, offset = 0x4, fixed_abs, tag = 'smem constant byte address 0x4 - core index']
  #allocation1 [shape = 'u32[72,128]{1,0:T(1,128)}', space=vmem, size = 0x9000, scoped, tag = 'internal scratch']
  #allocation2 [shape = 'bf16[304,8]{1,0:T(8,128)(2,1)}', space=vmem, size = 0x13000, scoped, tag = 'scratch operand']
  %s0 = inlined_call_operand.hbm [shape: bf16[2,16,16,32], index: 0, kind: input, shape index: {}, may-alias: {0,1,2}]
  %s1 = inlined_call_operand.hbm [shape: bf16[2,16,16,32], index: 1, kind: input, shape index: {}, may-alias: {0,1,2}]
  %s2 = inlined_call_operand.hbm [shape: bf16[2,16,16,32], index: 2, kind: input, shape index: {}, may-alias: {0,1,2}]
  %s3 = inlined_call_operand.vmem [shape: bf16[32,8], index: 3, kind: input, shape index: {}]
  %s4 = inlined_call_operand.vmem [shape: f32[1,8], index: 4, kind: input, shape index: {}]
  %s5 = inlined_call_operand.vmem [shape: bf16[3,24,8], index: 5, kind: input, shape index: {}]
  %s6 = inlined_call_operand.vmem [shape: f32[1,8], index: 6, kind: input, shape index: {}]
  %s7 = inlined_call_operand.vmem [shape: bf16[8,32], index: 7, kind: input, shape index: {}]
  %s8 = inlined_call_operand.vmem [shape: f32[1,32], index: 8, kind: input, shape index: {}]
  %s9 = inlined_call_operand.hbm [shape: bf16[2,16,16,32], index: 9, kind: output, shape index: {}]
  %s10 = sld [smem:[#allocation0]]
  $region97: #{bottleneck_forward.1} parent=0
    _
  %s12 = ssub.s32 1, %s10
  %s13 = scalar_select 0, %s12, %s10
  $region1: #{bottleneck_forward.1} parent=0
    #allocation3 [shape = 'u8[8192]{0}', space=vmem, size = 0x2000, scoped, tag = 'input window, operand 0']
    #allocation4 [shape = 's32[2]{0}', space=sflag, size = 0x8, scoped, tag = 'scoped memory for bottleneck_forward.1']
    #allocation5 [shape = 's32[2]{0}', space=sflag, size = 0x8, scoped, tag = 'scoped memory for bottleneck_forward.1']
    #allocation6 [shape = 'u8[131072]{0}', space=vmem, size = 0x20000, scoped, tag = 'input window, operand 1']
    #allocation7 [shape = 's32[2]{0}', space=sflag, size = 0x8, scoped, tag = 'scoped memory for bottleneck_forward.1']
    #allocation8 [shape = 'u8[8192]{0}', space=vmem, size = 0x2000, scoped, tag = 'input window, operand 2']
    #allocation9 [shape = 'u8[131072]{0}', space=vmem, size = 0x20000, scoped, tag = 'output window, operand 0']
    %14 = vsyncpa [#allocation4], 0
    %s15 = scalar_lea.sflag [#allocation4], 1
    %16 = vsyncpa %s15, 0
    %17 = vsyncpa [#allocation7], 0
    %s18 = scalar_lea.sflag [#allocation7], 1
    %19 = vsyncpa %s18, 0
    %20 = vsyncpa [#allocation5], 0
    %s21 = scalar_lea.sflag [#allocation5], 1
    %22 = vsyncpa %s21, 0
    loop: start=0, step=1, limit=4
    $region2: #{bottleneck_forward.1} parent=1 // loop_pre_header
      _
    $region3: #{bottleneck_forward.1} parent=1 // loop_header
      %s24 = sphi 0, %s28
      %p25 = scmp.ge.s32.totalorder %s24, 4
      %s31 = sphi 0, %s43
      %s32 = sphi 0, %s39
      %s33 = sphi 0, %s31
      %s34 = sphi 0, %s32
      %s35 = sphi 0, %s33
      %s36 = sphi 0, %s34
      %s56 = sphi 0, %s58
      %s59 = sphi 0, %s56
      %s60 = sphi 0, %s59
      %s76 = sphi 0, %s60
      %s84 = sphi 0, %s86
      %s87 = sphi 0, %s84
      %s88 = sphi 0, %s87
      %s104 = sphi 0, %s88
      %s120 = sphi 0, %s122
      %s123 = sphi 0, %s120
      %s124 = sphi 0, %s123
      %s140 = sphi 0, %s124
      %s144 = sphi 0, %s144
      %s146 = sphi 0, %s144
      %s147 = sphi 0, %s146
      %s161 = sphi 0, %s147
      %s165 = sphi 0, %s165
      %s167 = sphi 0, %s165
      %s168 = sphi 0, %s167
      %s182 = sphi 0, %s168
      %s186 = sphi 0, %s186
      %s188 = sphi 0, %s186
      %s189 = sphi 0, %s188
      %s203 = sphi 0, %s189
      %s207 = sphi 0, %s207
      %s209 = sphi 0, %s207
      %s210 = sphi 0, %s209
      %s224 = sphi 0, %s210
      %s228 = sphi 0, %s228
      %s230 = sphi 0, %s228
      %s231 = sphi 0, %s230
      %s245 = sphi 0, %s231
      %s249 = sphi 0, %s249
      %s251 = sphi 0, %s249
      %s252 = sphi 0, %s251
      %s266 = sphi 0, %s252
      %s274 = sphi 0, %s276
      %s277 = sphi 0, %s274
      %s278 = sphi 0, %s277
      %s294 = sphi 0, %s278
    $region4: #{bottleneck_forward.1} parent=1 // loop_header_branch
      %27 = sbr.rel (%p25) target = $region8
    $region5: #{bottleneck_forward.1} parent=1 // loop_body
      %s29 = ssub.s32 %s24, 1
      %s30 = ssub.s32 %s24, 2
      %s37 = sadd.s32 1, %s32
      %p38 = scmp.ge.s32.totalorder %s37, 1
      %s39 = scalar_select %p38, 0, %s37
      %s40 = sadd.s32 1, %s31
      %s41 = scalar_select %p38, %s40, %s31
      %p42 = scmp.ge.s32.totalorder %s41, 2
      %s43 = scalar_select %p42, 0, %s41
      %s44 = smul.u32 %s32, 16
      %s45 = ssub.s32 %s44, 1
      %p46 = scmp.gt.s32.totalorder %s45, 0
      %s47 = scalar_select %p46, %s45, 0
      %s48 = smul.u32 %s39, 16
      %s49 = ssub.s32 %s48, 1
      %p50 = scmp.gt.s32.totalorder %s49, 0
      %s51 = scalar_select %p50, %s49, 0
      %s52 = ssub.s32 %s31, %s43
      %s53 = ssub.s32 %s47, %s51
      %s54 = sor.u32 %s52, %s53
      %p55 = scmp.eq.s32.totalorder %s54, 0
      %s57 = sadd.s32 %s56, 1
      %s58 = scalar_select %p55, %s56, %s57
      %p61 = pneg %p55
      %p62 = scmp.eq.s32.totalorder %s24, 1
      %p63 = por %p61, %p62
      %p64 = scmp.ne.s32.totalorder %s56, %s59
      %p65 = scmp.eq.s32.totalorder %s24, 0
      %p66 = por %p64, %p65
      %p67 = scmp.ne.s32.totalorder %s56, %s59
      %p68 = scmp.eq.s32.totalorder %s29, 1
      %p69 = por %p67, %p68
      %p70 = scmp.ne.s32.totalorder %s59, %s60
      %p71 = scmp.eq.s32.totalorder %s29, 0
      %p72 = por %p70, %p71
      %p73 = scmp.ne.s32.totalorder %s59, %s60
      %p74 = scmp.eq.s32.totalorder %s30, 1
      %p75 = por %p73, %p74
      %p77 = scmp.ne.s32.totalorder %s60, %s76
      %p78 = scmp.eq.s32.totalorder %s30, 0
      %p79 = por %p77, %p78
      %s80 = ssub.s32 %s31, %s43
      %s81 = ssub.s32 %s32, %s39
      %s82 = sor.u32 %s80, %s81
      %p83 = scmp.eq.s32.totalorder %s82, 0
      %s85 = sadd.s32 %s84, 1
      %s86 = scalar_select %p83, %s84, %s85
      %p89 = pneg %p83
      %p90 = scmp.eq.s32.totalorder %s24, 1
      %p91 = por %p89, %p90
      %p92 = scmp.ne.s32.totalorder %s84, %s87
      %p93 = scmp.eq.s32.totalorder %s24, 0
      %p94 = por %p92, %p93
      %p95 = scmp.ne.s32.totalorder %s84, %s87
      %p96 = scmp.eq.s32.totalorder %s29, 1
      %p97 = por %p95, %p96
      %p98 = scmp.ne.s32.totalorder %s87, %s88
      %p99 = scmp.eq.s32.totalorder %s29, 0
      %p100 = por %p98, %p99
      %p101 = scmp.ne.s32.totalorder %s87, %s88
      %p102 = scmp.eq.s32.totalorder %s30, 1
      %p103 = por %p101, %p102
      %p105 = scmp.ne.s32.totalorder %s88, %s104
      %p106 = scmp.eq.s32.totalorder %s30, 0
      %p107 = por %p105, %p106
      %s108 = sadd.s32 %s32, 1
      %s109 = smul.u32 %s108, 16
      %p110 = scmp.lt.s32.totalorder %s109, 15
      %s111 = scalar_select %p110, %s109, 15
      %s112 = sadd.s32 %s39, 1
      %s113 = smul.u32 %s112, 16
      %p114 = scmp.lt.s32.totalorder %s113, 15
      %s115 = scalar_select %p114, %s113, 15
      %s116 = ssub.s32 %s31, %s43
      %s117 = ssub.s32 %s111, %s115
      %s118 = sor.u32 %s116, %s117
      %p119 = scmp.eq.s32.totalorder %s118, 0
      %s121 = sadd.s32 %s120, 1
      %s122 = scalar_select %p119, %s120, %s121
      %p125 = pneg %p119
      %p126 = scmp.eq.s32.totalorder %s24, 1
      %p127 = por %p125, %p126
      %p128 = scmp.ne.s32.totalorder %s120, %s123
      %p129 = scmp.eq.s32.totalorder %s24, 0
      %p130 = por %p128, %p129
      %p131 = scmp.ne.s32.totalorder %s120, %s123
      %p132 = scmp.eq.s32.totalorder %s29, 1
      %p133 = por %p131, %p132
      %p134 = scmp.ne.s32.totalorder %s123, %s124
      %p135 = scmp.eq.s32.totalorder %s29, 0
      %p136 = por %p134, %p135
      %p137 = scmp.ne.s32.totalorder %s123, %s124
      %p138 = scmp.eq.s32.totalorder %s30, 1
      %p139 = por %p137, %p138
      %p141 = scmp.ne.s32.totalorder %s124, %s140
      %p142 = scmp.eq.s32.totalorder %s30, 0
      %p143 = por %p141, %p142
      %s145 = sadd.s32 %s144, 1
      %p148 = scmp.eq.s32.totalorder %s24, 1
      %p149 = scmp.ne.s32.totalorder %s144, %s146
      %p150 = scmp.eq.s32.totalorder %s24, 0
      %p151 = por %p149, %p150
      %p152 = scmp.ne.s32.totalorder %s144, %s146
      %p153 = scmp.eq.s32.totalorder %s29, 1
      %p154 = por %p152, %p153
      %p155 = scmp.ne.s32.totalorder %s146, %s147
      %p156 = scmp.eq.s32.totalorder %s29, 0
      %p157 = por %p155, %p156
      %p158 = scmp.ne.s32.totalorder %s146, %s147
      %p159 = scmp.eq.s32.totalorder %s30, 1
      %p160 = por %p158, %p159
      %p162 = scmp.ne.s32.totalorder %s147, %s161
      %p163 = scmp.eq.s32.totalorder %s30, 0
      %p164 = por %p162, %p163
      %s166 = sadd.s32 %s165, 1
      %p169 = scmp.eq.s32.totalorder %s24, 1
      %p170 = scmp.ne.s32.totalorder %s165, %s167
      %p171 = scmp.eq.s32.totalorder %s24, 0
      %p172 = por %p170, %p171
      %p173 = scmp.ne.s32.totalorder %s165, %s167
      %p174 = scmp.eq.s32.totalorder %s29, 1
      %p175 = por %p173, %p174
      %p176 = scmp.ne.s32.totalorder %s167, %s168
      %p177 = scmp.eq.s32.totalorder %s29, 0
      %p178 = por %p176, %p177
      %p179 = scmp.ne.s32.totalorder %s167, %s168
      %p180 = scmp.eq.s32.totalorder %s30, 1
      %p181 = por %p179, %p180
      %p183 = scmp.ne.s32.totalorder %s168, %s182
      %p184 = scmp.eq.s32.totalorder %s30, 0
      %p185 = por %p183, %p184
      %s187 = sadd.s32 %s186, 1
      %p190 = scmp.eq.s32.totalorder %s24, 1
      %p191 = scmp.ne.s32.totalorder %s186, %s188
      %p192 = scmp.eq.s32.totalorder %s24, 0
      %p193 = por %p191, %p192
      %p194 = scmp.ne.s32.totalorder %s186, %s188
      %p195 = scmp.eq.s32.totalorder %s29, 1
      %p196 = por %p194, %p195
      %p197 = scmp.ne.s32.totalorder %s188, %s189
      %p198 = scmp.eq.s32.totalorder %s29, 0
      %p199 = por %p197, %p198
      %p200 = scmp.ne.s32.totalorder %s188, %s189
      %p201 = scmp.eq.s32.totalorder %s30, 1
      %p202 = por %p200, %p201
      %p204 = scmp.ne.s32.totalorder %s189, %s203
      %p205 = scmp.eq.s32.totalorder %s30, 0
      %p206 = por %p204, %p205
      %s208 = sadd.s32 %s207, 1
      %p211 = scmp.eq.s32.totalorder %s24, 1
      %p212 = scmp.ne.s32.totalorder %s207, %s209
      %p213 = scmp.eq.s32.totalorder %s24, 0
      %p214 = por %p212, %p213
      %p215 = scmp.ne.s32.totalorder %s207, %s209
      %p216 = scmp.eq.s32.totalorder %s29, 1
      %p217 = por %p215, %p216
      %p218 = scmp.ne.s32.totalorder %s209, %s210
      %p219 = scmp.eq.s32.totalorder %s29, 0
      %p220 = por %p218, %p219
      %p221 = scmp.ne.s32.totalorder %s209, %s210
      %p222 = scmp.eq.s32.totalorder %s30, 1
      %p223 = por %p221, %p222
      %p225 = scmp.ne.s32.totalorder %s210, %s224
      %p226 = scmp.eq.s32.totalorder %s30, 0
      %p227 = por %p225, %p226
      %s229 = sadd.s32 %s228, 1
      %p232 = scmp.eq.s32.totalorder %s24, 1
      %p233 = scmp.ne.s32.totalorder %s228, %s230
      %p234 = scmp.eq.s32.totalorder %s24, 0
      %p235 = por %p233, %p234
      %p236 = scmp.ne.s32.totalorder %s228, %s230
      %p237 = scmp.eq.s32.totalorder %s29, 1
      %p238 = por %p236, %p237
      %p239 = scmp.ne.s32.totalorder %s230, %s231
      %p240 = scmp.eq.s32.totalorder %s29, 0
      %p241 = por %p239, %p240
      %p242 = scmp.ne.s32.totalorder %s230, %s231
      %p243 = scmp.eq.s32.totalorder %s30, 1
      %p244 = por %p242, %p243
      %p246 = scmp.ne.s32.totalorder %s231, %s245
      %p247 = scmp.eq.s32.totalorder %s30, 0
      %p248 = por %p246, %p247
      %s250 = sadd.s32 %s249, 1
      %p253 = scmp.eq.s32.totalorder %s24, 1
      %p254 = scmp.ne.s32.totalorder %s249, %s251
      %p255 = scmp.eq.s32.totalorder %s24, 0
      %p256 = por %p254, %p255
      %p257 = scmp.ne.s32.totalorder %s249, %s251
      %p258 = scmp.eq.s32.totalorder %s29, 1
      %p259 = por %p257, %p258
      %p260 = scmp.ne.s32.totalorder %s251, %s252
      %p261 = scmp.eq.s32.totalorder %s29, 0
      %p262 = por %p260, %p261
      %p263 = scmp.ne.s32.totalorder %s251, %s252
      %p264 = scmp.eq.s32.totalorder %s30, 1
      %p265 = por %p263, %p264
      %p267 = scmp.ne.s32.totalorder %s252, %s266
      %p268 = scmp.eq.s32.totalorder %s30, 0
      %p269 = por %p267, %p268
      %s270 = ssub.s32 %s31, %s43
      %s271 = ssub.s32 %s32, %s39
      %s272 = sor.u32 %s270, %s271
      %p273 = scmp.eq.s32.totalorder %s272, 0
      %s275 = sadd.s32 %s274, 1
      %s276 = scalar_select %p273, %s274, %s275
      %p279 = pneg %p273
      %p280 = scmp.eq.s32.totalorder %s24, 1
      %p281 = por %p279, %p280
      %p282 = scmp.ne.s32.totalorder %s274, %s277
      %p283 = scmp.eq.s32.totalorder %s24, 0
      %p284 = por %p282, %p283
      %p285 = scmp.ne.s32.totalorder %s274, %s277
      %p286 = scmp.eq.s32.totalorder %s29, 1
      %p287 = por %p285, %p286
      %p288 = scmp.ne.s32.totalorder %s277, %s278
      %p289 = scmp.eq.s32.totalorder %s29, 0
      %p290 = por %p288, %p289
      %p291 = scmp.ne.s32.totalorder %s277, %s278
      %p292 = scmp.eq.s32.totalorder %s30, 1
      %p293 = por %p291, %p292
      %p295 = scmp.ne.s32.totalorder %s278, %s294
      %p296 = scmp.eq.s32.totalorder %s30, 0
      %p297 = por %p295, %p296
      %p298 = scmp.le.s32.totalorder 1, %s24
      %p299 = scmp.lt.s32.totalorder %s24, 3
      %p300 = pnand %p298, %p299
      %p301 = pneg %p300
      // Predicated region
      $region9: #{bottleneck_forward.1} parent=5 // pred_check
        _
      $region10: #{bottleneck_forward.1} parent=5 // pred_check_branch
        %303 = sbr.rel (%p300) target = $region12
      $region11: #{bottleneck_forward.1} parent=5 // pred_region
        %s304 = ssub.s32 %s24, 1
        // Predicated region
        $region13: #{bottleneck_forward.1} parent=11 // pred_check
          %p305 = pneg %p157
        $region14: #{bottleneck_forward.1} parent=11 // pred_check_branch
          %307 = sbr.rel (%p305) target = $region16
        $region15: #{bottleneck_forward.1} parent=11 // pred_region
          _
        $region16: #{bottleneck_forward.1} parent=11 // pred_fallthru
          _
        // Predicated region
        $region17: #{bottleneck_forward.1} parent=11 // pred_check
          %p308 = pneg %p178
        $region18: #{bottleneck_forward.1} parent=11 // pred_check_branch
          %310 = sbr.rel (%p308) target = $region20
        $region19: #{bottleneck_forward.1} parent=11 // pred_region
          _
        $region20: #{bottleneck_forward.1} parent=11 // pred_fallthru
          _
        // Predicated region
        $region21: #{bottleneck_forward.1} parent=11 // pred_check
          %p311 = pneg %p199
        $region22: #{bottleneck_forward.1} parent=11 // pred_check_branch
          %313 = sbr.rel (%p311) target = $region24
        $region23: #{bottleneck_forward.1} parent=11 // pred_region
          _
        $region24: #{bottleneck_forward.1} parent=11 // pred_fallthru
          _
        // Predicated region
        $region25: #{bottleneck_forward.1} parent=11 // pred_check
          %p314 = pneg %p220
        $region26: #{bottleneck_forward.1} parent=11 // pred_check_branch
          %316 = sbr.rel (%p314) target = $region28
        $region27: #{bottleneck_forward.1} parent=11 // pred_region
          _
        $region28: #{bottleneck_forward.1} parent=11 // pred_fallthru
          _
        // Predicated region
        $region29: #{bottleneck_forward.1} parent=11 // pred_check
          %p317 = pneg %p241
        $region30: #{bottleneck_forward.1} parent=11 // pred_check_branch
          %319 = sbr.rel (%p317) target = $region32
        $region31: #{bottleneck_forward.1} parent=11 // pred_region
          _
        $region32: #{bottleneck_forward.1} parent=11 // pred_fallthru
          _
        // Predicated region
        $region33: #{bottleneck_forward.1} parent=11 // pred_check
          %p320 = pneg %p262
        $region34: #{bottleneck_forward.1} parent=11 // pred_check_branch
          %322 = sbr.rel (%p320) target = $region36
        $region35: #{bottleneck_forward.1} parent=11 // pred_region
          _
        $region36: #{bottleneck_forward.1} parent=11 // pred_fallthru
          _
      $region12: #{bottleneck_forward.1} parent=5 // pred_fallthru
        _
      %p323 = scmp.lt.s32.totalorder %s24, 2
      // Predicated region
      $region37: #{bottleneck_forward.1} parent=5 // pred_check
        %p324 = pneg %p323
      $region38: #{bottleneck_forward.1} parent=5 // pred_check_branch
        %326 = sbr.rel (%p324) target = $region40
      $region39: #{bottleneck_forward.1} parent=5 // pred_region
        // Predicated region
        $region41: #{bottleneck_forward.1} parent=39 // pred_check
          %p327 = pneg %p66
        $region42: #{bottleneck_forward.1} parent=39 // pred_check_branch
          %329 = sbr.rel (%p327) target = $region44
        $region43: #{bottleneck_forward.1} parent=39 // pred_region
          %s330 = sand.u32 %s56, 1
          %s331 = scalar_lea.sflag [#allocation4], %s330
          %s332 = sand.u32 %s56, 1
          %s333 = smul.addr %s332, 8
          %s334 = scalar_lea.vmem [#allocation3], %s333
          %s335 = smul.u32 %s32, 16
          %s336 = ssub.s32 %s335, 1
          %p337 = scmp.gt.s32.totalorder %s336, 0
          %s338 = scalar_select %p337, %s336, 0
          %340 = vsyncadd %s331, 0
          %s341 = smul.addr %s338, 2
          %s342 = smul.addr %s31, 32
          %s343 = sadd.s32 %s341, %s342
          %s344 = smul.addr %s343, 4
          %s345 = scalar_lea.hbm %s0, %s344
          %s346 = sshll.u32 %s345, 4
          %s347 = int_to_ptr.hbm [resolvable:$true] %s346
          %s348 = sshll.u32 %s334, 4
          %s349 = int_to_ptr.vmem [resolvable:$true] %s348
          %354 = dma.hbm_to_vmem [thread:$0]  %s347, 128, %s349, %s331, 64, 64, 4
        $region44: #{bottleneck_forward.1} parent=39 // pred_fallthru
          _
        // Predicated region
        $region45: #{bottleneck_forward.1} parent=39 // pred_check
          %p355 = pneg %p94
        $region46: #{bottleneck_forward.1} parent=39 // pred_check_branch
          %357 = sbr.rel (%p355) target = $region48
        $region47: #{bottleneck_forward.1} parent=39 // pred_region
          %s358 = sand.u32 %s24, 1
          %s359 = scalar_lea.sflag [#allocation7], %s358
          %s360 = sand.u32 %s84, 1
          %s361 = smul.addr %s360, 128
          %s362 = scalar_lea.vmem [#allocation6], %s361
          %s363 = smul.u32 16, %s32
          %365 = vsyncadd %s359, 0
          %s366 = smul.addr %s363, 2
          %s367 = smul.addr %s31, 32
          %s368 = sadd.s32 %s366, %s367
          %s369 = smul.addr %s368, 4
          %s370 = scalar_lea.hbm %s1, %s369
          %s371 = sshll.u32 %s370, 4
          %s372 = int_to_ptr.hbm [resolvable:$true] %s371
          %s373 = sshll.u32 %s362, 4
          %s374 = int_to_ptr.vmem [resolvable:$true] %s373
          %379 = dma.hbm_to_vmem [thread:$0]  %s372, 2048, %s374, %s359, 64, 64, 4
        $region48: #{bottleneck_forward.1} parent=39 // pred_fallthru
          _
        // Predicated region
        $region49: #{bottleneck_forward.1} parent=39 // pred_check
          %p380 = pneg %p130
        $region50: #{bottleneck_forward.1} parent=39 // pred_check_branch
          %382 = sbr.rel (%p380) target = $region52
        $region51: #{bottleneck_forward.1} parent=39 // pred_region
          %s383 = sand.u32 %s24, 1
          %s384 = scalar_lea.sflag [#allocation7], %s383
          %s385 = sand.u32 %s120, 1
          %s386 = smul.addr %s385, 8
          %s387 = scalar_lea.vmem [#allocation8], %s386
          %s388 = sadd.s32 %s32, 1
          %s389 = smul.u32 %s388, 16
          %p390 = scmp.lt.s32.totalorder %s389, 15
          %s391 = scalar_select %p390, %s389, 15
          %393 = vsyncadd %s384, 0
          %s394 = smul.addr %s391, 2
          %s395 = smul.addr %s31, 32
          %s396 = sadd.s32 %s394, %s395
          %s397 = smul.addr %s396, 4
          %s398 = scalar_lea.hbm %s2, %s397
          %s399 = sshll.u32 %s398, 4
          %s400 = int_to_ptr.hbm [resolvable:$true] %s399
          %s401 = sshll.u32 %s387, 4
          %s402 = int_to_ptr.vmem [resolvable:$true] %s401
          %407 = dma.hbm_to_vmem [thread:$0]  %s400, 128, %s402, %s384, 64, 64, 4
        $region52: #{bottleneck_forward.1} parent=39 // pred_fallthru
          _
      $region40: #{bottleneck_forward.1} parent=5 // pred_fallthru
        _
      %p408 = scmp.le.s32.totalorder 1, %s24
      %p409 = scmp.lt.s32.totalorder %s24, 3
      %p410 = pnand %p408, %p409
      %p411 = pneg %p410
      // Predicated region
      $region53: #{bottleneck_forward.1} parent=5 // pred_check
        _
      $region54: #{bottleneck_forward.1} parent=5 // pred_check_branch
        %413 = sbr.rel (%p410) target = $region56
      $region55: #{bottleneck_forward.1} parent=5 // pred_region
        %s414 = ssub.s32 %s24, 1
        %s415 = sand.u32 %s59, 1
        %s416 = scalar_lea.sflag [#allocation4], %s415
        %s417 = sand.u32 %s59, 1
        %s418 = smul.addr %s417, 8
        %s419 = scalar_lea.vmem [#allocation3], %s418
        // Predicated region
        $region57: #{bottleneck_forward.1} parent=55 // pred_check
          %p420 = pneg %p72
        $region58: #{bottleneck_forward.1} parent=55 // pred_check_branch
          %422 = sbr.rel (%p420) target = $region60
        $region59: #{bottleneck_forward.1} parent=55 // pred_region
          %424 = dma.done %s416, 128
        $region60: #{bottleneck_forward.1} parent=55 // pred_fallthru
          _
        %s425 = sand.u32 %s29, 1
        %s426 = scalar_lea.sflag [#allocation7], %s425
        %s427 = sand.u32 %s87, 1
        %s428 = smul.addr %s427, 128
        %s429 = scalar_lea.vmem [#allocation6], %s428
        // Predicated region
        $region61: #{bottleneck_forward.1} parent=55 // pred_check
          %p430 = pneg %p100
        $region62: #{bottleneck_forward.1} parent=55 // pred_check_branch
          %432 = sbr.rel (%p430) target = $region64
        $region63: #{bottleneck_forward.1} parent=55 // pred_region
          %434 = dma.done %s426, 2048
        $region64: #{bottleneck_forward.1} parent=55 // pred_fallthru
          _
        %s435 = sand.u32 %s29, 1
        %s436 = scalar_lea.sflag [#allocation7], %s435
        %s437 = sand.u32 %s123, 1
        %s438 = smul.addr %s437, 8
        %s439 = scalar_lea.vmem [#allocation8], %s438
        // Predicated region
        $region65: #{bottleneck_forward.1} parent=55 // pred_check
          %p440 = pneg %p136
        $region66: #{bottleneck_forward.1} parent=55 // pred_check_branch
          %442 = sbr.rel (%p440) target = $region68
        $region67: #{bottleneck_forward.1} parent=55 // pred_region
          %444 = dma.done %s436, 128
        $region68: #{bottleneck_forward.1} parent=55 // pred_fallthru
          _
        %s445 = sand.u32 %s59, 1
        %s446 = scalar_lea.sflag [#allocation4], %s445
        %s447 = sand.u32 %s59, 1
        %s448 = smul.addr %s447, 8
        %s449 = scalar_lea.vmem [#allocation3], %s448
        %p450 = pneg %p72
        %p451 = pneg %p69
        %s452 = sand.u32 %s29, 1
        %s453 = scalar_lea.sflag [#allocation7], %s452
        %s454 = sand.u32 %s87, 1
        %s455 = smul.addr %s454, 128
        %s456 = scalar_lea.vmem [#allocation6], %s455
        %p457 = pneg %p100
        %p458 = pneg %p97
        %s459 = sand.u32 %s29, 1
        %s460 = scalar_lea.sflag [#allocation7], %s459
        %s461 = sand.u32 %s123, 1
        %s462 = smul.addr %s461, 8
        %s463 = scalar_lea.vmem [#allocation8], %s462
        %p464 = pneg %p136
        %p465 = pneg %p133
        %p466 = pneg %p157
        %p467 = pneg %p154
        %p468 = pneg %p178
        %p469 = pneg %p175
        %p470 = pneg %p199
        %p471 = pneg %p196
        %p472 = pneg %p220
        %p473 = pneg %p217
        %p474 = pneg %p241
        %p475 = pneg %p238
        %p476 = pneg %p262
        %p477 = pneg %p259
        %p478 = pneg %p290
        %p479 = pneg %p287
        %s480 = sand.u32 %s277, 1
        %s481 = scalar_lea.sflag [#allocation5], %s480
        %s482 = sand.u32 %s277, 1
        %s483 = smul.addr %s482, 128
        %s484 = scalar_lea.vmem [#allocation9], %s483
        %s485 = smul.u32 %s34, 16
        %s486 = ssub.s32 %s485, 1
        %p487 = scmp.gt.s32.totalorder %s486, 0
        %s488 = scalar_select %p487, %s486, 0
        %s489 = smul.u32 16, %s34
        %s490 = sadd.s32 %s34, 1
        %s491 = smul.u32 %s490, 16
        %p492 = scmp.lt.s32.totalorder %s491, 15
        %s493 = scalar_select %p492, %s491, 15
        %s494 = smul.u32 16, %s34
        %v498 = vld [vmem:[%s3] sm:$0xf]
        %v499 = vld [vmem:[%s3 + $0x4] sm:$0xf]
        %v500 = vld [vmem:[%s3 + $0x8] sm:$0xf]
        %v501 = vld [vmem:[%s3 + $0xc] sm:$0xf]
        %v502 = vld [vmem:[%s4] sm:$0x1]
        %v503 = vld [vmem:[%s429] sm:$0xf]
        %v504 = vld [vmem:[%s429 + $0x4] sm:$0xf]
        %v505 = vld [vmem:[%s429 + $0x8] sm:$0xf]
        %v506 = vld [vmem:[%s429 + $0xc] sm:$0xf]
        %v507 = vld [vmem:[%s429 + $0x10] sm:$0xf]
        %v508 = vld [vmem:[%s429 + $0x14] sm:$0xf]
        %v509 = vld [vmem:[%s429 + $0x18] sm:$0xf]
        %v510 = vld [vmem:[%s429 + $0x1c] sm:$0xf]
        %v511 = vld [vmem:[%s429 + $0x20] sm:$0xf]
        %v512 = vld [vmem:[%s429 + $0x24] sm:$0xf]
        %v513 = vld [vmem:[%s429 + $0x28] sm:$0xf]
        %v514 = vld [vmem:[%s429 + $0x2c] sm:$0xf]
        %v515 = vld [vmem:[%s429 + $0x30] sm:$0xf]
        %v516 = vld [vmem:[%s429 + $0x34] sm:$0xf]
        %v517 = vld [vmem:[%s429 + $0x38] sm:$0xf]
        %v518 = vld [vmem:[%s429 + $0x3c] sm:$0xf]
        %v519 = vld [vmem:[%s429 + $0x40] sm:$0xf]
        %v520 = vld [vmem:[%s429 + $0x44] sm:$0xf]
        %v521 = vld [vmem:[%s429 + $0x48] sm:$0xf]
        %v522 = vld [vmem:[%s429 + $0x4c] sm:$0xf]
        %v523 = vld [vmem:[%s429 + $0x50] sm:$0xf]
        %v524 = vld [vmem:[%s429 + $0x54] sm:$0xf]
        %v525 = vld [vmem:[%s429 + $0x58] sm:$0xf]
        %v526 = vld [vmem:[%s429 + $0x5c] sm:$0xf]
        %v527 = vld [vmem:[%s429 + $0x60] sm:$0xf]
        %v528 = vld [vmem:[%s429 + $0x64] sm:$0xf]
        %v529 = vld [vmem:[%s429 + $0x68] sm:$0xf]
        %v530 = vld [vmem:[%s429 + $0x6c] sm:$0xf]
        %v531 = vld [vmem:[%s429 + $0x70] sm:$0xf]
        %v532 = vld [vmem:[%s429 + $0x74] sm:$0xf]
        %v533 = vld [vmem:[%s429 + $0x78] sm:$0xf]
        %v534 = vld [vmem:[%s429 + $0x7c] sm:$0xf]
        %v536 = vperm.slane %v502, 0
        %v570 = vunpack.c.l.b16 %v503
        %v571 = vunpack.c.l.b16 %v504
        %v572 = vunpack.c.l.b16 %v505
        %v573 = vunpack.c.l.b16 %v506
        %v574 = vunpack.c.l.b16 %v507
        %v575 = vunpack.c.l.b16 %v508
        %v576 = vunpack.c.l.b16 %v509
        %v577 = vunpack.c.l.b16 %v510
        %v578 = vunpack.c.l.b16 %v511
        %v579 = vunpack.c.l.b16 %v512
        %v580 = vunpack.c.l.b16 %v513
        %v581 = vunpack.c.l.b16 %v514
        %v582 = vunpack.c.l.b16 %v515
        %v583 = vunpack.c.l.b16 %v516
        %v584 = vunpack.c.l.b16 %v517
        %v585 = vunpack.c.l.b16 %v518
        %v586 = vunpack.c.l.b16 %v519
        %v587 = vunpack.c.l.b16 %v520
        %v588 = vunpack.c.l.b16 %v521
        %v589 = vunpack.c.l.b16 %v522
        %v590 = vunpack.c.l.b16 %v523
        %v591 = vunpack.c.l.b16 %v524
        %v592 = vunpack.c.l.b16 %v525
        %v593 = vunpack.c.l.b16 %v526
        %v594 = vunpack.c.l.b16 %v527
        %v595 = vunpack.c.l.b16 %v528
        %v596 = vunpack.c.l.b16 %v529
        %v597 = vunpack.c.l.b16 %v530
        %v598 = vunpack.c.l.b16 %v531
        %v599 = vunpack.c.l.b16 %v532
        %v600 = vunpack.c.l.b16 %v533
        %v601 = vunpack.c.l.b16 %v534
        %v602 = vpack.c.b16 %v571, %v570
        %v603 = vpack.c.b16 %v573, %v572
        %v604 = vpack.c.b16 %v575, %v574
        %v605 = vpack.c.b16 %v577, %v576
        %v606 = vpack.c.b16 %v579, %v578
        %v607 = vpack.c.b16 %v581, %v580
        %v608 = vpack.c.b16 %v583, %v582
        %v609 = vpack.c.b16 %v585, %v584
        %v610 = vpack.c.b16 %v587, %v586
        %v611 = vpack.c.b16 %v589, %v588
        %v612 = vpack.c.b16 %v591, %v590
        %v613 = vpack.c.b16 %v593, %v592
        %v614 = vpack.c.b16 %v595, %v594
        %v615 = vpack.c.b16 %v597, %v596
        %v616 = vpack.c.b16 %v599, %v598
        %v617 = vpack.c.b16 %v601, %v600
        %v622 = vunpack.c.l.b16 %v498
        %v623 = vunpack.c.l.b16 %v499
        %v624 = vunpack.c.l.b16 %v500
        %v625 = vunpack.c.l.b16 %v501
        %v626 = vpack.c.b16 %v623, %v622
        %v627 = vpack.c.b16 %v625, %v624
        %vm630 = vcmask 261120
        %v632 = vsel %vm630, %v602, 0
        %v635 = vsel %vm630, %v603, 0
        %v638 = vsel %vm630, %v604, 0
        %v641 = vsel %vm630, %v605, 0
        %v644 = vsel %vm630, %v606, 0
        %v647 = vsel %vm630, %v607, 0
        %v650 = vsel %vm630, %v608, 0
        %v653 = vsel %vm630, %v609, 0
        %v656 = vsel %vm630, %v610, 0
        %v659 = vsel %vm630, %v611, 0
        %v662 = vsel %vm630, %v612, 0
        %v665 = vsel %vm630, %v613, 0
        %v668 = vsel %vm630, %v614, 0
        %v671 = vsel %vm630, %v615, 0
        %v674 = vsel %vm630, %v616, 0
        %v677 = vsel %vm630, %v617, 0
        %679 = vmatpush.bf16.msra.mxu0 0
        %680 = vmatpush.bf16.msra.mxu0 0
        %681 = vmatpush.bf16.msra.mxu0 0
        %682 = vmatpush.bf16.msra.mxu0 0
        %683 = vmatpush.bf16.msra.mxu0 0
        %684 = vmatpush.bf16.msra.mxu0 0
        %685 = vmatpush.bf16.msra.mxu0 %v627
        %686 = vmatpush.bf16.msra.mxu0 %v626
        %687 = vmatmul.bf16.gmra.mxu0 %v632
        %v688 = vpop.f32.mrf.mxu0
        %v689 = vadd.f32 %v536, %v688
        %v690 = vpop.f32.mrf.mxu0
        %v691 = vadd.f32 %v536, %v690
        %692 = vmatmul.bf16.gmra.mxu0 %v635
        %v693 = vpop.f32.mrf.mxu0
        %v694 = vadd.f32 %v536, %v693
        %v695 = vpop.f32.mrf.mxu0
        %v696 = vadd.f32 %v536, %v695
        %697 = vmatmul.bf16.gmra.mxu0 %v638
        %v698 = vpop.f32.mrf.mxu0
        %v699 = vadd.f32 %v536, %v698
        %v700 = vpop.f32.mrf.mxu0
        %v701 = vadd.f32 %v536, %v700
        %702 = vmatmul.bf16.gmra.mxu0 %v641
        %v703 = vpop.f32.mrf.mxu0
        %v704 = vadd.f32 %v536, %v703
        %v705 = vpop.f32.mrf.mxu0
        %v706 = vadd.f32 %v536, %v705
        %707 = vmatmul.bf16.gmra.mxu0 %v644
        %v708 = vpop.f32.mrf.mxu0
        %v709 = vadd.f32 %v536, %v708
        %v710 = vpop.f32.mrf.mxu0
        %v711 = vadd.f32 %v536, %v710
        %712 = vmatmul.bf16.gmra.mxu0 %v647
        %v713 = vpop.f32.mrf.mxu0
        %v714 = vadd.f32 %v536, %v713
        %v715 = vpop.f32.mrf.mxu0
        %v716 = vadd.f32 %v536, %v715
        %717 = vmatmul.bf16.gmra.mxu0 %v650
        %v718 = vpop.f32.mrf.mxu0
        %v719 = vadd.f32 %v536, %v718
        %v720 = vpop.f32.mrf.mxu0
        %v721 = vadd.f32 %v536, %v720
        %722 = vmatmul.bf16.gmra.mxu0 %v653
        %v723 = vpop.f32.mrf.mxu0
        %v724 = vadd.f32 %v536, %v723
        %v725 = vpop.f32.mrf.mxu0
        %v726 = vadd.f32 %v536, %v725
        %727 = vmatmul.bf16.gmra.mxu0 %v656
        %v728 = vpop.f32.mrf.mxu0
        %v729 = vadd.f32 %v536, %v728
        %v730 = vpop.f32.mrf.mxu0
        %v731 = vadd.f32 %v536, %v730
        %732 = vmatmul.bf16.gmra.mxu0 %v659
        %v733 = vpop.f32.mrf.mxu0
        %v734 = vadd.f32 %v536, %v733
        %v735 = vpop.f32.mrf.mxu0
        %v736 = vadd.f32 %v536, %v735
        %737 = vmatmul.bf16.gmra.mxu0 %v662
        %v738 = vpop.f32.mrf.mxu0
        %v739 = vadd.f32 %v536, %v738
        %v740 = vpop.f32.mrf.mxu0
        %v741 = vadd.f32 %v536, %v740
        %742 = vmatmul.bf16.gmra.mxu0 %v665
        %v743 = vpop.f32.mrf.mxu0
        %v744 = vadd.f32 %v536, %v743
        %v745 = vpop.f32.mrf.mxu0
        %v746 = vadd.f32 %v536, %v745
        %747 = vmatmul.bf16.gmra.mxu0 %v668
        %v748 = vpop.f32.mrf.mxu0
        %v749 = vadd.f32 %v536, %v748
        %v750 = vpop.f32.mrf.mxu0
        %v751 = vadd.f32 %v536, %v750
        %752 = vmatmul.bf16.gmra.mxu0 %v671
        %v753 = vpop.f32.mrf.mxu0
        %v754 = vadd.f32 %v536, %v753
        %v755 = vpop.f32.mrf.mxu0
        %v756 = vadd.f32 %v536, %v755
        %757 = vmatmul.bf16.gmra.mxu0 %v674
        %v758 = vpop.f32.mrf.mxu0
        %v759 = vadd.f32 %v536, %v758
        %v760 = vpop.f32.mrf.mxu0
        %v761 = vadd.f32 %v536, %v760
        %762 = vmatmul.bf16.gmra.mxu0 %v677
        %v763 = vpop.f32.mrf.mxu0
        %v764 = vadd.f32 %v536, %v763
        %v765 = vpop.f32.mrf.mxu0
        %v766 = vadd.f32 %v536, %v765
        %767 = vdwg.mxu0
        %v768 = vmax.f32 %v689, 0.0
        %v769 = vmax.f32 %v691, 0.0
        %v770 = vmax.f32 %v694, 0.0
        %v771 = vmax.f32 %v696, 0.0
        %v772 = vmax.f32 %v699, 0.0
        %v773 = vmax.f32 %v701, 0.0
        %v774 = vmax.f32 %v704, 0.0
        %v775 = vmax.f32 %v706, 0.0
        %v776 = vmax.f32 %v709, 0.0
        %v777 = vmax.f32 %v711, 0.0
        %v778 = vmax.f32 %v714, 0.0
        %v779 = vmax.f32 %v716, 0.0
        %v780 = vmax.f32 %v719, 0.0
        %v781 = vmax.f32 %v721, 0.0
        %v782 = vmax.f32 %v724, 0.0
        %v783 = vmax.f32 %v726, 0.0
        %v784 = vmax.f32 %v729, 0.0
        %v785 = vmax.f32 %v731, 0.0
        %v786 = vmax.f32 %v734, 0.0
        %v787 = vmax.f32 %v736, 0.0
        %v788 = vmax.f32 %v739, 0.0
        %v789 = vmax.f32 %v741, 0.0
        %v790 = vmax.f32 %v744, 0.0
        %v791 = vmax.f32 %v746, 0.0
        %v792 = vmax.f32 %v749, 0.0
        %v793 = vmax.f32 %v751, 0.0
        %v794 = vmax.f32 %v754, 0.0
        %v795 = vmax.f32 %v756, 0.0
        %v796 = vmax.f32 %v759, 0.0
        %v797 = vmax.f32 %v761, 0.0
        %v798 = vmax.f32 %v764, 0.0
        %v799 = vmax.f32 %v766, 0.0
        %v800 = vpack.c.bf16 %v768, %v768
        %v801 = vpack.c.bf16 %v769, %v769
        %v802 = vpack.c.bf16 %v770, %v770
        %v803 = vpack.c.bf16 %v771, %v771
        %v804 = vpack.c.bf16 %v772, %v772
        %v805 = vpack.c.bf16 %v773, %v773
        %v806 = vpack.c.bf16 %v774, %v774
        %v807 = vpack.c.bf16 %v775, %v775
        %v808 = vpack.c.bf16 %v776, %v776
        %v809 = vpack.c.bf16 %v777, %v777
        %v810 = vpack.c.bf16 %v778, %v778
        %v811 = vpack.c.bf16 %v779, %v779
        %v812 = vpack.c.bf16 %v780, %v780
        %v813 = vpack.c.bf16 %v781, %v781
        %v814 = vpack.c.bf16 %v782, %v782
        %v815 = vpack.c.bf16 %v783, %v783
        %v816 = vpack.c.bf16 %v784, %v784
        %v817 = vpack.c.bf16 %v785, %v785
        %v818 = vpack.c.bf16 %v786, %v786
        %v819 = vpack.c.bf16 %v787, %v787
        %v820 = vpack.c.bf16 %v788, %v788
        %v821 = vpack.c.bf16 %v789, %v789
        %v822 = vpack.c.bf16 %v790, %v790
        %v823 = vpack.c.bf16 %v791, %v791
        %v824 = vpack.c.bf16 %v792, %v792
        %v825 = vpack.c.bf16 %v793, %v793
        %v826 = vpack.c.bf16 %v794, %v794
        %v827 = vpack.c.bf16 %v795, %v795
        %v828 = vpack.c.bf16 %v796, %v796
        %v829 = vpack.c.bf16 %v797, %v797
        %v830 = vpack.c.bf16 %v798, %v798
        %v831 = vpack.c.bf16 %v799, %v799
        %vm832 = vcmask 60416
        %833 = vst.msk [vmem:[#allocation2 + $0xc] sm:$0xf] %vm832, %v800
        %834 = vst.msk [vmem:[#allocation2 + $0x10] sm:$0xf] %vm832, %v801
        %835 = vst.msk [vmem:[#allocation2 + $0x14] sm:$0xf] %vm832, %v802
        %836 = vst.msk [vmem:[#allocation2 + $0x18] sm:$0xf] %vm832, %v803
        %837 = vst.msk [vmem:[#allocation2 + $0x1c] sm:$0xf] %vm832, %v804
        %838 = vst.msk [vmem:[#allocation2 + $0x20] sm:$0xf] %vm832, %v805
        %839 = vst.msk [vmem:[#allocation2 + $0x24] sm:$0xf] %vm832, %v806
        %840 = vst.msk [vmem:[#allocation2 + $0x28] sm:$0xf] %vm832, %v807
        %841 = vst.msk [vmem:[#allocation2 + $0x2c] sm:$0xf] %vm832, %v808
        %842 = vst.msk [vmem:[#allocation2 + $0x30] sm:$0xf] %vm832, %v809
        %843 = vst.msk [vmem:[#allocation2 + $0x34] sm:$0xf] %vm832, %v810
        %844 = vst.msk [vmem:[#allocation2 + $0x38] sm:$0xf] %vm832, %v811
        %845 = vst.msk [vmem:[#allocation2 + $0x3c] sm:$0xf] %vm832, %v812
        %846 = vst.msk [vmem:[#allocation2 + $0x40] sm:$0xf] %vm832, %v813
        %847 = vst.msk [vmem:[#allocation2 + $0x44] sm:$0xf] %vm832, %v814
        %848 = vst.msk [vmem:[#allocation2 + $0x48] sm:$0xf] %vm832, %v815
        %849 = vst.msk [vmem:[#allocation2 + $0x4c] sm:$0xf] %vm832, %v816
        %850 = vst.msk [vmem:[#allocation2 + $0x50] sm:$0xf] %vm832, %v817
        %851 = vst.msk [vmem:[#allocation2 + $0x54] sm:$0xf] %vm832, %v818
        %852 = vst.msk [vmem:[#allocation2 + $0x58] sm:$0xf] %vm832, %v819
        %853 = vst.msk [vmem:[#allocation2 + $0x5c] sm:$0xf] %vm832, %v820
        %854 = vst.msk [vmem:[#allocation2 + $0x60] sm:$0xf] %vm832, %v821
        %855 = vst.msk [vmem:[#allocation2 + $0x64] sm:$0xf] %vm832, %v822
        %856 = vst.msk [vmem:[#allocation2 + $0x68] sm:$0xf] %vm832, %v823
        %857 = vst.msk [vmem:[#allocation2 + $0x6c] sm:$0xf] %vm832, %v824
        %858 = vst.msk [vmem:[#allocation2 + $0x70] sm:$0xf] %vm832, %v825
        %859 = vst.msk [vmem:[#allocation2 + $0x74] sm:$0xf] %vm832, %v826
        %860 = vst.msk [vmem:[#allocation2 + $0x78] sm:$0xf] %vm832, %v827
        %861 = vst.msk [vmem:[#allocation2 + $0x7c] sm:$0xf] %vm832, %v828
        %862 = vst.msk [vmem:[#allocation2 + $0x80] sm:$0xf] %vm832, %v829
        %863 = vst.msk [vmem:[#allocation2 + $0x84] sm:$0xf] %vm832, %v830
        %864 = vst.msk [vmem:[#allocation2 + $0x88] sm:$0xf] %vm832, %v831
        %p865 = scmp.gt.s32.totalorder %s34, 0
        // Predicated region
        $region69: #{bottleneck_forward.1} parent=55 // pred_check
          %p866 = pneg %p865
        $region70: #{bottleneck_forward.1} parent=55 // pred_check_branch
          %868 = sbr.rel (%p866) target = $region72
        $region71: #{bottleneck_forward.1} parent=55 // pred_region
          %v869 = vld [vmem:[%s419] sm:$0xf]
          %v870 = vld [vmem:[%s419 + $0x4] sm:$0xf]
          %v873 = vunpack.c.l.b16 %v869
          %v874 = vunpack.c.l.b16 %v870
          %v875 = vpack.c.b16 %v874, %v873
          %v877 = vsel %vm630, %v875, 0
          %879 = vmatpush.bf16.msra.mxu0 0
          %880 = vmatpush.bf16.msra.mxu0 0
          %881 = vmatpush.bf16.msra.mxu0 0
          %882 = vmatpush.bf16.msra.mxu0 0
          %883 = vmatpush.bf16.msra.mxu0 0
          %884 = vmatpush.bf16.msra.mxu0 0
          %885 = vmatpush.bf16.msra.mxu0 %v627
          %886 = vmatpush.bf16.msra.mxu0 %v626
          %887 = vmatmul.bf16.gmra.mxu0 %v877
          %v888 = vpop.f32.mrf.mxu0
          %v889 = vadd.f32 %v536, %v888
          %v890 = vpop.f32.mrf.mxu0
          %v891 = vadd.f32 %v536, %v890
          %892 = vdwg.mxu0
          %v893 = vmax.f32 %v889, 0.0
          %v894 = vmax.f32 %v891, 0.0
          %v895 = vpack.c.bf16 %v893, %v893
          %v896 = vpack.c.bf16 %v894, %v894
          %897 = vst.msk [vmem:[#allocation2 + $0x4] sm:$0xf] %vm832, %v895
          %898 = vst.msk [vmem:[#allocation2 + $0x8] sm:$0xf] %vm832, %v896
        $region72: #{bottleneck_forward.1} parent=55 // pred_fallthru
          _
        %p899 = scmp.eq.s32.totalorder %s34, 0
        // Predicated region
        $region73: #{bottleneck_forward.1} parent=55 // pred_check
          %p900 = pneg %p899
        $region74: #{bottleneck_forward.1} parent=55 // pred_check_branch
          %902 = sbr.rel (%p900) target = $region76
        $region75: #{bottleneck_forward.1} parent=55 // pred_region
          %903 = vst.msk [vmem:[#allocation2 + $0x4] sm:$0xf] %vm832, 0
          %904 = vst.msk [vmem:[#allocation2 + $0x8] sm:$0xf] %vm832, 0
        $region76: #{bottleneck_forward.1} parent=55 // pred_fallthru
          _
        %p905 = scmp.lt.s32.totalorder %s34, 0
        // Predicated region
        $region77: #{bottleneck_forward.1} parent=55 // pred_check
          %p906 = pneg %p905
        $region78: #{bottleneck_forward.1} parent=55 // pred_check_branch
          %908 = sbr.rel (%p906) target = $region80
        $region79: #{bottleneck_forward.1} parent=55 // pred_region
          %v909 = vld [vmem:[%s439] sm:$0xf]
          %v910 = vld [vmem:[%s439 + $0x4] sm:$0xf]
          %v913 = vunpack.c.l.b16 %v909
          %v914 = vunpack.c.l.b16 %v910
          %v915 = vpack.c.b16 %v914, %v913
          %v917 = vsel %vm630, %v915, 0
          %919 = vmatpush.bf16.msra.mxu0 0
          %920 = vmatpush.bf16.msra.mxu0 0
          %921 = vmatpush.bf16.msra.mxu0 0
          %922 = vmatpush.bf16.msra.mxu0 0
          %923 = vmatpush.bf16.msra.mxu0 0
          %924 = vmatpush.bf16.msra.mxu0 0
          %925 = vmatpush.bf16.msra.mxu0 %v627
          %926 = vmatpush.bf16.msra.mxu0 %v626
          %927 = vmatmul.bf16.gmra.mxu0 %v917
          %v928 = vpop.f32.mrf.mxu0
          %v929 = vadd.f32 %v536, %v928
          %v930 = vpop.f32.mrf.mxu0
          %v931 = vadd.f32 %v536, %v930
          %932 = vdwg.mxu0
          %v933 = vmax.f32 %v929, 0.0
          %v934 = vmax.f32 %v931, 0.0
          %v935 = vpack.c.bf16 %v933, %v933
          %v936 = vpack.c.bf16 %v934, %v934
          %937 = vst.msk [vmem:[#allocation2 + $0x8c] sm:$0xf] %vm832, %v935
          %938 = vst.msk [vmem:[#allocation2 + $0x90] sm:$0xf] %vm832, %v936
        $region80: #{bottleneck_forward.1} parent=55 // pred_fallthru
          _
        // Predicated region
        $region81: #{bottleneck_forward.1} parent=55 // pred_check
          %p939 = pneg %p899
        $region82: #{bottleneck_forward.1} parent=55 // pred_check_branch
          %941 = sbr.rel (%p939) target = $region84
        $region83: #{bottleneck_forward.1} parent=55 // pred_region
          %942 = vst.msk [vmem:[#allocation2 + $0x8c] sm:$0xf] %vm832, 0
          %943 = vst.msk [vmem:[#allocation2 + $0x90] sm:$0xf] %vm832, 0
        $region84: #{bottleneck_forward.1} parent=55 // pred_fallthru
          _
        %v944 = vlaneseq
        %v945 = vshrl.u32 %v944, 7
        %v946 = vadd.s32 %v945, 8
        %vm947 = vcmp.gt.s32.totalorder %v945, 0
        %vm948 = vcmp.gt.s32.totalorder %v946, 0
        %vm949 = vcmp.lt.s32.totalorder %v945, 15
        %vm950 = vcmp.lt.s32.totalorder %v946, 15
        %v951 = vld [vmem:[#allocation2] sm:$0x8]
        %v952 = vld [vmem:[#allocation2 + $0x4] sm:$0xf]
        %v953 = vld [vmem:[#allocation2 + $0x8] sm:$0xf]
        %v954 = vld [vmem:[#allocation2 + $0xc] sm:$0xf]
        %v955 = vld [vmem:[#allocation2 + $0x10] sm:$0xf]
        %v956 = vld [vmem:[#allocation2 + $0x14] sm:$0xf]
        %v957 = vld [vmem:[#allocation2 + $0x18] sm:$0xf]
        %v958 = vld [vmem:[#allocation2 + $0x1c] sm:$0xf]
        %v959 = vld [vmem:[#allocation2 + $0x20] sm:$0xf]
        %v960 = vld [vmem:[#allocation2 + $0x24] sm:$0xf]
        %v961 = vld [vmem:[#allocation2 + $0x28] sm:$0xf]
        %v962 = vld [vmem:[#allocation2 + $0x2c] sm:$0xf]
        %v963 = vld [vmem:[#allocation2 + $0x30] sm:$0xf]
        %v964 = vld [vmem:[#allocation2 + $0x34] sm:$0xf]
        %v965 = vld [vmem:[#allocation2 + $0x38] sm:$0xf]
        %v966 = vld [vmem:[#allocation2 + $0x3c] sm:$0xf]
        %v967 = vld [vmem:[#allocation2 + $0x40] sm:$0xf]
        %v968 = vld [vmem:[#allocation2 + $0x44] sm:$0xf]
        %v969 = vld [vmem:[#allocation2 + $0x48] sm:$0xf]
        %v970 = vld [vmem:[#allocation2 + $0x4c] sm:$0xf]
        %v971 = vld [vmem:[#allocation2 + $0x50] sm:$0xf]
        %v972 = vld [vmem:[#allocation2 + $0x54] sm:$0xf]
        %v973 = vld [vmem:[#allocation2 + $0x58] sm:$0xf]
        %v974 = vld [vmem:[#allocation2 + $0x5c] sm:$0xf]
        %v975 = vld [vmem:[#allocation2 + $0x60] sm:$0xf]
        %v976 = vld [vmem:[#allocation2 + $0x64] sm:$0xf]
        %v977 = vld [vmem:[#allocation2 + $0x68] sm:$0xf]
        %v978 = vld [vmem:[#allocation2 + $0x6c] sm:$0xf]
        %v979 = vld [vmem:[#allocation2 + $0x70] sm:$0xf]
        %v980 = vld [vmem:[#allocation2 + $0x74] sm:$0xf]
        %v981 = vld [vmem:[#allocation2 + $0x78] sm:$0xf]
        %v982 = vld [vmem:[#allocation2 + $0x7c] sm:$0xf]
        %v983 = vld [vmem:[#allocation2 + $0x80] sm:$0xf]
        %v984 = vsel %vm947, 1, 0
        %v985 = vsel %vm948, 1, 0
        %vm986 = vcmp.eq.s32.totalorder %v984, 1
        %vm987 = vcmp.eq.s32.totalorder %v985, 1
        %vm988 = vmpackc.low %vm986, %vm986
        %vm989 = vmpackc.low %vm987, %vm987
        %v990 = vsel %vm988, 65537, 0
        %v991 = vsel %vm989, 65537, 0
        %vm992 = vsmask.f32 3328
        %vm993 = vsmask.f32 7440
        %vm994 = vmor %vm992, %vm993
        %v996 = vshll.u32 %v990, 16
        %v998 = vrot.slane %v996, 5
        %v999 = vshrl.u32 %v990, 16
        %v1001 = vrot.slane %v999, 4
        %v1002 = vor.u32 %v1001, %v998
        %v1003 = vrot.slane %v1002, 4
        %v1005 = vshll.u32 %v991, 16
        %v1007 = vrot.slane %v1005, 5
        %v1008 = vsel %vm994, %v1003, %v1007
        %v1009 = vshrl.u32 %v991, 16
        %v1011 = vrot.slane %v1009, 4
        %v1012 = vor.u32 %v1011, %v1007
        %v1013 = vrot.slane %v1012, 4
        %v1014 = vsel %vm994, %v1013, %v998
        %v1015 = vunpack.c.l.b16 %v998
        %v1016 = vunpack.c.h.b16 %v998
        %v1017 = vunpack.c.l.b16 0
        %v1018 = vunpack.c.h.b16 0
        %vm1019 = vcmp.ne.s32.totalorder %v1015, %v1017
        %vm1020 = vcmp.ne.s32.totalorder %v1016, %v1018
        %vm1021 = vmpackc.low %vm1020, %vm1019
        %v1022 = vunpack.c.l.b16 %v1008
        %v1023 = vunpack.c.h.b16 %v1008
        %v1024 = vunpack.c.l.b16 0
        %v1025 = vunpack.c.h.b16 0
        %vm1026 = vcmp.ne.s32.totalorder %v1022, %v1024
        %vm1027 = vcmp.ne.s32.totalorder %v1023, %v1025
        %vm1028 = vmpackc.low %vm1027, %vm1026
        %v1029 = vunpack.c.l.b16 %v1014
        %v1030 = vunpack.c.h.b16 %v1014
        %v1031 = vunpack.c.l.b16 0
        %v1032 = vunpack.c.h.b16 0
        %vm1033 = vcmp.ne.s32.totalorder %v1029, %v1031
        %vm1034 = vcmp.ne.s32.totalorder %v1030, %v1032
        %vm1035 = vmpackc.low %vm1034, %vm1033
        %v1036 = vunpack.c.l.b16 %v1013
        %v1037 = vunpack.c.h.b16 %v1013
        %v1038 = vunpack.c.l.b16 0
        %v1039 = vunpack.c.h.b16 0
        %vm1040 = vcmp.ne.s32.totalorder %v1036, %v1038
        %vm1041 = vcmp.ne.s32.totalorder %v1037, %v1039
        %vm1042 = vmpackc.low %vm1041, %vm1040
        %v1043 = vsel %vm1021, %v951, 0
        %v1044 = vsel %vm1028, %v952, 0
        %v1045 = vsel %vm1035, %v953, 0
        %v1046 = vsel %vm1028, %v954, 0
        %v1047 = vsel %vm1035, %v955, 0
        %v1048 = vsel %vm1028, %v956, 0
        %v1049 = vsel %vm1035, %v957, 0
        %v1050 = vsel %vm1028, %v958, 0
        %v1051 = vsel %vm1035, %v959, 0
        %v1052 = vsel %vm1028, %v960, 0
        %v1053 = vsel %vm1035, %v961, 0
        %v1054 = vsel %vm1028, %v962, 0
        %v1055 = vsel %vm1035, %v963, 0
        %v1056 = vsel %vm1028, %v964, 0
        %v1057 = vsel %vm1035, %v965, 0
        %v1058 = vsel %vm1028, %v966, 0
        %v1059 = vsel %vm1035, %v967, 0
        %v1060 = vsel %vm1028, %v968, 0
        %v1061 = vsel %vm1035, %v969, 0
        %v1062 = vsel %vm1028, %v970, 0
        %v1063 = vsel %vm1035, %v971, 0
        %v1064 = vsel %vm1028, %v972, 0
        %v1065 = vsel %vm1035, %v973, 0
        %v1066 = vsel %vm1028, %v974, 0
        %v1067 = vsel %vm1035, %v975, 0
        %v1068 = vsel %vm1028, %v976, 0
        %v1069 = vsel %vm1035, %v977, 0
        %v1070 = vsel %vm1028, %v978, 0
        %v1071 = vsel %vm1035, %v979, 0
        %v1072 = vsel %vm1028, %v980, 0
        %v1073 = vsel %vm1035, %v981, 0
        %v1074 = vsel %vm1028, %v982, 0
        %v1075 = vsel %vm1042, %v983, 0
        %v1076 = vld [vmem:[%s5] sm:$0xf]
        %v1077 = vld [vmem:[%s5 + $0x4] sm:$0xf]
        %v1110 = vunpack.c.l.b16 %v952
        %v1111 = vunpack.c.l.b16 %v953
        %v1112 = vunpack.c.l.b16 %v954
        %v1113 = vunpack.c.l.b16 %v955
        %v1114 = vunpack.c.l.b16 %v956
        %v1115 = vunpack.c.l.b16 %v957
        %v1116 = vunpack.c.l.b16 %v958
        %v1117 = vunpack.c.l.b16 %v959
        %v1118 = vunpack.c.l.b16 %v960
        %v1119 = vunpack.c.l.b16 %v961
        %v1120 = vunpack.c.l.b16 %v962
        %v1121 = vunpack.c.l.b16 %v963
        %v1122 = vunpack.c.l.b16 %v964
        %v1123 = vunpack.c.l.b16 %v965
        %v1124 = vunpack.c.l.b16 %v966
        %v1125 = vunpack.c.l.b16 %v967
        %v1126 = vunpack.c.l.b16 %v968
        %v1127 = vunpack.c.l.b16 %v969
        %v1128 = vunpack.c.l.b16 %v970
        %v1129 = vunpack.c.l.b16 %v971
        %v1130 = vunpack.c.l.b16 %v972
        %v1131 = vunpack.c.l.b16 %v973
        %v1132 = vunpack.c.l.b16 %v974
        %v1133 = vunpack.c.l.b16 %v975
        %v1134 = vunpack.c.l.b16 %v976
        %v1135 = vunpack.c.l.b16 %v977
        %v1136 = vunpack.c.l.b16 %v978
        %v1137 = vunpack.c.l.b16 %v979
        %v1138 = vunpack.c.l.b16 %v980
        %v1139 = vunpack.c.l.b16 %v981
        %v1140 = vunpack.c.l.b16 %v982
        %v1141 = vunpack.c.l.b16 %v983
        %v1142 = vpack.c.b16 %v1111, %v1110
        %v1143 = vpack.c.b16 %v1113, %v1112
        %v1144 = vpack.c.b16 %v1115, %v1114
        %v1145 = vpack.c.b16 %v1117, %v1116
        %v1146 = vpack.c.b16 %v1119, %v1118
        %v1147 = vpack.c.b16 %v1121, %v1120
        %v1148 = vpack.c.b16 %v1123, %v1122
        %v1149 = vpack.c.b16 %v1125, %v1124
        %v1150 = vpack.c.b16 %v1127, %v1126
        %v1151 = vpack.c.b16 %v1129, %v1128
        %v1152 = vpack.c.b16 %v1131, %v1130
        %v1153 = vpack.c.b16 %v1133, %v1132
        %v1154 = vpack.c.b16 %v1135, %v1134
        %v1155 = vpack.c.b16 %v1137, %v1136
        %v1156 = vpack.c.b16 %v1139, %v1138
        %v1157 = vpack.c.b16 %v1141, %v1140
        %vm1158 = vcmask 64512
        %v1160 = vsel %vm1158, %v1142, 0
        %v1163 = vsel %vm1158, %v1143, 0
        %v1166 = vsel %vm1158, %v1144, 0
        %v1169 = vsel %vm1158, %v1145, 0
        %v1172 = vsel %vm1158, %v1146, 0
        %v1175 = vsel %vm1158, %v1147, 0
        %v1178 = vsel %vm1158, %v1148, 0
        %v1181 = vsel %vm1158, %v1149, 0
        %v1184 = vsel %vm1158, %v1150, 0
        %v1187 = vsel %vm1158, %v1151, 0
        %v1190 = vsel %vm1158, %v1152, 0
        %v1193 = vsel %vm1158, %v1153, 0
        %v1196 = vsel %vm1158, %v1154, 0
        %v1199 = vsel %vm1158, %v1155, 0
        %v1202 = vsel %vm1158, %v1156, 0
        %v1205 = vsel %vm1158, %v1157, 0
        %vm1207 = vcmask 1043456
        %v1209 = vsel %vm1207, %v1077, 0
        %1211 = vmatpush.bf16.msra.mxu0 0
        %1212 = vmatpush.bf16.msra.mxu0 0
        %1213 = vmatpush.bf16.msra.mxu0 0
        %1214 = vmatpush.bf16.msra.mxu0 0
        %1215 = vmatpush.bf16.msra.mxu0 0
        %1216 = vmatpush.bf16.msra.mxu0 0
        %1217 = vmatpush.bf16.msra.mxu0 0
        %1218 = vmatpush.bf16.msra.mxu0 %v1209
        %1219 = vmatmul.bf16.gmra.mxu0 %v1160
        %v1220 = vpop.f32.mrf.mxu0
        %v1221 = vadd.f32 0.0, %v1220
        %v1222 = vpop.f32.mrf.mxu0
        %v1223 = vadd.f32 0.0, %v1222
        %1224 = vmatmul.bf16.gmra.mxu0 %v1163
        %v1225 = vpop.f32.mrf.mxu0
        %v1226 = vadd.f32 0.0, %v1225
        %v1227 = vpop.f32.mrf.mxu0
        %v1228 = vadd.f32 0.0, %v1227
        %1229 = vmatmul.bf16.gmra.mxu0 %v1166
        %v1230 = vpop.f32.mrf.mxu0
        %v1231 = vadd.f32 0.0, %v1230
        %v1232 = vpop.f32.mrf.mxu0
        %v1233 = vadd.f32 0.0, %v1232
        %1234 = vmatmul.bf16.gmra.mxu0 %v1169
        %v1235 = vpop.f32.mrf.mxu0
        %v1236 = vadd.f32 0.0, %v1235
        %v1237 = vpop.f32.mrf.mxu0
        %v1238 = vadd.f32 0.0, %v1237
        %1239 = vmatmul.bf16.gmra.mxu0 %v1172
        %v1240 = vpop.f32.mrf.mxu0
        %v1241 = vadd.f32 0.0, %v1240
        %v1242 = vpop.f32.mrf.mxu0
        %v1243 = vadd.f32 0.0, %v1242
        %1244 = vmatmul.bf16.gmra.mxu0 %v1175
        %v1245 = vpop.f32.mrf.mxu0
        %v1246 = vadd.f32 0.0, %v1245
        %v1247 = vpop.f32.mrf.mxu0
        %v1248 = vadd.f32 0.0, %v1247
        %1249 = vmatmul.bf16.gmra.mxu0 %v1178
        %v1250 = vpop.f32.mrf.mxu0
        %v1251 = vadd.f32 0.0, %v1250
        %v1252 = vpop.f32.mrf.mxu0
        %v1253 = vadd.f32 0.0, %v1252
        %1254 = vmatmul.bf16.gmra.mxu0 %v1181
        %v1255 = vpop.f32.mrf.mxu0
        %v1256 = vadd.f32 0.0, %v1255
        %v1257 = vpop.f32.mrf.mxu0
        %v1258 = vadd.f32 0.0, %v1257
        %1259 = vmatmul.bf16.gmra.mxu0 %v1184
        %v1260 = vpop.f32.mrf.mxu0
        %v1261 = vadd.f32 0.0, %v1260
        %v1262 = vpop.f32.mrf.mxu0
        %v1263 = vadd.f32 0.0, %v1262
        %1264 = vmatmul.bf16.gmra.mxu0 %v1187
        %v1265 = vpop.f32.mrf.mxu0
        %v1266 = vadd.f32 0.0, %v1265
        %v1267 = vpop.f32.mrf.mxu0
        %v1268 = vadd.f32 0.0, %v1267
        %1269 = vmatmul.bf16.gmra.mxu0 %v1190
        %v1270 = vpop.f32.mrf.mxu0
        %v1271 = vadd.f32 0.0, %v1270
        %v1272 = vpop.f32.mrf.mxu0
        %v1273 = vadd.f32 0.0, %v1272
        %1274 = vmatmul.bf16.gmra.mxu0 %v1193
        %v1275 = vpop.f32.mrf.mxu0
        %v1276 = vadd.f32 0.0, %v1275
        %v1277 = vpop.f32.mrf.mxu0
        %v1278 = vadd.f32 0.0, %v1277
        %1279 = vmatmul.bf16.gmra.mxu0 %v1196
        %v1280 = vpop.f32.mrf.mxu0
        %v1281 = vadd.f32 0.0, %v1280
        %v1282 = vpop.f32.mrf.mxu0
        %v1283 = vadd.f32 0.0, %v1282
        %1284 = vmatmul.bf16.gmra.mxu0 %v1199
        %v1285 = vpop.f32.mrf.mxu0
        %v1286 = vadd.f32 0.0, %v1285
        %v1287 = vpop.f32.mrf.mxu0
        %v1288 = vadd.f32 0.0, %v1287
        %1289 = vmatmul.bf16.gmra.mxu0 %v1202
        %v1290 = vpop.f32.mrf.mxu0
        %v1291 = vadd.f32 0.0, %v1290
        %v1292 = vpop.f32.mrf.mxu0
        %v1293 = vadd.f32 0.0, %v1292
        %1294 = vmatmul.bf16.gmra.mxu0 %v1205
        %v1295 = vpop.f32.mrf.mxu0
        %v1296 = vadd.f32 0.0, %v1295
        %v1297 = vpop.f32.mrf.mxu0
        %v1298 = vadd.f32 0.0, %v1297
        %1299 = vdwg.mxu0
        %v1333 = vunpack.c.l.b16 %v1043
        %v1334 = vunpack.c.l.b16 %v1044
        %v1335 = vunpack.c.l.b16 %v1045
        %v1336 = vunpack.c.l.b16 %v1046
        %v1337 = vunpack.c.l.b16 %v1047
        %v1338 = vunpack.c.l.b16 %v1048
        %v1339 = vunpack.c.l.b16 %v1049
        %v1340 = vunpack.c.l.b16 %v1050
        %v1341 = vunpack.c.l.b16 %v1051
        %v1342 = vunpack.c.l.b16 %v1052
        %v1343 = vunpack.c.l.b16 %v1053
        %v1344 = vunpack.c.l.b16 %v1054
        %v1345 = vunpack.c.l.b16 %v1055
        %v1346 = vunpack.c.l.b16 %v1056
        %v1347 = vunpack.c.l.b16 %v1057
        %v1348 = vunpack.c.l.b16 %v1058
        %v1349 = vunpack.c.l.b16 %v1059
        %v1350 = vunpack.c.l.b16 %v1060
        %v1351 = vunpack.c.l.b16 %v1061
        %v1352 = vunpack.c.l.b16 %v1062
        %v1353 = vunpack.c.l.b16 %v1063
        %v1354 = vunpack.c.l.b16 %v1064
        %v1355 = vunpack.c.l.b16 %v1065
        %v1356 = vunpack.c.l.b16 %v1066
        %v1357 = vunpack.c.l.b16 %v1067
        %v1358 = vunpack.c.l.b16 %v1068
        %v1359 = vunpack.c.l.b16 %v1069
        %v1360 = vunpack.c.l.b16 %v1070
        %v1361 = vunpack.c.l.b16 %v1071
        %v1362 = vunpack.c.l.b16 %v1072
        %v1363 = vunpack.c.l.b16 %v1073
        %v1364 = vunpack.c.l.b16 %v1074
        %v1365 = vunpack.c.l.b16 %v1075
        %v1366 = vpack.c.b16 %v1334, %v1333
        %v1367 = vpack.c.b16 %v1336, %v1335
        %v1368 = vpack.c.b16 %v1338, %v1337
        %v1369 = vpack.c.b16 %v1340, %v1339
        %v1370 = vpack.c.b16 %v1342, %v1341
        %v1371 = vpack.c.b16 %v1344, %v1343
        %v1372 = vpack.c.b16 %v1346, %v1345
        %v1373 = vpack.c.b16 %v1348, %v1347
        %v1374 = vpack.c.b16 %v1350, %v1349
        %v1375 = vpack.c.b16 %v1352, %v1351
        %v1376 = vpack.c.b16 %v1354, %v1353
        %v1377 = vpack.c.b16 %v1356, %v1355
        %v1378 = vpack.c.b16 %v1358, %v1357
        %v1379 = vpack.c.b16 %v1360, %v1359
        %v1380 = vpack.c.b16 %v1362, %v1361
        %v1381 = vpack.c.b16 %v1364, %v1363
        %v1382 = vpack.c.b16 %v1365, %v1365
        %vm1383 = vsmask.f32 4352
        %v1385 = vshrl.u32 %v1366, 16
        %v1387 = vrot.slane %v1385, 3
        %v1388 = vshll.u32 %v1366, 16
        %v1390 = vrot.slane %v1388, 4
        %v1391 = vor.u32 %v1387, %v1390
        %v1393 = vshrl.u32 %v1367, 16
        %v1395 = vrot.slane %v1393, 3
        %v1396 = vshll.u32 %v1367, 16
        %v1398 = vrot.slane %v1396, 4
        %v1399 = vor.u32 %v1395, %v1398
        %v1400 = vsel %vm1383, %v1391, %v1399
        %v1402 = vshrl.u32 %v1368, 16
        %v1404 = vrot.slane %v1402, 3
        %v1405 = vshll.u32 %v1368, 16
        %v1407 = vrot.slane %v1405, 4
        %v1408 = vor.u32 %v1404, %v1407
        %v1409 = vsel %vm1383, %v1399, %v1408
        %v1411 = vshrl.u32 %v1369, 16
        %v1413 = vrot.slane %v1411, 3
        %v1414 = vshll.u32 %v1369, 16
        %v1416 = vrot.slane %v1414, 4
        %v1417 = vor.u32 %v1413, %v1416
        %v1418 = vsel %vm1383, %v1408, %v1417
        %v1420 = vshrl.u32 %v1370, 16
        %v1422 = vrot.slane %v1420, 3
        %v1423 = vshll.u32 %v1370, 16
        %v1425 = vrot.slane %v1423, 4
        %v1426 = vor.u32 %v1422, %v1425
        %v1427 = vsel %vm1383, %v1417, %v1426
        %v1429 = vshrl.u32 %v1371, 16
        %v1431 = vrot.slane %v1429, 3
        %v1432 = vshll.u32 %v1371, 16
        %v1434 = vrot.slane %v1432, 4
        %v1435 = vor.u32 %v1431, %v1434
        %v1436 = vsel %vm1383, %v1426, %v1435
        %v1438 = vshrl.u32 %v1372, 16
        %v1440 = vrot.slane %v1438, 3
        %v1441 = vshll.u32 %v1372, 16
        %v1443 = vrot.slane %v1441, 4
        %v1444 = vor.u32 %v1440, %v1443
        %v1445 = vsel %vm1383, %v1435, %v1444
        %v1447 = vshrl.u32 %v1373, 16
        %v1449 = vrot.slane %v1447, 3
        %v1450 = vshll.u32 %v1373, 16
        %v1452 = vrot.slane %v1450, 4
        %v1453 = vor.u32 %v1449, %v1452
        %v1454 = vsel %vm1383, %v1444, %v1453
        %v1456 = vshrl.u32 %v1374, 16
        %v1458 = vrot.slane %v1456, 3
        %v1459 = vshll.u32 %v1374, 16
        %v1461 = vrot.slane %v1459, 4
        %v1462 = vor.u32 %v1458, %v1461
        %v1463 = vsel %vm1383, %v1453, %v1462
        %v1465 = vshrl.u32 %v1375, 16
        %v1467 = vrot.slane %v1465, 3
        %v1468 = vshll.u32 %v1375, 16
        %v1470 = vrot.slane %v1468, 4
        %v1471 = vor.u32 %v1467, %v1470
        %v1472 = vsel %vm1383, %v1462, %v1471
        %v1474 = vshrl.u32 %v1376, 16
        %v1476 = vrot.slane %v1474, 3
        %v1477 = vshll.u32 %v1376, 16
        %v1479 = vrot.slane %v1477, 4
        %v1480 = vor.u32 %v1476, %v1479
        %v1481 = vsel %vm1383, %v1471, %v1480
        %v1483 = vshrl.u32 %v1377, 16
        %v1485 = vrot.slane %v1483, 3
        %v1486 = vshll.u32 %v1377, 16
        %v1488 = vrot.slane %v1486, 4
        %v1489 = vor.u32 %v1485, %v1488
        %v1490 = vsel %vm1383, %v1480, %v1489
        %v1492 = vshrl.u32 %v1378, 16
        %v1494 = vrot.slane %v1492, 3
        %v1495 = vshll.u32 %v1378, 16
        %v1497 = vrot.slane %v1495, 4
        %v1498 = vor.u32 %v1494, %v1497
        %v1499 = vsel %vm1383, %v1489, %v1498
        %v1501 = vshrl.u32 %v1379, 16
        %v1503 = vrot.slane %v1501, 3
        %v1504 = vshll.u32 %v1379, 16
        %v1506 = vrot.slane %v1504, 4
        %v1507 = vor.u32 %v1503, %v1506
        %v1508 = vsel %vm1383, %v1498, %v1507
        %v1510 = vshrl.u32 %v1380, 16
        %v1512 = vrot.slane %v1510, 3
        %v1513 = vshll.u32 %v1380, 16
        %v1515 = vrot.slane %v1513, 4
        %v1516 = vor.u32 %v1512, %v1515
        %v1517 = vsel %vm1383, %v1507, %v1516
        %v1519 = vshrl.u32 %v1381, 16
        %v1521 = vrot.slane %v1519, 3
        %v1522 = vshll.u32 %v1381, 16
        %v1524 = vrot.slane %v1522, 4
        %v1525 = vor.u32 %v1521, %v1524
        %v1526 = vsel %vm1383, %v1516, %v1525
        %v1528 = vshrl.u32 %v1382, 16
        %v1530 = vrot.slane %v1528, 3
        %v1531 = vshll.u32 %v1382, 16
        %v1533 = vrot.slane %v1531, 4
        %v1534 = vor.u32 %v1530, %v1533
        %v1535 = vsel %vm1383, %v1525, %v1534
        %v1537 = vsel %vm1158, %v1400, 0
        %v1540 = vsel %vm1158, %v1409, 0
        %v1543 = vsel %vm1158, %v1418, 0
        %v1546 = vsel %vm1158, %v1427, 0
        %v1549 = vsel %vm1158, %v1436, 0
        %v1552 = vsel %vm1158, %v1445, 0
        %v1555 = vsel %vm1158, %v1454, 0
        %v1558 = vsel %vm1158, %v1463, 0
        %v1561 = vsel %vm1158, %v1472, 0
        %v1564 = vsel %vm1158, %v1481, 0
        %v1567 = vsel %vm1158, %v1490, 0
        %v1570 = vsel %vm1158, %v1499, 0
        %v1573 = vsel %vm1158, %v1508, 0
        %v1576 = vsel %vm1158, %v1517, 0
        %v1579 = vsel %vm1158, %v1526, 0
        %v1582 = vsel %vm1158, %v1535, 0
        %v1585 = vsel %vm1207, %v1076, 0
        %1587 = vmatpush.bf16.msra.mxu0 0
        %1588 = vmatpush.bf16.msra.mxu0 0
        %1589 = vmatpush.bf16.msra.mxu0 0
        %1590 = vmatpush.bf16.msra.mxu0 0
        %1591 = vmatpush.bf16.msra.mxu0 0
        %1592 = vmatpush.bf16.msra.mxu0 0
        %1593 = vmatpush.bf16.msra.mxu0 0
        %1594 = vmatpush.bf16.msra.mxu0 %v1585
        %1595 = vmatmul.bf16.gmra.mxu0 %v1537
        %v1596 = vpop.f32.mrf.mxu0
        %v1597 = vadd.f32 %v1221, %v1596
        %v1598 = vpop.f32.mrf.mxu0
        %v1599 = vadd.f32 %v1223, %v1598
        %1600 = vmatmul.bf16.gmra.mxu0 %v1540
        %v1601 = vpop.f32.mrf.mxu0
        %v1602 = vadd.f32 %v1226, %v1601
        %v1603 = vpop.f32.mrf.mxu0
        %v1604 = vadd.f32 %v1228, %v1603
        %1605 = vmatmul.bf16.gmra.mxu0 %v1543
        %v1606 = vpop.f32.mrf.mxu0
        %v1607 = vadd.f32 %v1231, %v1606
        %v1608 = vpop.f32.mrf.mxu0
        %v1609 = vadd.f32 %v1233, %v1608
        %1610 = vmatmul.bf16.gmra.mxu0 %v1546
        %v1611 = vpop.f32.mrf.mxu0
        %v1612 = vadd.f32 %v1236, %v1611
        %v1613 = vpop.f32.mrf.mxu0
        %v1614 = vadd.f32 %v1238, %v1613
        %1615 = vmatmul.bf16.gmra.mxu0 %v1549
        %v1616 = vpop.f32.mrf.mxu0
        %v1617 = vadd.f32 %v1241, %v1616
        %v1618 = vpop.f32.mrf.mxu0
        %v1619 = vadd.f32 %v1243, %v1618
        %1620 = vmatmul.bf16.gmra.mxu0 %v1552
        %v1621 = vpop.f32.mrf.mxu0
        %v1622 = vadd.f32 %v1246, %v1621
        %v1623 = vpop.f32.mrf.mxu0
        %v1624 = vadd.f32 %v1248, %v1623
        %1625 = vmatmul.bf16.gmra.mxu0 %v1555
        %v1626 = vpop.f32.mrf.mxu0
        %v1627 = vadd.f32 %v1251, %v1626
        %v1628 = vpop.f32.mrf.mxu0
        %v1629 = vadd.f32 %v1253, %v1628
        %1630 = vmatmul.bf16.gmra.mxu0 %v1558
        %v1631 = vpop.f32.mrf.mxu0
        %v1632 = vadd.f32 %v1256, %v1631
        %v1633 = vpop.f32.mrf.mxu0
        %v1634 = vadd.f32 %v1258, %v1633
        %1635 = vmatmul.bf16.gmra.mxu0 %v1561
        %v1636 = vpop.f32.mrf.mxu0
        %v1637 = vadd.f32 %v1261, %v1636
        %v1638 = vpop.f32.mrf.mxu0
        %v1639 = vadd.f32 %v1263, %v1638
        %1640 = vmatmul.bf16.gmra.mxu0 %v1564
        %v1641 = vpop.f32.mrf.mxu0
        %v1642 = vadd.f32 %v1266, %v1641
        %v1643 = vpop.f32.mrf.mxu0
        %v1644 = vadd.f32 %v1268, %v1643
        %1645 = vmatmul.bf16.gmra.mxu0 %v1567
        %v1646 = vpop.f32.mrf.mxu0
        %v1647 = vadd.f32 %v1271, %v1646
        %v1648 = vpop.f32.mrf.mxu0
        %v1649 = vadd.f32 %v1273, %v1648
        %1650 = vmatmul.bf16.gmra.mxu0 %v1570
        %v1651 = vpop.f32.mrf.mxu0
        %v1652 = vadd.f32 %v1276, %v1651
        %v1653 = vpop.f32.mrf.mxu0
        %v1654 = vadd.f32 %v1278, %v1653
        %1655 = vmatmul.bf16.gmra.mxu0 %v1573
        %v1656 = vpop.f32.mrf.mxu0
        %v1657 = vadd.f32 %v1281, %v1656
        %v1658 = vpop.f32.mrf.mxu0
        %v1659 = vadd.f32 %v1283, %v1658
        %1660 = vmatmul.bf16.gmra.mxu0 %v1576
        %v1661 = vpop.f32.mrf.mxu0
        %v1662 = vadd.f32 %v1286, %v1661
        %v1663 = vpop.f32.mrf.mxu0
        %v1664 = vadd.f32 %v1288, %v1663
        %1665 = vmatmul.bf16.gmra.mxu0 %v1579
        %v1666 = vpop.f32.mrf.mxu0
        %v1667 = vadd.f32 %v1291, %v1666
        %v1668 = vpop.f32.mrf.mxu0
        %v1669 = vadd.f32 %v1293, %v1668
        %1670 = vmatmul.bf16.gmra.mxu0 %v1582
        %v1671 = vpop.f32.mrf.mxu0
        %v1672 = vadd.f32 %v1296, %v1671
        %v1673 = vpop.f32.mrf.mxu0
        %v1674 = vadd.f32 %v1298, %v1673
        %1675 = vdwg.mxu0
        %v1676 = vld [vmem:[#allocation2 + $0x4] sm:$0xf]
        %v1677 = vld [vmem:[#allocation2 + $0x8] sm:$0xf]
        %v1678 = vld [vmem:[#allocation2 + $0xc] sm:$0xf]
        %v1679 = vld [vmem:[#allocation2 + $0x10] sm:$0xf]
        %v1680 = vld [vmem:[#allocation2 + $0x14] sm:$0xf]
        %v1681 = vld [vmem:[#allocation2 + $0x18] sm:$0xf]
        %v1682 = vld [vmem:[#allocation2 + $0x1c] sm:$0xf]
        %v1683 = vld [vmem:[#allocation2 + $0x20] sm:$0xf]
        %v1684 = vld [vmem:[#allocation2 + $0x24] sm:$0xf]
        %v1685 = vld [vmem:[#allocation2 + $0x28] sm:$0xf]
        %v1686 = vld [vmem:[#allocation2 + $0x2c] sm:$0xf]
        %v1687 = vld [vmem:[#allocation2 + $0x30] sm:$0xf]
        %v1688 = vld [vmem:[#allocation2 + $0x34] sm:$0xf]
        %v1689 = vld [vmem:[#allocation2 + $0x38] sm:$0xf]
        %v1690 = vld [vmem:[#allocation2 + $0x3c] sm:$0xf]
        %v1691 = vld [vmem:[#allocation2 + $0x40] sm:$0xf]
        %v1692 = vld [vmem:[#allocation2 + $0x44] sm:$0xf]
        %v1693 = vld [vmem:[#allocation2 + $0x48] sm:$0xf]
        %v1694 = vld [vmem:[#allocation2 + $0x4c] sm:$0xf]
        %v1695 = vld [vmem:[#allocation2 + $0x50] sm:$0xf]
        %v1696 = vld [vmem:[#allocation2 + $0x54] sm:$0xf]
        %v1697 = vld [vmem:[#allocation2 + $0x58] sm:$0xf]
        %v1698 = vld [vmem:[#allocation2 + $0x5c] sm:$0xf]
        %v1699 = vld [vmem:[#allocation2 + $0x60] sm:$0xf]
        %v1700 = vld [vmem:[#allocation2 + $0x64] sm:$0xf]
        %v1701 = vld [vmem:[#allocation2 + $0x68] sm:$0xf]
        %v1702 = vld [vmem:[#allocation2 + $0x6c] sm:$0xf]
        %v1703 = vld [vmem:[#allocation2 + $0x70] sm:$0xf]
        %v1704 = vld [vmem:[#allocation2 + $0x74] sm:$0xf]
        %v1705 = vld [vmem:[#allocation2 + $0x78] sm:$0xf]
        %v1706 = vld [vmem:[#allocation2 + $0x7c] sm:$0xf]
        %v1707 = vld [vmem:[#allocation2 + $0x80] sm:$0xf]
        %v1708 = vld [vmem:[#allocation2 + $0x84] sm:$0x1]
        %v1709 = vsel %vm949, 1, 0
        %v1710 = vsel %vm950, 1, 0
        %vm1711 = vcmp.eq.s32.totalorder %v1709, 1
        %vm1712 = vcmp.eq.s32.totalorder %v1710, 1
        %vm1713 = vmpackc.low %vm1711, %vm1711
        %vm1714 = vmpackc.low %vm1712, %vm1712
        %v1715 = vsel %vm1713, 65537, 0
        %v1716 = vsel %vm1714, 65537, 0
        %vm1717 = vsmask.f32 256
        %vm1718 = vsmask.f32 4368
        %vm1719 = vmor %vm1717, %vm1718
        %v1721 = vshrl.u32 %v1715, 16
        %v1723 = vrot.slane %v1721, 7
        %v1724 = vshll.u32 %v1715, 16
        %v1726 = vor.u32 %v1723, %v1724
        %v1727 = vrot.slane %v1723, 4
        %v1729 = vshrl.u32 %v1716, 16
        %v1731 = vrot.slane %v1729, 7
        %v1732 = vshll.u32 %v1716, 16
        %v1734 = vor.u32 %v1731, %v1732
        %v1735 = vsel %vm1719, %v1727, %v1734
        %v1736 = vrot.slane %v1731, 4
        %v1737 = vsel %vm1719, %v1736, %v1726
        %v1738 = vunpack.c.l.b16 %v1726
        %v1739 = vunpack.c.h.b16 %v1726
        %v1740 = vunpack.c.l.b16 0
        %v1741 = vunpack.c.h.b16 0
        %vm1742 = vcmp.ne.s32.totalorder %v1738, %v1740
        %vm1743 = vcmp.ne.s32.totalorder %v1739, %v1741
        %vm1744 = vmpackc.low %vm1743, %vm1742
        %v1745 = vunpack.c.l.b16 %v1735
        %v1746 = vunpack.c.h.b16 %v1735
        %v1747 = vunpack.c.l.b16 0
        %v1748 = vunpack.c.h.b16 0
        %vm1749 = vcmp.ne.s32.totalorder %v1745, %v1747
        %vm1750 = vcmp.ne.s32.totalorder %v1746, %v1748
        %vm1751 = vmpackc.low %vm1750, %vm1749
        %v1752 = vunpack.c.l.b16 %v1737
        %v1753 = vunpack.c.h.b16 %v1737
        %v1754 = vunpack.c.l.b16 0
        %v1755 = vunpack.c.h.b16 0
        %vm1756 = vcmp.ne.s32.totalorder %v1752, %v1754
        %vm1757 = vcmp.ne.s32.totalorder %v1753, %v1755
        %vm1758 = vmpackc.low %vm1757, %vm1756
        %v1759 = vunpack.c.l.b16 %v1736
        %v1760 = vunpack.c.h.b16 %v1736
        %v1761 = vunpack.c.l.b16 0
        %v1762 = vunpack.c.h.b16 0
        %vm1763 = vcmp.ne.s32.totalorder %v1759, %v1761
        %vm1764 = vcmp.ne.s32.totalorder %v1760, %v1762
        %vm1765 = vmpackc.low %vm1764, %vm1763
        %v1766 = vsel %vm1744, %v1676, 0
        %v1767 = vsel %vm1751, %v1677, 0
        %v1768 = vsel %vm1758, %v1678, 0
        %v1769 = vsel %vm1751, %v1679, 0
        %v1770 = vsel %vm1758, %v1680, 0
        %v1771 = vsel %vm1751, %v1681, 0
        %v1772 = vsel %vm1758, %v1682, 0
        %v1773 = vsel %vm1751, %v1683, 0
        %v1774 = vsel %vm1758, %v1684, 0
        %v1775 = vsel %vm1751, %v1685, 0
        %v1776 = vsel %vm1758, %v1686, 0
        %v1777 = vsel %vm1751, %v1687, 0
        %v1778 = vsel %vm1758, %v1688, 0
        %v1779 = vsel %vm1751, %v1689, 0
        %v1780 = vsel %vm1758, %v1690, 0
        %v1781 = vsel %vm1751, %v1691, 0
        %v1782 = vsel %vm1758, %v1692, 0
        %v1783 = vsel %vm1751, %v1693, 0
        %v1784 = vsel %vm1758, %v1694, 0
        %v1785 = vsel %vm1751, %v1695, 0
        %v1786 = vsel %vm1758, %v1696, 0
        %v1787 = vsel %vm1751, %v1697, 0
        %v1788 = vsel %vm1758, %v1698, 0
        %v1789 = vsel %vm1751, %v1699, 0
        %v1790 = vsel %vm1758, %v1700, 0
        %v1791 = vsel %vm1751, %v1701, 0
        %v1792 = vsel %vm1758, %v1702, 0
        %v1793 = vsel %vm1751, %v1703, 0
        %v1794 = vsel %vm1758, %v1704, 0
        %v1795 = vsel %vm1751, %v1705, 0
        %v1796 = vsel %vm1758, %v1706, 0
        %v1797 = vsel %vm1751, %v1707, 0
        %v1798 = vsel %vm1765, %v1708, 0
        %v1799 = vld [vmem:[%s5 + $0x8] sm:$0xf]
        %v1833 = vunpack.c.l.b16 %v1766
        %v1834 = vunpack.c.l.b16 %v1767
        %v1835 = vunpack.c.l.b16 %v1768
        %v1836 = vunpack.c.l.b16 %v1769
        %v1837 = vunpack.c.l.b16 %v1770
        %v1838 = vunpack.c.l.b16 %v1771
        %v1839 = vunpack.c.l.b16 %v1772
        %v1840 = vunpack.c.l.b16 %v1773
        %v1841 = vunpack.c.l.b16 %v1774
        %v1842 = vunpack.c.l.b16 %v1775
        %v1843 = vunpack.c.l.b16 %v1776
        %v1844 = vunpack.c.l.b16 %v1777
        %v1845 = vunpack.c.l.b16 %v1778
        %v1846 = vunpack.c.l.b16 %v1779
        %v1847 = vunpack.c.l.b16 %v1780
        %v1848 = vunpack.c.l.b16 %v1781
        %v1849 = vunpack.c.l.b16 %v1782
        %v1850 = vunpack.c.l.b16 %v1783
        %v1851 = vunpack.c.l.b16 %v1784
        %v1852 = vunpack.c.l.b16 %v1785
        %v1853 = vunpack.c.l.b16 %v1786
        %v1854 = vunpack.c.l.b16 %v1787
        %v1855 = vunpack.c.l.b16 %v1788
        %v1856 = vunpack.c.l.b16 %v1789
        %v1857 = vunpack.c.l.b16 %v1790
        %v1858 = vunpack.c.l.b16 %v1791
        %v1859 = vunpack.c.l.b16 %v1792
        %v1860 = vunpack.c.l.b16 %v1793
        %v1861 = vunpack.c.l.b16 %v1794
        %v1862 = vunpack.c.l.b16 %v1795
        %v1863 = vunpack.c.l.b16 %v1796
        %v1864 = vunpack.c.l.b16 %v1797
        %v1865 = vunpack.c.l.b16 %v1798
        %v1866 = vpack.c.b16 %v1834, %v1833
        %v1867 = vpack.c.b16 %v1836, %v1835
        %v1868 = vpack.c.b16 %v1838, %v1837
        %v1869 = vpack.c.b16 %v1840, %v1839
        %v1870 = vpack.c.b16 %v1842, %v1841
        %v1871 = vpack.c.b16 %v1844, %v1843
        %v1872 = vpack.c.b16 %v1846, %v1845
        %v1873 = vpack.c.b16 %v1848, %v1847
        %v1874 = vpack.c.b16 %v1850, %v1849
        %v1875 = vpack.c.b16 %v1852, %v1851
        %v1876 = vpack.c.b16 %v1854, %v1853
        %v1877 = vpack.c.b16 %v1856, %v1855
        %v1878 = vpack.c.b16 %v1858, %v1857
        %v1879 = vpack.c.b16 %v1860, %v1859
        %v1880 = vpack.c.b16 %v1862, %v1861
        %v1881 = vpack.c.b16 %v1864, %v1863
        %v1882 = vpack.c.b16 %v1865, %v1865
        %vm1883 = vsmask.f32 7424
        %v1885 = vshrl.u32 %v1866, 16
        %v1887 = vshll.u32 %v1866, 16
        %v1889 = vrot.slane %v1887, 1
        %v1890 = vor.u32 %v1885, %v1889
        %v1892 = vshll.u32 %v1867, 16
        %v1894 = vrot.slane %v1892, 1
        %v1895 = vsel %vm1883, %v1890, %v1894
        %v1896 = vshrl.u32 %v1867, 16
        %v1898 = vor.u32 %v1896, %v1894
        %v1900 = vshll.u32 %v1868, 16
        %v1902 = vrot.slane %v1900, 1
        %v1903 = vsel %vm1883, %v1898, %v1902
        %v1904 = vshrl.u32 %v1868, 16
        %v1906 = vor.u32 %v1904, %v1902
        %v1908 = vshll.u32 %v1869, 16
        %v1910 = vrot.slane %v1908, 1
        %v1911 = vsel %vm1883, %v1906, %v1910
        %v1912 = vshrl.u32 %v1869, 16
        %v1914 = vor.u32 %v1912, %v1910
        %v1916 = vshll.u32 %v1870, 16
        %v1918 = vrot.slane %v1916, 1
        %v1919 = vsel %vm1883, %v1914, %v1918
        %v1920 = vshrl.u32 %v1870, 16
        %v1922 = vor.u32 %v1920, %v1918
        %v1924 = vshll.u32 %v1871, 16
        %v1926 = vrot.slane %v1924, 1
        %v1927 = vsel %vm1883, %v1922, %v1926
        %v1928 = vshrl.u32 %v1871, 16
        %v1930 = vor.u32 %v1928, %v1926
        %v1932 = vshll.u32 %v1872, 16
        %v1934 = vrot.slane %v1932, 1
        %v1935 = vsel %vm1883, %v1930, %v1934
        %v1936 = vshrl.u32 %v1872, 16
        %v1938 = vor.u32 %v1936, %v1934
        %v1940 = vshll.u32 %v1873, 16
        %v1942 = vrot.slane %v1940, 1
        %v1943 = vsel %vm1883, %v1938, %v1942
        %v1944 = vshrl.u32 %v1873, 16
        %v1946 = vor.u32 %v1944, %v1942
        %v1948 = vshll.u32 %v1874, 16
        %v1950 = vrot.slane %v1948, 1
        %v1951 = vsel %vm1883, %v1946, %v1950
        %v1952 = vshrl.u32 %v1874, 16
        %v1954 = vor.u32 %v1952, %v1950
        %v1956 = vshll.u32 %v1875, 16
        %v1958 = vrot.slane %v1956, 1
        %v1959 = vsel %vm1883, %v1954, %v1958
        %v1960 = vshrl.u32 %v1875, 16
        %v1962 = vor.u32 %v1960, %v1958
        %v1964 = vshll.u32 %v1876, 16
        %v1966 = vrot.slane %v1964, 1
        %v1967 = vsel %vm1883, %v1962, %v1966
        %v1968 = vshrl.u32 %v1876, 16
        %v1970 = vor.u32 %v1968, %v1966
        %v1972 = vshll.u32 %v1877, 16
        %v1974 = vrot.slane %v1972, 1
        %v1975 = vsel %vm1883, %v1970, %v1974
        %v1976 = vshrl.u32 %v1877, 16
        %v1978 = vor.u32 %v1976, %v1974
        %v1980 = vshll.u32 %v1878, 16
        %v1982 = vrot.slane %v1980, 1
        %v1983 = vsel %vm1883, %v1978, %v1982
        %v1984 = vshrl.u32 %v1878, 16
        %v1986 = vor.u32 %v1984, %v1982
        %v1988 = vshll.u32 %v1879, 16
        %v1990 = vrot.slane %v1988, 1
        %v1991 = vsel %vm1883, %v1986, %v1990
        %v1992 = vshrl.u32 %v1879, 16
        %v1994 = vor.u32 %v1992, %v1990
        %v1996 = vshll.u32 %v1880, 16
        %v1998 = vrot.slane %v1996, 1
        %v1999 = vsel %vm1883, %v1994, %v1998
        %v2000 = vshrl.u32 %v1880, 16
        %v2002 = vor.u32 %v2000, %v1998
        %v2004 = vshll.u32 %v1881, 16
        %v2006 = vrot.slane %v2004, 1
        %v2007 = vsel %vm1883, %v2002, %v2006
        %v2008 = vshrl.u32 %v1881, 16
        %v2010 = vor.u32 %v2008, %v2006
        %v2012 = vshll.u32 %v1882, 16
        %v2014 = vrot.slane %v2012, 1
        %v2015 = vsel %vm1883, %v2010, %v2014
        %v2017 = vsel %vm1158, %v1895, 0
        %v2020 = vsel %vm1158, %v1903, 0
        %v2023 = vsel %vm1158, %v1911, 0
        %v2026 = vsel %vm1158, %v1919, 0
        %v2029 = vsel %vm1158, %v1927, 0
        %v2032 = vsel %vm1158, %v1935, 0
        %v2035 = vsel %vm1158, %v1943, 0
        %v2038 = vsel %vm1158, %v1951, 0
        %v2041 = vsel %vm1158, %v1959, 0
        %v2044 = vsel %vm1158, %v1967, 0
        %v2047 = vsel %vm1158, %v1975, 0
        %v2050 = vsel %vm1158, %v1983, 0
        %v2053 = vsel %vm1158, %v1991, 0
        %v2056 = vsel %vm1158, %v1999, 0
        %v2059 = vsel %vm1158, %v2007, 0
        %v2062 = vsel %vm1158, %v2015, 0
        %v2065 = vsel %vm1207, %v1799, 0
        %2067 = vmatpush.bf16.msra.mxu0 0
        %2068 = vmatpush.bf16.msra.mxu0 0
        %2069 = vmatpush.bf16.msra.mxu0 0
        %2070 = vmatpush.bf16.msra.mxu0 0
        %2071 = vmatpush.bf16.msra.mxu0 0
        %2072 = vmatpush.bf16.msra.mxu0 0
        %2073 = vmatpush.bf16.msra.mxu0 0
        %2074 = vmatpush.bf16.msra.mxu0 %v2065
        %2075 = vmatmul.bf16.gmra.mxu0 %v2017
        %v2076 = vpop.f32.mrf.mxu0
        %v2077 = vadd.f32 0.0, %v2076
        %v2078 = vpop.f32.mrf.mxu0
        %v2079 = vadd.f32 0.0, %v2078
        %2080 = vmatmul.bf16.gmra.mxu0 %v2020
        %v2081 = vpop.f32.mrf.mxu0
        %v2082 = vadd.f32 0.0, %v2081
        %v2083 = vpop.f32.mrf.mxu0
        %v2084 = vadd.f32 0.0, %v2083
        %2085 = vmatmul.bf16.gmra.mxu0 %v2023
        %v2086 = vpop.f32.mrf.mxu0
        %v2087 = vadd.f32 0.0, %v2086
        %v2088 = vpop.f32.mrf.mxu0
        %v2089 = vadd.f32 0.0, %v2088
        %2090 = vmatmul.bf16.gmra.mxu0 %v2026
        %v2091 = vpop.f32.mrf.mxu0
        %v2092 = vadd.f32 0.0, %v2091
        %v2093 = vpop.f32.mrf.mxu0
        %v2094 = vadd.f32 0.0, %v2093
        %2095 = vmatmul.bf16.gmra.mxu0 %v2029
        %v2096 = vpop.f32.mrf.mxu0
        %v2097 = vadd.f32 0.0, %v2096
        %v2098 = vpop.f32.mrf.mxu0
        %v2099 = vadd.f32 0.0, %v2098
        %2100 = vmatmul.bf16.gmra.mxu0 %v2032
        %v2101 = vpop.f32.mrf.mxu0
        %v2102 = vadd.f32 0.0, %v2101
        %v2103 = vpop.f32.mrf.mxu0
        %v2104 = vadd.f32 0.0, %v2103
        %2105 = vmatmul.bf16.gmra.mxu0 %v2035
        %v2106 = vpop.f32.mrf.mxu0
        %v2107 = vadd.f32 0.0, %v2106
        %v2108 = vpop.f32.mrf.mxu0
        %v2109 = vadd.f32 0.0, %v2108
        %2110 = vmatmul.bf16.gmra.mxu0 %v2038
        %v2111 = vpop.f32.mrf.mxu0
        %v2112 = vadd.f32 0.0, %v2111
        %v2113 = vpop.f32.mrf.mxu0
        %v2114 = vadd.f32 0.0, %v2113
        %2115 = vmatmul.bf16.gmra.mxu0 %v2041
        %v2116 = vpop.f32.mrf.mxu0
        %v2117 = vadd.f32 0.0, %v2116
        %v2118 = vpop.f32.mrf.mxu0
        %v2119 = vadd.f32 0.0, %v2118
        %2120 = vmatmul.bf16.gmra.mxu0 %v2044
        %v2121 = vpop.f32.mrf.mxu0
        %v2122 = vadd.f32 0.0, %v2121
        %v2123 = vpop.f32.mrf.mxu0
        %v2124 = vadd.f32 0.0, %v2123
        %2125 = vmatmul.bf16.gmra.mxu0 %v2047
        %v2126 = vpop.f32.mrf.mxu0
        %v2127 = vadd.f32 0.0, %v2126
        %v2128 = vpop.f32.mrf.mxu0
        %v2129 = vadd.f32 0.0, %v2128
        %2130 = vmatmul.bf16.gmra.mxu0 %v2050
        %v2131 = vpop.f32.mrf.mxu0
        %v2132 = vadd.f32 0.0, %v2131
        %v2133 = vpop.f32.mrf.mxu0
        %v2134 = vadd.f32 0.0, %v2133
        %2135 = vmatmul.bf16.gmra.mxu0 %v2053
        %v2136 = vpop.f32.mrf.mxu0
        %v2137 = vadd.f32 0.0, %v2136
        %v2138 = vpop.f32.mrf.mxu0
        %v2139 = vadd.f32 0.0, %v2138
        %2140 = vmatmul.bf16.gmra.mxu0 %v2056
        %v2141 = vpop.f32.mrf.mxu0
        %v2142 = vadd.f32 0.0, %v2141
        %v2143 = vpop.f32.mrf.mxu0
        %v2144 = vadd.f32 0.0, %v2143
        %2145 = vmatmul.bf16.gmra.mxu0 %v2059
        %v2146 = vpop.f32.mrf.mxu0
        %v2147 = vadd.f32 0.0, %v2146
        %v2148 = vpop.f32.mrf.mxu0
        %v2149 = vadd.f32 0.0, %v2148
        %2150 = vmatmul.bf16.gmra.mxu0 %v2062
        %v2151 = vpop.f32.mrf.mxu0
        %v2152 = vadd.f32 0.0, %v2151
        %v2153 = vpop.f32.mrf.mxu0
        %v2154 = vadd.f32 0.0, %v2153
        %2155 = vdwg.mxu0
        %v2156 = vadd.f32 %v1597, %v2077
        %v2157 = vadd.f32 %v1599, %v2079
        %v2158 = vadd.f32 %v1602, %v2082
        %v2159 = vadd.f32 %v1604, %v2084
        %v2160 = vadd.f32 %v1607, %v2087
        %v2161 = vadd.f32 %v1609, %v2089
        %v2162 = vadd.f32 %v1612, %v2092
        %v2163 = vadd.f32 %v1614, %v2094
        %v2164 = vadd.f32 %v1617, %v2097
        %v2165 = vadd.f32 %v1619, %v2099
        %v2166 = vadd.f32 %v1622, %v2102
        %v2167 = vadd.f32 %v1624, %v2104
        %v2168 = vadd.f32 %v1627, %v2107
        %v2169 = vadd.f32 %v1629, %v2109
        %v2170 = vadd.f32 %v1632, %v2112
        %v2171 = vadd.f32 %v1634, %v2114
        %v2172 = vadd.f32 %v1637, %v2117
        %v2173 = vadd.f32 %v1639, %v2119
        %v2174 = vadd.f32 %v1642, %v2122
        %v2175 = vadd.f32 %v1644, %v2124
        %v2176 = vadd.f32 %v1647, %v2127
        %v2177 = vadd.f32 %v1649, %v2129
        %v2178 = vadd.f32 %v1652, %v2132
        %v2179 = vadd.f32 %v1654, %v2134
        %v2180 = vadd.f32 %v1657, %v2137
        %v2181 = vadd.f32 %v1659, %v2139
        %v2182 = vadd.f32 %v1662, %v2142
        %v2183 = vadd.f32 %v1664, %v2144
        %v2184 = vadd.f32 %v1667, %v2147
        %v2185 = vadd.f32 %v1669, %v2149
        %v2186 = vadd.f32 %v1672, %v2152
        %v2187 = vadd.f32 %v1674, %v2154
        %v2188 = vld [vmem:[#allocation2 + $0x8] sm:$0x8]
        %v2189 = vld [vmem:[#allocation2 + $0xc] sm:$0xf]
        %v2190 = vld [vmem:[#allocation2 + $0x10] sm:$0xf]
        %v2191 = vld [vmem:[#allocation2 + $0x14] sm:$0xf]
        %v2192 = vld [vmem:[#allocation2 + $0x18] sm:$0xf]
        %v2193 = vld [vmem:[#allocation2 + $0x1c] sm:$0xf]
        %v2194 = vld [vmem:[#allocation2 + $0x20] sm:$0xf]
        %v2195 = vld [vmem:[#allocation2 + $0x24] sm:$0xf]
        %v2196 = vld [vmem:[#allocation2 + $0x28] sm:$0xf]
        %v2197 = vld [vmem:[#allocation2 + $0x2c] sm:$0xf]
        %v2198 = vld [vmem:[#allocation2 + $0x30] sm:$0xf]
        %v2199 = vld [vmem:[#allocation2 + $0x34] sm:$0xf]
        %v2200 = vld [vmem:[#allocation2 + $0x38] sm:$0xf]
        %v2201 = vld [vmem:[#allocation2 + $0x3c] sm:$0xf]
        %v2202 = vld [vmem:[#allocation2 + $0x40] sm:$0xf]
        %v2203 = vld [vmem:[#allocation2 + $0x44] sm:$0xf]
        %v2204 = vld [vmem:[#allocation2 + $0x48] sm:$0xf]
        %v2205 = vld [vmem:[#allocation2 + $0x4c] sm:$0xf]
        %v2206 = vld [vmem:[#allocation2 + $0x50] sm:$0xf]
        %v2207 = vld [vmem:[#allocation2 + $0x54] sm:$0xf]
        %v2208 = vld [vmem:[#allocation2 + $0x58] sm:$0xf]
        %v2209 = vld [vmem:[#allocation2 + $0x5c] sm:$0xf]
        %v2210 = vld [vmem:[#allocation2 + $0x60] sm:$0xf]
        %v2211 = vld [vmem:[#allocation2 + $0x64] sm:$0xf]
        %v2212 = vld [vmem:[#allocation2 + $0x68] sm:$0xf]
        %v2213 = vld [vmem:[#allocation2 + $0x6c] sm:$0xf]
        %v2214 = vld [vmem:[#allocation2 + $0x70] sm:$0xf]
        %v2215 = vld [vmem:[#allocation2 + $0x74] sm:$0xf]
        %v2216 = vld [vmem:[#allocation2 + $0x78] sm:$0xf]
        %v2217 = vld [vmem:[#allocation2 + $0x7c] sm:$0xf]
        %v2218 = vld [vmem:[#allocation2 + $0x80] sm:$0xf]
        %v2219 = vld [vmem:[#allocation2 + $0x84] sm:$0xf]
        %v2220 = vld [vmem:[#allocation2 + $0x88] sm:$0xf]
        %v2221 = vsel %vm1021, %v2188, 0
        %v2222 = vsel %vm1028, %v2189, 0
        %v2223 = vsel %vm1035, %v2190, 0
        %v2224 = vsel %vm1028, %v2191, 0
        %v2225 = vsel %vm1035, %v2192, 0
        %v2226 = vsel %vm1028, %v2193, 0
        %v2227 = vsel %vm1035, %v2194, 0
        %v2228 = vsel %vm1028, %v2195, 0
        %v2229 = vsel %vm1035, %v2196, 0
        %v2230 = vsel %vm1028, %v2197, 0
        %v2231 = vsel %vm1035, %v2198, 0
        %v2232 = vsel %vm1028, %v2199, 0
        %v2233 = vsel %vm1035, %v2200, 0
        %v2234 = vsel %vm1028, %v2201, 0
        %v2235 = vsel %vm1035, %v2202, 0
        %v2236 = vsel %vm1028, %v2203, 0
        %v2237 = vsel %vm1035, %v2204, 0
        %v2238 = vsel %vm1028, %v2205, 0
        %v2239 = vsel %vm1035, %v2206, 0
        %v2240 = vsel %vm1028, %v2207, 0
        %v2241 = vsel %vm1035, %v2208, 0
        %v2242 = vsel %vm1028, %v2209, 0
        %v2243 = vsel %vm1035, %v2210, 0
        %v2244 = vsel %vm1028, %v2211, 0
        %v2245 = vsel %vm1035, %v2212, 0
        %v2246 = vsel %vm1028, %v2213, 0
        %v2247 = vsel %vm1035, %v2214, 0
        %v2248 = vsel %vm1028, %v2215, 0
        %v2249 = vsel %vm1035, %v2216, 0
        %v2250 = vsel %vm1028, %v2217, 0
        %v2251 = vsel %vm1035, %v2218, 0
        %v2252 = vsel %vm1028, %v2219, 0
        %v2253 = vsel %vm1042, %v2220, 0
        %s2254 = scalar_lea.vmem %s5, 12
        %v2255 = vld [vmem:[%s2254] sm:$0xf]
        %v2289 = vunpack.c.l.b16 %v2221
        %v2290 = vunpack.c.l.b16 %v2222
        %v2291 = vunpack.c.l.b16 %v2223
        %v2292 = vunpack.c.l.b16 %v2224
        %v2293 = vunpack.c.l.b16 %v2225
        %v2294 = vunpack.c.l.b16 %v2226
        %v2295 = vunpack.c.l.b16 %v2227
        %v2296 = vunpack.c.l.b16 %v2228
        %v2297 = vunpack.c.l.b16 %v2229
        %v2298 = vunpack.c.l.b16 %v2230
        %v2299 = vunpack.c.l.b16 %v2231
        %v2300 = vunpack.c.l.b16 %v2232
        %v2301 = vunpack.c.l.b16 %v2233
        %v2302 = vunpack.c.l.b16 %v2234
        %v2303 = vunpack.c.l.b16 %v2235
        %v2304 = vunpack.c.l.b16 %v2236
        %v2305 = vunpack.c.l.b16 %v2237
        %v2306 = vunpack.c.l.b16 %v2238
        %v2307 = vunpack.c.l.b16 %v2239
        %v2308 = vunpack.c.l.b16 %v2240
        %v2309 = vunpack.c.l.b16 %v2241
        %v2310 = vunpack.c.l.b16 %v2242
        %v2311 = vunpack.c.l.b16 %v2243
        %v2312 = vunpack.c.l.b16 %v2244
        %v2313 = vunpack.c.l.b16 %v2245
        %v2314 = vunpack.c.l.b16 %v2246
        %v2315 = vunpack.c.l.b16 %v2247
        %v2316 = vunpack.c.l.b16 %v2248
        %v2317 = vunpack.c.l.b16 %v2249
        %v2318 = vunpack.c.l.b16 %v2250
        %v2319 = vunpack.c.l.b16 %v2251
        %v2320 = vunpack.c.l.b16 %v2252
        %v2321 = vunpack.c.l.b16 %v2253
        %v2322 = vpack.c.b16 %v2290, %v2289
        %v2323 = vpack.c.b16 %v2292, %v2291
        %v2324 = vpack.c.b16 %v2294, %v2293
        %v2325 = vpack.c.b16 %v2296, %v2295
        %v2326 = vpack.c.b16 %v2298, %v2297
        %v2327 = vpack.c.b16 %v2300, %v2299
        %v2328 = vpack.c.b16 %v2302, %v2301
        %v2329 = vpack.c.b16 %v2304, %v2303
        %v2330 = vpack.c.b16 %v2306, %v2305
        %v2331 = vpack.c.b16 %v2308, %v2307
        %v2332 = vpack.c.b16 %v2310, %v2309
        %v2333 = vpack.c.b16 %v2312, %v2311
        %v2334 = vpack.c.b16 %v2314, %v2313
        %v2335 = vpack.c.b16 %v2316, %v2315
        %v2336 = vpack.c.b16 %v2318, %v2317
        %v2337 = vpack.c.b16 %v2320, %v2319
        %v2338 = vpack.c.b16 %v2321, %v2321
        %v2340 = vshrl.u32 %v2322, 16
        %v2342 = vrot.slane %v2340, 3
        %v2343 = vshll.u32 %v2322, 16
        %v2345 = vrot.slane %v2343, 4
        %v2346 = vor.u32 %v2342, %v2345
        %v2348 = vshrl.u32 %v2323, 16
        %v2350 = vrot.slane %v2348, 3
        %v2351 = vshll.u32 %v2323, 16
        %v2353 = vrot.slane %v2351, 4
        %v2354 = vor.u32 %v2350, %v2353
        %v2355 = vsel %vm1383, %v2346, %v2354
        %v2357 = vshrl.u32 %v2324, 16
        %v2359 = vrot.slane %v2357, 3
        %v2360 = vshll.u32 %v2324, 16
        %v2362 = vrot.slane %v2360, 4
        %v2363 = vor.u32 %v2359, %v2362
        %v2364 = vsel %vm1383, %v2354, %v2363
        %v2366 = vshrl.u32 %v2325, 16
        %v2368 = vrot.slane %v2366, 3
        %v2369 = vshll.u32 %v2325, 16
        %v2371 = vrot.slane %v2369, 4
        %v2372 = vor.u32 %v2368, %v2371
        %v2373 = vsel %vm1383, %v2363, %v2372
        %v2375 = vshrl.u32 %v2326, 16
        %v2377 = vrot.slane %v2375, 3
        %v2378 = vshll.u32 %v2326, 16
        %v2380 = vrot.slane %v2378, 4
        %v2381 = vor.u32 %v2377, %v2380
        %v2382 = vsel %vm1383, %v2372, %v2381
        %v2384 = vshrl.u32 %v2327, 16
        %v2386 = vrot.slane %v2384, 3
        %v2387 = vshll.u32 %v2327, 16
        %v2389 = vrot.slane %v2387, 4
        %v2390 = vor.u32 %v2386, %v2389
        %v2391 = vsel %vm1383, %v2381, %v2390
        %v2393 = vshrl.u32 %v2328, 16
        %v2395 = vrot.slane %v2393, 3
        %v2396 = vshll.u32 %v2328, 16
        %v2398 = vrot.slane %v2396, 4
        %v2399 = vor.u32 %v2395, %v2398
        %v2400 = vsel %vm1383, %v2390, %v2399
        %v2402 = vshrl.u32 %v2329, 16
        %v2404 = vrot.slane %v2402, 3
        %v2405 = vshll.u32 %v2329, 16
        %v2407 = vrot.slane %v2405, 4
        %v2408 = vor.u32 %v2404, %v2407
        %v2409 = vsel %vm1383, %v2399, %v2408
        %v2411 = vshrl.u32 %v2330, 16
        %v2413 = vrot.slane %v2411, 3
        %v2414 = vshll.u32 %v2330, 16
        %v2416 = vrot.slane %v2414, 4
        %v2417 = vor.u32 %v2413, %v2416
        %v2418 = vsel %vm1383, %v2408, %v2417
        %v2420 = vshrl.u32 %v2331, 16
        %v2422 = vrot.slane %v2420, 3
        %v2423 = vshll.u32 %v2331, 16
        %v2425 = vrot.slane %v2423, 4
        %v2426 = vor.u32 %v2422, %v2425
        %v2427 = vsel %vm1383, %v2417, %v2426
        %v2429 = vshrl.u32 %v2332, 16
        %v2431 = vrot.slane %v2429, 3
        %v2432 = vshll.u32 %v2332, 16
        %v2434 = vrot.slane %v2432, 4
        %v2435 = vor.u32 %v2431, %v2434
        %v2436 = vsel %vm1383, %v2426, %v2435
        %v2438 = vshrl.u32 %v2333, 16
        %v2440 = vrot.slane %v2438, 3
        %v2441 = vshll.u32 %v2333, 16
        %v2443 = vrot.slane %v2441, 4
        %v2444 = vor.u32 %v2440, %v2443
        %v2445 = vsel %vm1383, %v2435, %v2444
        %v2447 = vshrl.u32 %v2334, 16
        %v2449 = vrot.slane %v2447, 3
        %v2450 = vshll.u32 %v2334, 16
        %v2452 = vrot.slane %v2450, 4
        %v2453 = vor.u32 %v2449, %v2452
        %v2454 = vsel %vm1383, %v2444, %v2453
        %v2456 = vshrl.u32 %v2335, 16
        %v2458 = vrot.slane %v2456, 3
        %v2459 = vshll.u32 %v2335, 16
        %v2461 = vrot.slane %v2459, 4
        %v2462 = vor.u32 %v2458, %v2461
        %v2463 = vsel %vm1383, %v2453, %v2462
        %v2465 = vshrl.u32 %v2336, 16
        %v2467 = vrot.slane %v2465, 3
        %v2468 = vshll.u32 %v2336, 16
        %v2470 = vrot.slane %v2468, 4
        %v2471 = vor.u32 %v2467, %v2470
        %v2472 = vsel %vm1383, %v2462, %v2471
        %v2474 = vshrl.u32 %v2337, 16
        %v2476 = vrot.slane %v2474, 3
        %v2477 = vshll.u32 %v2337, 16
        %v2479 = vrot.slane %v2477, 4
        %v2480 = vor.u32 %v2476, %v2479
        %v2481 = vsel %vm1383, %v2471, %v2480
        %v2483 = vshrl.u32 %v2338, 16
        %v2485 = vrot.slane %v2483, 3
        %v2486 = vshll.u32 %v2338, 16
        %v2488 = vrot.slane %v2486, 4
        %v2489 = vor.u32 %v2485, %v2488
        %v2490 = vsel %vm1383, %v2480, %v2489
        %v2492 = vsel %vm1158, %v2355, 0
        %v2495 = vsel %vm1158, %v2364, 0
        %v2498 = vsel %vm1158, %v2373, 0
        %v2501 = vsel %vm1158, %v2382, 0
        %v2504 = vsel %vm1158, %v2391, 0
        %v2507 = vsel %vm1158, %v2400, 0
        %v2510 = vsel %vm1158, %v2409, 0
        %v2513 = vsel %vm1158, %v2418, 0
        %v2516 = vsel %vm1158, %v2427, 0
        %v2519 = vsel %vm1158, %v2436, 0
        %v2522 = vsel %vm1158, %v2445, 0
        %v2525 = vsel %vm1158, %v2454, 0
        %v2528 = vsel %vm1158, %v2463, 0
        %v2531 = vsel %vm1158, %v2472, 0
        %v2534 = vsel %vm1158, %v2481, 0
        %v2537 = vsel %vm1158, %v2490, 0
        %v2540 = vsel %vm1207, %v2255, 0
        %2542 = vmatpush.bf16.msra.mxu0 0
        %2543 = vmatpush.bf16.msra.mxu0 0
        %2544 = vmatpush.bf16.msra.mxu0 0
        %2545 = vmatpush.bf16.msra.mxu0 0
        %2546 = vmatpush.bf16.msra.mxu0 0
        %2547 = vmatpush.bf16.msra.mxu0 0
        %2548 = vmatpush.bf16.msra.mxu0 0
        %2549 = vmatpush.bf16.msra.mxu0 %v2540
        %2550 = vmatmul.bf16.gmra.mxu0 %v2492
        %v2551 = vpop.f32.mrf.mxu0
        %v2552 = vadd.f32 0.0, %v2551
        %v2553 = vpop.f32.mrf.mxu0
        %v2554 = vadd.f32 0.0, %v2553
        %2555 = vmatmul.bf16.gmra.mxu0 %v2495
        %v2556 = vpop.f32.mrf.mxu0
        %v2557 = vadd.f32 0.0, %v2556
        %v2558 = vpop.f32.mrf.mxu0
        %v2559 = vadd.f32 0.0, %v2558
        %2560 = vmatmul.bf16.gmra.mxu0 %v2498
        %v2561 = vpop.f32.mrf.mxu0
        %v2562 = vadd.f32 0.0, %v2561
        %v2563 = vpop.f32.mrf.mxu0
        %v2564 = vadd.f32 0.0, %v2563
        %2565 = vmatmul.bf16.gmra.mxu0 %v2501
        %v2566 = vpop.f32.mrf.mxu0
        %v2567 = vadd.f32 0.0, %v2566
        %v2568 = vpop.f32.mrf.mxu0
        %v2569 = vadd.f32 0.0, %v2568
        %2570 = vmatmul.bf16.gmra.mxu0 %v2504
        %v2571 = vpop.f32.mrf.mxu0
        %v2572 = vadd.f32 0.0, %v2571
        %v2573 = vpop.f32.mrf.mxu0
        %v2574 = vadd.f32 0.0, %v2573
        %2575 = vmatmul.bf16.gmra.mxu0 %v2507
        %v2576 = vpop.f32.mrf.mxu0
        %v2577 = vadd.f32 0.0, %v2576
        %v2578 = vpop.f32.mrf.mxu0
        %v2579 = vadd.f32 0.0, %v2578
        %2580 = vmatmul.bf16.gmra.mxu0 %v2510
        %v2581 = vpop.f32.mrf.mxu0
        %v2582 = vadd.f32 0.0, %v2581
        %v2583 = vpop.f32.mrf.mxu0
        %v2584 = vadd.f32 0.0, %v2583
        %2585 = vmatmul.bf16.gmra.mxu0 %v2513
        %v2586 = vpop.f32.mrf.mxu0
        %v2587 = vadd.f32 0.0, %v2586
        %v2588 = vpop.f32.mrf.mxu0
        %v2589 = vadd.f32 0.0, %v2588
        %2590 = vmatmul.bf16.gmra.mxu0 %v2516
        %v2591 = vpop.f32.mrf.mxu0
        %v2592 = vadd.f32 0.0, %v2591
        %v2593 = vpop.f32.mrf.mxu0
        %v2594 = vadd.f32 0.0, %v2593
        %2595 = vmatmul.bf16.gmra.mxu0 %v2519
        %v2596 = vpop.f32.mrf.mxu0
        %v2597 = vadd.f32 0.0, %v2596
        %v2598 = vpop.f32.mrf.mxu0
        %v2599 = vadd.f32 0.0, %v2598
        %2600 = vmatmul.bf16.gmra.mxu0 %v2522
        %v2601 = vpop.f32.mrf.mxu0
        %v2602 = vadd.f32 0.0, %v2601
        %v2603 = vpop.f32.mrf.mxu0
        %v2604 = vadd.f32 0.0, %v2603
        %2605 = vmatmul.bf16.gmra.mxu0 %v2525
        %v2606 = vpop.f32.mrf.mxu0
        %v2607 = vadd.f32 0.0, %v2606
        %v2608 = vpop.f32.mrf.mxu0
        %v2609 = vadd.f32 0.0, %v2608
        %2610 = vmatmul.bf16.gmra.mxu0 %v2528
        %v2611 = vpop.f32.mrf.mxu0
        %v2612 = vadd.f32 0.0, %v2611
        %v2613 = vpop.f32.mrf.mxu0
        %v2614 = vadd.f32 0.0, %v2613
        %2615 = vmatmul.bf16.gmra.mxu0 %v2531
        %v2616 = vpop.f32.mrf.mxu0
        %v2617 = vadd.f32 0.0, %v2616
        %v2618 = vpop.f32.mrf.mxu0
        %v2619 = vadd.f32 0.0, %v2618
        %2620 = vmatmul.bf16.gmra.mxu0 %v2534
        %v2621 = vpop.f32.mrf.mxu0
        %v2622 = vadd.f32 0.0, %v2621
        %v2623 = vpop.f32.mrf.mxu0
        %v2624 = vadd.f32 0.0, %v2623
        %2625 = vmatmul.bf16.gmra.mxu0 %v2537
        %v2626 = vpop.f32.mrf.mxu0
        %v2627 = vadd.f32 0.0, %v2626
        %v2628 = vpop.f32.mrf.mxu0
        %v2629 = vadd.f32 0.0, %v2628
        %2630 = vdwg.mxu0
        %v2631 = vadd.f32 %v2156, %v2552
        %v2632 = vadd.f32 %v2157, %v2554
        %v2633 = vadd.f32 %v2158, %v2557
        %v2634 = vadd.f32 %v2159, %v2559
        %v2635 = vadd.f32 %v2160, %v2562
        %v2636 = vadd.f32 %v2161, %v2564
        %v2637 = vadd.f32 %v2162, %v2567
        %v2638 = vadd.f32 %v2163, %v2569
        %v2639 = vadd.f32 %v2164, %v2572
        %v2640 = vadd.f32 %v2165, %v2574
        %v2641 = vadd.f32 %v2166, %v2577
        %v2642 = vadd.f32 %v2167, %v2579
        %v2643 = vadd.f32 %v2168, %v2582
        %v2644 = vadd.f32 %v2169, %v2584
        %v2645 = vadd.f32 %v2170, %v2587
        %v2646 = vadd.f32 %v2171, %v2589
        %v2647 = vadd.f32 %v2172, %v2592
        %v2648 = vadd.f32 %v2173, %v2594
        %v2649 = vadd.f32 %v2174, %v2597
        %v2650 = vadd.f32 %v2175, %v2599
        %v2651 = vadd.f32 %v2176, %v2602
        %v2652 = vadd.f32 %v2177, %v2604
        %v2653 = vadd.f32 %v2178, %v2607
        %v2654 = vadd.f32 %v2179, %v2609
        %v2655 = vadd.f32 %v2180, %v2612
        %v2656 = vadd.f32 %v2181, %v2614
        %v2657 = vadd.f32 %v2182, %v2617
        %v2658 = vadd.f32 %v2183, %v2619
        %v2659 = vadd.f32 %v2184, %v2622
        %v2660 = vadd.f32 %v2185, %v2624
        %v2661 = vadd.f32 %v2186, %v2627
        %v2662 = vadd.f32 %v2187, %v2629
        %v2663 = vld [vmem:[%s2254 + $0x4] sm:$0xf]
        %v2696 = vunpack.c.l.b16 %v2189
        %v2697 = vunpack.c.l.b16 %v2190
        %v2698 = vunpack.c.l.b16 %v2191
        %v2699 = vunpack.c.l.b16 %v2192
        %v2700 = vunpack.c.l.b16 %v2193
        %v2701 = vunpack.c.l.b16 %v2194
        %v2702 = vunpack.c.l.b16 %v2195
        %v2703 = vunpack.c.l.b16 %v2196
        %v2704 = vunpack.c.l.b16 %v2197
        %v2705 = vunpack.c.l.b16 %v2198
        %v2706 = vunpack.c.l.b16 %v2199
        %v2707 = vunpack.c.l.b16 %v2200
        %v2708 = vunpack.c.l.b16 %v2201
        %v2709 = vunpack.c.l.b16 %v2202
        %v2710 = vunpack.c.l.b16 %v2203
        %v2711 = vunpack.c.l.b16 %v2204
        %v2712 = vunpack.c.l.b16 %v2205
        %v2713 = vunpack.c.l.b16 %v2206
        %v2714 = vunpack.c.l.b16 %v2207
        %v2715 = vunpack.c.l.b16 %v2208
        %v2716 = vunpack.c.l.b16 %v2209
        %v2717 = vunpack.c.l.b16 %v2210
        %v2718 = vunpack.c.l.b16 %v2211
        %v2719 = vunpack.c.l.b16 %v2212
        %v2720 = vunpack.c.l.b16 %v2213
        %v2721 = vunpack.c.l.b16 %v2214
        %v2722 = vunpack.c.l.b16 %v2215
        %v2723 = vunpack.c.l.b16 %v2216
        %v2724 = vunpack.c.l.b16 %v2217
        %v2725 = vunpack.c.l.b16 %v2218
        %v2726 = vunpack.c.l.b16 %v2219
        %v2727 = vunpack.c.l.b16 %v2220
        %v2728 = vpack.c.b16 %v2697, %v2696
        %v2729 = vpack.c.b16 %v2699, %v2698
        %v2730 = vpack.c.b16 %v2701, %v2700
        %v2731 = vpack.c.b16 %v2703, %v2702
        %v2732 = vpack.c.b16 %v2705, %v2704
        %v2733 = vpack.c.b16 %v2707, %v2706
        %v2734 = vpack.c.b16 %v2709, %v2708
        %v2735 = vpack.c.b16 %v2711, %v2710
        %v2736 = vpack.c.b16 %v2713, %v2712
        %v2737 = vpack.c.b16 %v2715, %v2714
        %v2738 = vpack.c.b16 %v2717, %v2716
        %v2739 = vpack.c.b16 %v2719, %v2718
        %v2740 = vpack.c.b16 %v2721, %v2720
        %v2741 = vpack.c.b16 %v2723, %v2722
        %v2742 = vpack.c.b16 %v2725, %v2724
        %v2743 = vpack.c.b16 %v2727, %v2726
        %v2745 = vsel %vm1158, %v2728, 0
        %v2748 = vsel %vm1158, %v2729, 0
        %v2751 = vsel %vm1158, %v2730, 0
        %v2754 = vsel %vm1158, %v2731, 0
        %v2757 = vsel %vm1158, %v2732, 0
        %v2760 = vsel %vm1158, %v2733, 0
        %v2763 = vsel %vm1158, %v2734, 0
        %v2766 = vsel %vm1158, %v2735, 0
        %v2769 = vsel %vm1158, %v2736, 0
        %v2772 = vsel %vm1158, %v2737, 0
        %v2775 = vsel %vm1158, %v2738, 0
        %v2778 = vsel %vm1158, %v2739, 0
        %v2781 = vsel %vm1158, %v2740, 0
        %v2784 = vsel %vm1158, %v2741, 0
        %v2787 = vsel %vm1158, %v2742, 0
        %v2790 = vsel %vm1158, %v2743, 0
        %v2793 = vsel %vm1207, %v2663, 0
        %2795 = vmatpush.bf16.msra.mxu0 0
        %2796 = vmatpush.bf16.msra.mxu0 0
        %2797 = vmatpush.bf16.msra.mxu0 0
        %2798 = vmatpush.bf16.msra.mxu0 0
        %2799 = vmatpush.bf16.msra.mxu0 0
        %2800 = vmatpush.bf16.msra.mxu0 0
        %2801 = vmatpush.bf16.msra.mxu0 0
        %2802 = vmatpush.bf16.msra.mxu0 %v2793
        %2803 = vmatmul.bf16.gmra.mxu0 %v2745
        %v2804 = vpop.f32.mrf.mxu0
        %v2805 = vadd.f32 0.0, %v2804
        %v2806 = vpop.f32.mrf.mxu0
        %v2807 = vadd.f32 0.0, %v2806
        %2808 = vmatmul.bf16.gmra.mxu0 %v2748
        %v2809 = vpop.f32.mrf.mxu0
        %v2810 = vadd.f32 0.0, %v2809
        %v2811 = vpop.f32.mrf.mxu0
        %v2812 = vadd.f32 0.0, %v2811
        %2813 = vmatmul.bf16.gmra.mxu0 %v2751
        %v2814 = vpop.f32.mrf.mxu0
        %v2815 = vadd.f32 0.0, %v2814
        %v2816 = vpop.f32.mrf.mxu0
        %v2817 = vadd.f32 0.0, %v2816
        %2818 = vmatmul.bf16.gmra.mxu0 %v2754
        %v2819 = vpop.f32.mrf.mxu0
        %v2820 = vadd.f32 0.0, %v2819
        %v2821 = vpop.f32.mrf.mxu0
        %v2822 = vadd.f32 0.0, %v2821
        %2823 = vmatmul.bf16.gmra.mxu0 %v2757
        %v2824 = vpop.f32.mrf.mxu0
        %v2825 = vadd.f32 0.0, %v2824
        %v2826 = vpop.f32.mrf.mxu0
        %v2827 = vadd.f32 0.0, %v2826
        %2828 = vmatmul.bf16.gmra.mxu0 %v2760
        %v2829 = vpop.f32.mrf.mxu0
        %v2830 = vadd.f32 0.0, %v2829
        %v2831 = vpop.f32.mrf.mxu0
        %v2832 = vadd.f32 0.0, %v2831
        %2833 = vmatmul.bf16.gmra.mxu0 %v2763
        %v2834 = vpop.f32.mrf.mxu0
        %v2835 = vadd.f32 0.0, %v2834
        %v2836 = vpop.f32.mrf.mxu0
        %v2837 = vadd.f32 0.0, %v2836
        %2838 = vmatmul.bf16.gmra.mxu0 %v2766
        %v2839 = vpop.f32.mrf.mxu0
        %v2840 = vadd.f32 0.0, %v2839
        %v2841 = vpop.f32.mrf.mxu0
        %v2842 = vadd.f32 0.0, %v2841
        %2843 = vmatmul.bf16.gmra.mxu0 %v2769
        %v2844 = vpop.f32.mrf.mxu0
        %v2845 = vadd.f32 0.0, %v2844
        %v2846 = vpop.f32.mrf.mxu0
        %v2847 = vadd.f32 0.0, %v2846
        %2848 = vmatmul.bf16.gmra.mxu0 %v2772
        %v2849 = vpop.f32.mrf.mxu0
        %v2850 = vadd.f32 0.0, %v2849
        %v2851 = vpop.f32.mrf.mxu0
        %v2852 = vadd.f32 0.0, %v2851
        %2853 = vmatmul.bf16.gmra.mxu0 %v2775
        %v2854 = vpop.f32.mrf.mxu0
        %v2855 = vadd.f32 0.0, %v2854
        %v2856 = vpop.f32.mrf.mxu0
        %v2857 = vadd.f32 0.0, %v2856
        %2858 = vmatmul.bf16.gmra.mxu0 %v2778
        %v2859 = vpop.f32.mrf.mxu0
        %v2860 = vadd.f32 0.0, %v2859
        %v2861 = vpop.f32.mrf.mxu0
        %v2862 = vadd.f32 0.0, %v2861
        %2863 = vmatmul.bf16.gmra.mxu0 %v2781
        %v2864 = vpop.f32.mrf.mxu0
        %v2865 = vadd.f32 0.0, %v2864
        %v2866 = vpop.f32.mrf.mxu0
        %v2867 = vadd.f32 0.0, %v2866
        %2868 = vmatmul.bf16.gmra.mxu0 %v2784
        %v2869 = vpop.f32.mrf.mxu0
        %v2870 = vadd.f32 0.0, %v2869
        %v2871 = vpop.f32.mrf.mxu0
        %v2872 = vadd.f32 0.0, %v2871
        %2873 = vmatmul.bf16.gmra.mxu0 %v2787
        %v2874 = vpop.f32.mrf.mxu0
        %v2875 = vadd.f32 0.0, %v2874
        %v2876 = vpop.f32.mrf.mxu0
        %v2877 = vadd.f32 0.0, %v2876
        %2878 = vmatmul.bf16.gmra.mxu0 %v2790
        %v2879 = vpop.f32.mrf.mxu0
        %v2880 = vadd.f32 0.0, %v2879
        %v2881 = vpop.f32.mrf.mxu0
        %v2882 = vadd.f32 0.0, %v2881
        %2883 = vdwg.mxu0
        %v2884 = vadd.f32 %v2631, %v2805
        %v2885 = vadd.f32 %v2632, %v2807
        %v2886 = vadd.f32 %v2633, %v2810
        %v2887 = vadd.f32 %v2634, %v2812
        %v2888 = vadd.f32 %v2635, %v2815
        %v2889 = vadd.f32 %v2636, %v2817
        %v2890 = vadd.f32 %v2637, %v2820
        %v2891 = vadd.f32 %v2638, %v2822
        %v2892 = vadd.f32 %v2639, %v2825
        %v2893 = vadd.f32 %v2640, %v2827
        %v2894 = vadd.f32 %v2641, %v2830
        %v2895 = vadd.f32 %v2642, %v2832
        %v2896 = vadd.f32 %v2643, %v2835
        %v2897 = vadd.f32 %v2644, %v2837
        %v2898 = vadd.f32 %v2645, %v2840
        %v2899 = vadd.f32 %v2646, %v2842
        %v2900 = vadd.f32 %v2647, %v2845
        %v2901 = vadd.f32 %v2648, %v2847
        %v2902 = vadd.f32 %v2649, %v2850
        %v2903 = vadd.f32 %v2650, %v2852
        %v2904 = vadd.f32 %v2651, %v2855
        %v2905 = vadd.f32 %v2652, %v2857
        %v2906 = vadd.f32 %v2653, %v2860
        %v2907 = vadd.f32 %v2654, %v2862
        %v2908 = vadd.f32 %v2655, %v2865
        %v2909 = vadd.f32 %v2656, %v2867
        %v2910 = vadd.f32 %v2657, %v2870
        %v2911 = vadd.f32 %v2658, %v2872
        %v2912 = vadd.f32 %v2659, %v2875
        %v2913 = vadd.f32 %v2660, %v2877
        %v2914 = vadd.f32 %v2661, %v2880
        %v2915 = vadd.f32 %v2662, %v2882
        %v2916 = vld [vmem:[#allocation2 + $0xc] sm:$0xf]
        %v2917 = vld [vmem:[#allocation2 + $0x10] sm:$0xf]
        %v2918 = vld [vmem:[#allocation2 + $0x14] sm:$0xf]
        %v2919 = vld [vmem:[#allocation2 + $0x18] sm:$0xf]
        %v2920 = vld [vmem:[#allocation2 + $0x1c] sm:$0xf]
        %v2921 = vld [vmem:[#allocation2 + $0x20] sm:$0xf]
        %v2922 = vld [vmem:[#allocation2 + $0x24] sm:$0xf]
        %v2923 = vld [vmem:[#allocation2 + $0x28] sm:$0xf]
        %v2924 = vld [vmem:[#allocation2 + $0x2c] sm:$0xf]
        %v2925 = vld [vmem:[#allocation2 + $0x30] sm:$0xf]
        %v2926 = vld [vmem:[#allocation2 + $0x34] sm:$0xf]
        %v2927 = vld [vmem:[#allocation2 + $0x38] sm:$0xf]
        %v2928 = vld [vmem:[#allocation2 + $0x3c] sm:$0xf]
        %v2929 = vld [vmem:[#allocation2 + $0x40] sm:$0xf]
        %v2930 = vld [vmem:[#allocation2 + $0x44] sm:$0xf]
        %v2931 = vld [vmem:[#allocation2 + $0x48] sm:$0xf]
        %v2932 = vld [vmem:[#allocation2 + $0x4c] sm:$0xf]
        %v2933 = vld [vmem:[#allocation2 + $0x50] sm:$0xf]
        %v2934 = vld [vmem:[#allocation2 + $0x54] sm:$0xf]
        %v2935 = vld [vmem:[#allocation2 + $0x58] sm:$0xf]
        %v2936 = vld [vmem:[#allocation2 + $0x5c] sm:$0xf]
        %v2937 = vld [vmem:[#allocation2 + $0x60] sm:$0xf]
        %v2938 = vld [vmem:[#allocation2 + $0x64] sm:$0xf]
        %v2939 = vld [vmem:[#allocation2 + $0x68] sm:$0xf]
        %v2940 = vld [vmem:[#allocation2 + $0x6c] sm:$0xf]
        %v2941 = vld [vmem:[#allocation2 + $0x70] sm:$0xf]
        %v2942 = vld [vmem:[#allocation2 + $0x74] sm:$0xf]
        %v2943 = vld [vmem:[#allocation2 + $0x78] sm:$0xf]
        %v2944 = vld [vmem:[#allocation2 + $0x7c] sm:$0xf]
        %v2945 = vld [vmem:[#allocation2 + $0x80] sm:$0xf]
        %v2946 = vld [vmem:[#allocation2 + $0x84] sm:$0xf]
        %v2947 = vld [vmem:[#allocation2 + $0x88] sm:$0xf]
        %v2948 = vld [vmem:[#allocation2 + $0x8c] sm:$0x1]
        %v2949 = vsel %vm1744, %v2916, 0
        %v2950 = vsel %vm1751, %v2917, 0
        %v2951 = vsel %vm1758, %v2918, 0
        %v2952 = vsel %vm1751, %v2919, 0
        %v2953 = vsel %vm1758, %v2920, 0
        %v2954 = vsel %vm1751, %v2921, 0
        %v2955 = vsel %vm1758, %v2922, 0
        %v2956 = vsel %vm1751, %v2923, 0
        %v2957 = vsel %vm1758, %v2924, 0
        %v2958 = vsel %vm1751, %v2925, 0
        %v2959 = vsel %vm1758, %v2926, 0
        %v2960 = vsel %vm1751, %v2927, 0
        %v2961 = vsel %vm1758, %v2928, 0
        %v2962 = vsel %vm1751, %v2929, 0
        %v2963 = vsel %vm1758, %v2930, 0
        %v2964 = vsel %vm1751, %v2931, 0
        %v2965 = vsel %vm1758, %v2932, 0
        %v2966 = vsel %vm1751, %v2933, 0
        %v2967 = vsel %vm1758, %v2934, 0
        %v2968 = vsel %vm1751, %v2935, 0
        %v2969 = vsel %vm1758, %v2936, 0
        %v2970 = vsel %vm1751, %v2937, 0
        %v2971 = vsel %vm1758, %v2938, 0
        %v2972 = vsel %vm1751, %v2939, 0
        %v2973 = vsel %vm1758, %v2940, 0
        %v2974 = vsel %vm1751, %v2941, 0
        %v2975 = vsel %vm1758, %v2942, 0
        %v2976 = vsel %vm1751, %v2943, 0
        %v2977 = vsel %vm1758, %v2944, 0
        %v2978 = vsel %vm1751, %v2945, 0
        %v2979 = vsel %vm1758, %v2946, 0
        %v2980 = vsel %vm1751, %v2947, 0
        %v2981 = vsel %vm1765, %v2948, 0
        %v2982 = vld [vmem:[%s2254 + $0x8] sm:$0xf]
        %v3016 = vunpack.c.l.b16 %v2949
        %v3017 = vunpack.c.l.b16 %v2950
        %v3018 = vunpack.c.l.b16 %v2951
        %v3019 = vunpack.c.l.b16 %v2952
        %v3020 = vunpack.c.l.b16 %v2953
        %v3021 = vunpack.c.l.b16 %v2954
        %v3022 = vunpack.c.l.b16 %v2955
        %v3023 = vunpack.c.l.b16 %v2956
        %v3024 = vunpack.c.l.b16 %v2957
        %v3025 = vunpack.c.l.b16 %v2958
        %v3026 = vunpack.c.l.b16 %v2959
        %v3027 = vunpack.c.l.b16 %v2960
        %v3028 = vunpack.c.l.b16 %v2961
        %v3029 = vunpack.c.l.b16 %v2962
        %v3030 = vunpack.c.l.b16 %v2963
        %v3031 = vunpack.c.l.b16 %v2964
        %v3032 = vunpack.c.l.b16 %v2965
        %v3033 = vunpack.c.l.b16 %v2966
        %v3034 = vunpack.c.l.b16 %v2967
        %v3035 = vunpack.c.l.b16 %v2968
        %v3036 = vunpack.c.l.b16 %v2969
        %v3037 = vunpack.c.l.b16 %v2970
        %v3038 = vunpack.c.l.b16 %v2971
        %v3039 = vunpack.c.l.b16 %v2972
        %v3040 = vunpack.c.l.b16 %v2973
        %v3041 = vunpack.c.l.b16 %v2974
        %v3042 = vunpack.c.l.b16 %v2975
        %v3043 = vunpack.c.l.b16 %v2976
        %v3044 = vunpack.c.l.b16 %v2977
        %v3045 = vunpack.c.l.b16 %v2978
        %v3046 = vunpack.c.l.b16 %v2979
        %v3047 = vunpack.c.l.b16 %v2980
        %v3048 = vunpack.c.l.b16 %v2981
        %v3049 = vpack.c.b16 %v3017, %v3016
        %v3050 = vpack.c.b16 %v3019, %v3018
        %v3051 = vpack.c.b16 %v3021, %v3020
        %v3052 = vpack.c.b16 %v3023, %v3022
        %v3053 = vpack.c.b16 %v3025, %v3024
        %v3054 = vpack.c.b16 %v3027, %v3026
        %v3055 = vpack.c.b16 %v3029, %v3028
        %v3056 = vpack.c.b16 %v3031, %v3030
        %v3057 = vpack.c.b16 %v3033, %v3032
        %v3058 = vpack.c.b16 %v3035, %v3034
        %v3059 = vpack.c.b16 %v3037, %v3036
        %v3060 = vpack.c.b16 %v3039, %v3038
        %v3061 = vpack.c.b16 %v3041, %v3040
        %v3062 = vpack.c.b16 %v3043, %v3042
        %v3063 = vpack.c.b16 %v3045, %v3044
        %v3064 = vpack.c.b16 %v3047, %v3046
        %v3065 = vpack.c.b16 %v3048, %v3048
        %v3067 = vshrl.u32 %v3049, 16
        %v3069 = vshll.u32 %v3049, 16
        %v3071 = vrot.slane %v3069, 1
        %v3072 = vor.u32 %v3067, %v3071
        %v3074 = vshll.u32 %v3050, 16
        %v3076 = vrot.slane %v3074, 1
        %v3077 = vsel %vm1883, %v3072, %v3076
        %v3078 = vshrl.u32 %v3050, 16
        %v3080 = vor.u32 %v3078, %v3076
        %v3082 = vshll.u32 %v3051, 16
        %v3084 = vrot.slane %v3082, 1
        %v3085 = vsel %vm1883, %v3080, %v3084
        %v3086 = vshrl.u32 %v3051, 16
        %v3088 = vor.u32 %v3086, %v3084
        %v3090 = vshll.u32 %v3052, 16
        %v3092 = vrot.slane %v3090, 1
        %v3093 = vsel %vm1883, %v3088, %v3092
        %v3094 = vshrl.u32 %v3052, 16
        %v3096 = vor.u32 %v3094, %v3092
        %v3098 = vshll.u32 %v3053, 16
        %v3100 = vrot.slane %v3098, 1
        %v3101 = vsel %vm1883, %v3096, %v3100
        %v3102 = vshrl.u32 %v3053, 16
        %v3104 = vor.u32 %v3102, %v3100
        %v3106 = vshll.u32 %v3054, 16
        %v3108 = vrot.slane %v3106, 1
        %v3109 = vsel %vm1883, %v3104, %v3108
        %v3110 = vshrl.u32 %v3054, 16
        %v3112 = vor.u32 %v3110, %v3108
        %v3114 = vshll.u32 %v3055, 16
        %v3116 = vrot.slane %v3114, 1
        %v3117 = vsel %vm1883, %v3112, %v3116
        %v3118 = vshrl.u32 %v3055, 16
        %v3120 = vor.u32 %v3118, %v3116
        %v3122 = vshll.u32 %v3056, 16
        %v3124 = vrot.slane %v3122, 1
        %v3125 = vsel %vm1883, %v3120, %v3124
        %v3126 = vshrl.u32 %v3056, 16
        %v3128 = vor.u32 %v3126, %v3124
        %v3130 = vshll.u32 %v3057, 16
        %v3132 = vrot.slane %v3130, 1
        %v3133 = vsel %vm1883, %v3128, %v3132
        %v3134 = vshrl.u32 %v3057, 16
        %v3136 = vor.u32 %v3134, %v3132
        %v3138 = vshll.u32 %v3058, 16
        %v3140 = vrot.slane %v3138, 1
        %v3141 = vsel %vm1883, %v3136, %v3140
        %v3142 = vshrl.u32 %v3058, 16
        %v3144 = vor.u32 %v3142, %v3140
        %v3146 = vshll.u32 %v3059, 16
        %v3148 = vrot.slane %v3146, 1
        %v3149 = vsel %vm1883, %v3144, %v3148
        %v3150 = vshrl.u32 %v3059, 16
        %v3152 = vor.u32 %v3150, %v3148
        %v3154 = vshll.u32 %v3060, 16
        %v3156 = vrot.slane %v3154, 1
        %v3157 = vsel %vm1883, %v3152, %v3156
        %v3158 = vshrl.u32 %v3060, 16
        %v3160 = vor.u32 %v3158, %v3156
        %v3162 = vshll.u32 %v3061, 16
        %v3164 = vrot.slane %v3162, 1
        %v3165 = vsel %vm1883, %v3160, %v3164
        %v3166 = vshrl.u32 %v3061, 16
        %v3168 = vor.u32 %v3166, %v3164
        %v3170 = vshll.u32 %v3062, 16
        %v3172 = vrot.slane %v3170, 1
        %v3173 = vsel %vm1883, %v3168, %v3172
        %v3174 = vshrl.u32 %v3062, 16
        %v3176 = vor.u32 %v3174, %v3172
        %v3178 = vshll.u32 %v3063, 16
        %v3180 = vrot.slane %v3178, 1
        %v3181 = vsel %vm1883, %v3176, %v3180
        %v3182 = vshrl.u32 %v3063, 16
        %v3184 = vor.u32 %v3182, %v3180
        %v3186 = vshll.u32 %v3064, 16
        %v3188 = vrot.slane %v3186, 1
        %v3189 = vsel %vm1883, %v3184, %v3188
        %v3190 = vshrl.u32 %v3064, 16
        %v3192 = vor.u32 %v3190, %v3188
        %v3194 = vshll.u32 %v3065, 16
        %v3196 = vrot.slane %v3194, 1
        %v3197 = vsel %vm1883, %v3192, %v3196
        %v3199 = vsel %vm1158, %v3077, 0
        %v3202 = vsel %vm1158, %v3085, 0
        %v3205 = vsel %vm1158, %v3093, 0
        %v3208 = vsel %vm1158, %v3101, 0
        %v3211 = vsel %vm1158, %v3109, 0
        %v3214 = vsel %vm1158, %v3117, 0
        %v3217 = vsel %vm1158, %v3125, 0
        %v3220 = vsel %vm1158, %v3133, 0
        %v3223 = vsel %vm1158, %v3141, 0
        %v3226 = vsel %vm1158, %v3149, 0
        %v3229 = vsel %vm1158, %v3157, 0
        %v3232 = vsel %vm1158, %v3165, 0
        %v3235 = vsel %vm1158, %v3173, 0
        %v3238 = vsel %vm1158, %v3181, 0
        %v3241 = vsel %vm1158, %v3189, 0
        %v3244 = vsel %vm1158, %v3197, 0
        %v3247 = vsel %vm1207, %v2982, 0
        %3249 = vmatpush.bf16.msra.mxu0 0
        %3250 = vmatpush.bf16.msra.mxu0 0
        %3251 = vmatpush.bf16.msra.mxu0 0
        %3252 = vmatpush.bf16.msra.mxu0 0
        %3253 = vmatpush.bf16.msra.mxu0 0
        %3254 = vmatpush.bf16.msra.mxu0 0
        %3255 = vmatpush.bf16.msra.mxu0 0
        %3256 = vmatpush.bf16.msra.mxu0 %v3247
        %3257 = vmatmul.bf16.gmra.mxu0 %v3199
        %v3258 = vpop.f32.mrf.mxu0
        %v3259 = vadd.f32 0.0, %v3258
        %v3260 = vpop.f32.mrf.mxu0
        %v3261 = vadd.f32 0.0, %v3260
        %3262 = vmatmul.bf16.gmra.mxu0 %v3202
        %v3263 = vpop.f32.mrf.mxu0
        %v3264 = vadd.f32 0.0, %v3263
        %v3265 = vpop.f32.mrf.mxu0
        %v3266 = vadd.f32 0.0, %v3265
        %3267 = vmatmul.bf16.gmra.mxu0 %v3205
        %v3268 = vpop.f32.mrf.mxu0
        %v3269 = vadd.f32 0.0, %v3268
        %v3270 = vpop.f32.mrf.mxu0
        %v3271 = vadd.f32 0.0, %v3270
        %3272 = vmatmul.bf16.gmra.mxu0 %v3208
        %v3273 = vpop.f32.mrf.mxu0
        %v3274 = vadd.f32 0.0, %v3273
        %v3275 = vpop.f32.mrf.mxu0
        %v3276 = vadd.f32 0.0, %v3275
        %3277 = vmatmul.bf16.gmra.mxu0 %v3211
        %v3278 = vpop.f32.mrf.mxu0
        %v3279 = vadd.f32 0.0, %v3278
        %v3280 = vpop.f32.mrf.mxu0
        %v3281 = vadd.f32 0.0, %v3280
        %3282 = vmatmul.bf16.gmra.mxu0 %v3214
        %v3283 = vpop.f32.mrf.mxu0
        %v3284 = vadd.f32 0.0, %v3283
        %v3285 = vpop.f32.mrf.mxu0
        %v3286 = vadd.f32 0.0, %v3285
        %3287 = vmatmul.bf16.gmra.mxu0 %v3217
        %v3288 = vpop.f32.mrf.mxu0
        %v3289 = vadd.f32 0.0, %v3288
        %v3290 = vpop.f32.mrf.mxu0
        %v3291 = vadd.f32 0.0, %v3290
        %3292 = vmatmul.bf16.gmra.mxu0 %v3220
        %v3293 = vpop.f32.mrf.mxu0
        %v3294 = vadd.f32 0.0, %v3293
        %v3295 = vpop.f32.mrf.mxu0
        %v3296 = vadd.f32 0.0, %v3295
        %3297 = vmatmul.bf16.gmra.mxu0 %v3223
        %v3298 = vpop.f32.mrf.mxu0
        %v3299 = vadd.f32 0.0, %v3298
        %v3300 = vpop.f32.mrf.mxu0
        %v3301 = vadd.f32 0.0, %v3300
        %3302 = vmatmul.bf16.gmra.mxu0 %v3226
        %v3303 = vpop.f32.mrf.mxu0
        %v3304 = vadd.f32 0.0, %v3303
        %v3305 = vpop.f32.mrf.mxu0
        %v3306 = vadd.f32 0.0, %v3305
        %3307 = vmatmul.bf16.gmra.mxu0 %v3229
        %v3308 = vpop.f32.mrf.mxu0
        %v3309 = vadd.f32 0.0, %v3308
        %v3310 = vpop.f32.mrf.mxu0
        %v3311 = vadd.f32 0.0, %v3310
        %3312 = vmatmul.bf16.gmra.mxu0 %v3232
        %v3313 = vpop.f32.mrf.mxu0
        %v3314 = vadd.f32 0.0, %v3313
        %v3315 = vpop.f32.mrf.mxu0
        %v3316 = vadd.f32 0.0, %v3315
        %3317 = vmatmul.bf16.gmra.mxu0 %v3235
        %v3318 = vpop.f32.mrf.mxu0
        %v3319 = vadd.f32 0.0, %v3318
        %v3320 = vpop.f32.mrf.mxu0
        %v3321 = vadd.f32 0.0, %v3320
        %3322 = vmatmul.bf16.gmra.mxu0 %v3238
        %v3323 = vpop.f32.mrf.mxu0
        %v3324 = vadd.f32 0.0, %v3323
        %v3325 = vpop.f32.mrf.mxu0
        %v3326 = vadd.f32 0.0, %v3325
        %3327 = vmatmul.bf16.gmra.mxu0 %v3241
        %v3328 = vpop.f32.mrf.mxu0
        %v3329 = vadd.f32 0.0, %v3328
        %v3330 = vpop.f32.mrf.mxu0
        %v3331 = vadd.f32 0.0, %v3330
        %3332 = vmatmul.bf16.gmra.mxu0 %v3244
        %v3333 = vpop.f32.mrf.mxu0
        %v3334 = vadd.f32 0.0, %v3333
        %v3335 = vpop.f32.mrf.mxu0
        %v3336 = vadd.f32 0.0, %v3335
        %3337 = vdwg.mxu0
        %v3338 = vadd.f32 %v2884, %v3259
        %v3339 = vadd.f32 %v2885, %v3261
        %v3340 = vadd.f32 %v2886, %v3264
        %v3341 = vadd.f32 %v2887, %v3266
        %v3342 = vadd.f32 %v2888, %v3269
        %v3343 = vadd.f32 %v2889, %v3271
        %v3344 = vadd.f32 %v2890, %v3274
        %v3345 = vadd.f32 %v2891, %v3276
        %v3346 = vadd.f32 %v2892, %v3279
        %v3347 = vadd.f32 %v2893, %v3281
        %v3348 = vadd.f32 %v2894, %v3284
        %v3349 = vadd.f32 %v2895, %v3286
        %v3350 = vadd.f32 %v2896, %v3289
        %v3351 = vadd.f32 %v2897, %v3291
        %v3352 = vadd.f32 %v2898, %v3294
        %v3353 = vadd.f32 %v2899, %v3296
        %v3354 = vadd.f32 %v2900, %v3299
        %v3355 = vadd.f32 %v2901, %v3301
        %v3356 = vadd.f32 %v2902, %v3304
        %v3357 = vadd.f32 %v2903, %v3306
        %v3358 = vadd.f32 %v2904, %v3309
        %v3359 = vadd.f32 %v2905, %v3311
        %v3360 = vadd.f32 %v2906, %v3314
        %v3361 = vadd.f32 %v2907, %v3316
        %v3362 = vadd.f32 %v2908, %v3319
        %v3363 = vadd.f32 %v2909, %v3321
        %v3364 = vadd.f32 %v2910, %v3324
        %v3365 = vadd.f32 %v2911, %v3326
        %v3366 = vadd.f32 %v2912, %v3329
        %v3367 = vadd.f32 %v2913, %v3331
        %v3368 = vadd.f32 %v2914, %v3334
        %v3369 = vadd.f32 %v2915, %v3336
        %v3370 = vld [vmem:[#allocation2 + $0x10] sm:$0x8]
        %v3371 = vld [vmem:[#allocation2 + $0x14] sm:$0xf]
        %v3372 = vld [vmem:[#allocation2 + $0x18] sm:$0xf]
        %v3373 = vld [vmem:[#allocation2 + $0x1c] sm:$0xf]
        %v3374 = vld [vmem:[#allocation2 + $0x20] sm:$0xf]
        %v3375 = vld [vmem:[#allocation2 + $0x24] sm:$0xf]
        %v3376 = vld [vmem:[#allocation2 + $0x28] sm:$0xf]
        %v3377 = vld [vmem:[#allocation2 + $0x2c] sm:$0xf]
        %v3378 = vld [vmem:[#allocation2 + $0x30] sm:$0xf]
        %v3379 = vld [vmem:[#allocation2 + $0x34] sm:$0xf]
        %v3380 = vld [vmem:[#allocation2 + $0x38] sm:$0xf]
        %v3381 = vld [vmem:[#allocation2 + $0x3c] sm:$0xf]
        %v3382 = vld [vmem:[#allocation2 + $0x40] sm:$0xf]
        %v3383 = vld [vmem:[#allocation2 + $0x44] sm:$0xf]
        %v3384 = vld [vmem:[#allocation2 + $0x48] sm:$0xf]
        %v3385 = vld [vmem:[#allocation2 + $0x4c] sm:$0xf]
        %v3386 = vld [vmem:[#allocation2 + $0x50] sm:$0xf]
        %v3387 = vld [vmem:[#allocation2 + $0x54] sm:$0xf]
        %v3388 = vld [vmem:[#allocation2 + $0x58] sm:$0xf]
        %v3389 = vld [vmem:[#allocation2 + $0x5c] sm:$0xf]
        %v3390 = vld [vmem:[#allocation2 + $0x60] sm:$0xf]
        %v3391 = vld [vmem:[#allocation2 + $0x64] sm:$0xf]
        %v3392 = vld [vmem:[#allocation2 + $0x68] sm:$0xf]
        %v3393 = vld [vmem:[#allocation2 + $0x6c] sm:$0xf]
        %v3394 = vld [vmem:[#allocation2 + $0x70] sm:$0xf]
        %v3395 = vld [vmem:[#allocation2 + $0x74] sm:$0xf]
        %v3396 = vld [vmem:[#allocation2 + $0x78] sm:$0xf]
        %v3397 = vld [vmem:[#allocation2 + $0x7c] sm:$0xf]
        %v3398 = vld [vmem:[#allocation2 + $0x80] sm:$0xf]
        %v3399 = vld [vmem:[#allocation2 + $0x84] sm:$0xf]
        %v3400 = vld [vmem:[#allocation2 + $0x88] sm:$0xf]
        %v3401 = vld [vmem:[#allocation2 + $0x8c] sm:$0xf]
        %v3402 = vld [vmem:[#allocation2 + $0x90] sm:$0xf]
        %v3403 = vsel %vm1021, %v3370, 0
        %v3404 = vsel %vm1028, %v3371, 0
        %v3405 = vsel %vm1035, %v3372, 0
        %v3406 = vsel %vm1028, %v3373, 0
        %v3407 = vsel %vm1035, %v3374, 0
        %v3408 = vsel %vm1028, %v3375, 0
        %v3409 = vsel %vm1035, %v3376, 0
        %v3410 = vsel %vm1028, %v3377, 0
        %v3411 = vsel %vm1035, %v3378, 0
        %v3412 = vsel %vm1028, %v3379, 0
        %v3413 = vsel %vm1035, %v3380, 0
        %v3414 = vsel %vm1028, %v3381, 0
        %v3415 = vsel %vm1035, %v3382, 0
        %v3416 = vsel %vm1028, %v3383, 0
        %v3417 = vsel %vm1035, %v3384, 0
        %v3418 = vsel %vm1028, %v3385, 0
        %v3419 = vsel %vm1035, %v3386, 0
        %v3420 = vsel %vm1028, %v3387, 0
        %v3421 = vsel %vm1035, %v3388, 0
        %v3422 = vsel %vm1028, %v3389, 0
        %v3423 = vsel %vm1035, %v3390, 0
        %v3424 = vsel %vm1028, %v3391, 0
        %v3425 = vsel %vm1035, %v3392, 0
        %v3426 = vsel %vm1028, %v3393, 0
        %v3427 = vsel %vm1035, %v3394, 0
        %v3428 = vsel %vm1028, %v3395, 0
        %v3429 = vsel %vm1035, %v3396, 0
        %v3430 = vsel %vm1028, %v3397, 0
        %v3431 = vsel %vm1035, %v3398, 0
        %v3432 = vsel %vm1028, %v3399, 0
        %v3433 = vsel %vm1035, %v3400, 0
        %v3434 = vsel %vm1028, %v3401, 0
        %v3435 = vsel %vm1042, %v3402, 0
        %s3436 = scalar_lea.vmem %s5, 24
        %v3437 = vld [vmem:[%s3436] sm:$0xf]
        %v3471 = vunpack.c.l.b16 %v3403
        %v3472 = vunpack.c.l.b16 %v3404
        %v3473 = vunpack.c.l.b16 %v3405
        %v3474 = vunpack.c.l.b16 %v3406
        %v3475 = vunpack.c.l.b16 %v3407
        %v3476 = vunpack.c.l.b16 %v3408
        %v3477 = vunpack.c.l.b16 %v3409
        %v3478 = vunpack.c.l.b16 %v3410
        %v3479 = vunpack.c.l.b16 %v3411
        %v3480 = vunpack.c.l.b16 %v3412
        %v3481 = vunpack.c.l.b16 %v3413
        %v3482 = vunpack.c.l.b16 %v3414
        %v3483 = vunpack.c.l.b16 %v3415
        %v3484 = vunpack.c.l.b16 %v3416
        %v3485 = vunpack.c.l.b16 %v3417
        %v3486 = vunpack.c.l.b16 %v3418
        %v3487 = vunpack.c.l.b16 %v3419
        %v3488 = vunpack.c.l.b16 %v3420
        %v3489 = vunpack.c.l.b16 %v3421
        %v3490 = vunpack.c.l.b16 %v3422
        %v3491 = vunpack.c.l.b16 %v3423
        %v3492 = vunpack.c.l.b16 %v3424
        %v3493 = vunpack.c.l.b16 %v3425
        %v3494 = vunpack.c.l.b16 %v3426
        %v3495 = vunpack.c.l.b16 %v3427
        %v3496 = vunpack.c.l.b16 %v3428
        %v3497 = vunpack.c.l.b16 %v3429
        %v3498 = vunpack.c.l.b16 %v3430
        %v3499 = vunpack.c.l.b16 %v3431
        %v3500 = vunpack.c.l.b16 %v3432
        %v3501 = vunpack.c.l.b16 %v3433
        %v3502 = vunpack.c.l.b16 %v3434
        %v3503 = vunpack.c.l.b16 %v3435
        %v3504 = vpack.c.b16 %v3472, %v3471
        %v3505 = vpack.c.b16 %v3474, %v3473
        %v3506 = vpack.c.b16 %v3476, %v3475
        %v3507 = vpack.c.b16 %v3478, %v3477
        %v3508 = vpack.c.b16 %v3480, %v3479
        %v3509 = vpack.c.b16 %v3482, %v3481
        %v3510 = vpack.c.b16 %v3484, %v3483
        %v3511 = vpack.c.b16 %v3486, %v3485
        %v3512 = vpack.c.b16 %v3488, %v3487
        %v3513 = vpack.c.b16 %v3490, %v3489
        %v3514 = vpack.c.b16 %v3492, %v3491
        %v3515 = vpack.c.b16 %v3494, %v3493
        %v3516 = vpack.c.b16 %v3496, %v3495
        %v3517 = vpack.c.b16 %v3498, %v3497
        %v3518 = vpack.c.b16 %v3500, %v3499
        %v3519 = vpack.c.b16 %v3502, %v3501
        %v3520 = vpack.c.b16 %v3503, %v3503
        %v3522 = vshrl.u32 %v3504, 16
        %v3524 = vrot.slane %v3522, 3
        %v3525 = vshll.u32 %v3504, 16
        %v3527 = vrot.slane %v3525, 4
        %v3528 = vor.u32 %v3524, %v3527
        %v3530 = vshrl.u32 %v3505, 16
        %v3532 = vrot.slane %v3530, 3
        %v3533 = vshll.u32 %v3505, 16
        %v3535 = vrot.slane %v3533, 4
        %v3536 = vor.u32 %v3532, %v3535
        %v3537 = vsel %vm1383, %v3528, %v3536
        %v3539 = vshrl.u32 %v3506, 16
        %v3541 = vrot.slane %v3539, 3
        %v3542 = vshll.u32 %v3506, 16
        %v3544 = vrot.slane %v3542, 4
        %v3545 = vor.u32 %v3541, %v3544
        %v3546 = vsel %vm1383, %v3536, %v3545
        %v3548 = vshrl.u32 %v3507, 16
        %v3550 = vrot.slane %v3548, 3
        %v3551 = vshll.u32 %v3507, 16
        %v3553 = vrot.slane %v3551, 4
        %v3554 = vor.u32 %v3550, %v3553
        %v3555 = vsel %vm1383, %v3545, %v3554
        %v3557 = vshrl.u32 %v3508, 16
        %v3559 = vrot.slane %v3557, 3
        %v3560 = vshll.u32 %v3508, 16
        %v3562 = vrot.slane %v3560, 4
        %v3563 = vor.u32 %v3559, %v3562
        %v3564 = vsel %vm1383, %v3554, %v3563
        %v3566 = vshrl.u32 %v3509, 16
        %v3568 = vrot.slane %v3566, 3
        %v3569 = vshll.u32 %v3509, 16
        %v3571 = vrot.slane %v3569, 4
        %v3572 = vor.u32 %v3568, %v3571
        %v3573 = vsel %vm1383, %v3563, %v3572
        %v3575 = vshrl.u32 %v3510, 16
        %v3577 = vrot.slane %v3575, 3
        %v3578 = vshll.u32 %v3510, 16
        %v3580 = vrot.slane %v3578, 4
        %v3581 = vor.u32 %v3577, %v3580
        %v3582 = vsel %vm1383, %v3572, %v3581
        %v3584 = vshrl.u32 %v3511, 16
        %v3586 = vrot.slane %v3584, 3
        %v3587 = vshll.u32 %v3511, 16
        %v3589 = vrot.slane %v3587, 4
        %v3590 = vor.u32 %v3586, %v3589
        %v3591 = vsel %vm1383, %v3581, %v3590
        %v3593 = vshrl.u32 %v3512, 16
        %v3595 = vrot.slane %v3593, 3
        %v3596 = vshll.u32 %v3512, 16
        %v3598 = vrot.slane %v3596, 4
        %v3599 = vor.u32 %v3595, %v3598
        %v3600 = vsel %vm1383, %v3590, %v3599
        %v3602 = vshrl.u32 %v3513, 16
        %v3604 = vrot.slane %v3602, 3
        %v3605 = vshll.u32 %v3513, 16
        %v3607 = vrot.slane %v3605, 4
        %v3608 = vor.u32 %v3604, %v3607
        %v3609 = vsel %vm1383, %v3599, %v3608
        %v3611 = vshrl.u32 %v3514, 16
        %v3613 = vrot.slane %v3611, 3
        %v3614 = vshll.u32 %v3514, 16
        %v3616 = vrot.slane %v3614, 4
        %v3617 = vor.u32 %v3613, %v3616
        %v3618 = vsel %vm1383, %v3608, %v3617
        %v3620 = vshrl.u32 %v3515, 16
        %v3622 = vrot.slane %v3620, 3
        %v3623 = vshll.u32 %v3515, 16
        %v3625 = vrot.slane %v3623, 4
        %v3626 = vor.u32 %v3622, %v3625
        %v3627 = vsel %vm1383, %v3617, %v3626
        %v3629 = vshrl.u32 %v3516, 16
        %v3631 = vrot.slane %v3629, 3
        %v3632 = vshll.u32 %v3516, 16
        %v3634 = vrot.slane %v3632, 4
        %v3635 = vor.u32 %v3631, %v3634
        %v3636 = vsel %vm1383, %v3626, %v3635
        %v3638 = vshrl.u32 %v3517, 16
        %v3640 = vrot.slane %v3638, 3
        %v3641 = vshll.u32 %v3517, 16
        %v3643 = vrot.slane %v3641, 4
        %v3644 = vor.u32 %v3640, %v3643
        %v3645 = vsel %vm1383, %v3635, %v3644
        %v3647 = vshrl.u32 %v3518, 16
        %v3649 = vrot.slane %v3647, 3
        %v3650 = vshll.u32 %v3518, 16
        %v3652 = vrot.slane %v3650, 4
        %v3653 = vor.u32 %v3649, %v3652
        %v3654 = vsel %vm1383, %v3644, %v3653
        %v3656 = vshrl.u32 %v3519, 16
        %v3658 = vrot.slane %v3656, 3
        %v3659 = vshll.u32 %v3519, 16
        %v3661 = vrot.slane %v3659, 4
        %v3662 = vor.u32 %v3658, %v3661
        %v3663 = vsel %vm1383, %v3653, %v3662
        %v3665 = vshrl.u32 %v3520, 16
        %v3667 = vrot.slane %v3665, 3
        %v3668 = vshll.u32 %v3520, 16
        %v3670 = vrot.slane %v3668, 4
        %v3671 = vor.u32 %v3667, %v3670
        %v3672 = vsel %vm1383, %v3662, %v3671
        %v3674 = vsel %vm1158, %v3537, 0
        %v3677 = vsel %vm1158, %v3546, 0
        %v3680 = vsel %vm1158, %v3555, 0
        %v3683 = vsel %vm1158, %v3564, 0
        %v3686 = vsel %vm1158, %v3573, 0
        %v3689 = vsel %vm1158, %v3582, 0
        %v3692 = vsel %vm1158, %v3591, 0
        %v3695 = vsel %vm1158, %v3600, 0
        %v3698 = vsel %vm1158, %v3609, 0
        %v3701 = vsel %vm1158, %v3618, 0
        %v3704 = vsel %vm1158, %v3627, 0
        %v3707 = vsel %vm1158, %v3636, 0
        %v3710 = vsel %vm1158, %v3645, 0
        %v3713 = vsel %vm1158, %v3654, 0
        %v3716 = vsel %vm1158, %v3663, 0
        %v3719 = vsel %vm1158, %v3672, 0
        %v3722 = vsel %vm1207, %v3437, 0
        %3724 = vmatpush.bf16.msra.mxu0 0
        %3725 = vmatpush.bf16.msra.mxu0 0
        %3726 = vmatpush.bf16.msra.mxu0 0
        %3727 = vmatpush.bf16.msra.mxu0 0
        %3728 = vmatpush.bf16.msra.mxu0 0
        %3729 = vmatpush.bf16.msra.mxu0 0
        %3730 = vmatpush.bf16.msra.mxu0 0
        %3731 = vmatpush.bf16.msra.mxu0 %v3722
        %3732 = vmatmul.bf16.gmra.mxu0 %v3674
        %v3733 = vpop.f32.mrf.mxu0
        %v3734 = vadd.f32 0.0, %v3733
        %v3735 = vpop.f32.mrf.mxu0
        %v3736 = vadd.f32 0.0, %v3735
        %3737 = vmatmul.bf16.gmra.mxu0 %v3677
        %v3738 = vpop.f32.mrf.mxu0
        %v3739 = vadd.f32 0.0, %v3738
        %v3740 = vpop.f32.mrf.mxu0
        %v3741 = vadd.f32 0.0, %v3740
        %3742 = vmatmul.bf16.gmra.mxu0 %v3680
        %v3743 = vpop.f32.mrf.mxu0
        %v3744 = vadd.f32 0.0, %v3743
        %v3745 = vpop.f32.mrf.mxu0
        %v3746 = vadd.f32 0.0, %v3745
        %3747 = vmatmul.bf16.gmra.mxu0 %v3683
        %v3748 = vpop.f32.mrf.mxu0
        %v3749 = vadd.f32 0.0, %v3748
        %v3750 = vpop.f32.mrf.mxu0
        %v3751 = vadd.f32 0.0, %v3750
        %3752 = vmatmul.bf16.gmra.mxu0 %v3686
        %v3753 = vpop.f32.mrf.mxu0
        %v3754 = vadd.f32 0.0, %v3753
        %v3755 = vpop.f32.mrf.mxu0
        %v3756 = vadd.f32 0.0, %v3755
        %3757 = vmatmul.bf16.gmra.mxu0 %v3689
        %v3758 = vpop.f32.mrf.mxu0
        %v3759 = vadd.f32 0.0, %v3758
        %v3760 = vpop.f32.mrf.mxu0
        %v3761 = vadd.f32 0.0, %v3760
        %3762 = vmatmul.bf16.gmra.mxu0 %v3692
        %v3763 = vpop.f32.mrf.mxu0
        %v3764 = vadd.f32 0.0, %v3763
        %v3765 = vpop.f32.mrf.mxu0
        %v3766 = vadd.f32 0.0, %v3765
        %3767 = vmatmul.bf16.gmra.mxu0 %v3695
        %v3768 = vpop.f32.mrf.mxu0
        %v3769 = vadd.f32 0.0, %v3768
        %v3770 = vpop.f32.mrf.mxu0
        %v3771 = vadd.f32 0.0, %v3770
        %3772 = vmatmul.bf16.gmra.mxu0 %v3698
        %v3773 = vpop.f32.mrf.mxu0
        %v3774 = vadd.f32 0.0, %v3773
        %v3775 = vpop.f32.mrf.mxu0
        %v3776 = vadd.f32 0.0, %v3775
        %3777 = vmatmul.bf16.gmra.mxu0 %v3701
        %v3778 = vpop.f32.mrf.mxu0
        %v3779 = vadd.f32 0.0, %v3778
        %v3780 = vpop.f32.mrf.mxu0
        %v3781 = vadd.f32 0.0, %v3780
        %3782 = vmatmul.bf16.gmra.mxu0 %v3704
        %v3783 = vpop.f32.mrf.mxu0
        %v3784 = vadd.f32 0.0, %v3783
        %v3785 = vpop.f32.mrf.mxu0
        %v3786 = vadd.f32 0.0, %v3785
        %3787 = vmatmul.bf16.gmra.mxu0 %v3707
        %v3788 = vpop.f32.mrf.mxu0
        %v3789 = vadd.f32 0.0, %v3788
        %v3790 = vpop.f32.mrf.mxu0
        %v3791 = vadd.f32 0.0, %v3790
        %3792 = vmatmul.bf16.gmra.mxu0 %v3710
        %v3793 = vpop.f32.mrf.mxu0
        %v3794 = vadd.f32 0.0, %v3793
        %v3795 = vpop.f32.mrf.mxu0
        %v3796 = vadd.f32 0.0, %v3795
        %3797 = vmatmul.bf16.gmra.mxu0 %v3713
        %v3798 = vpop.f32.mrf.mxu0
        %v3799 = vadd.f32 0.0, %v3798
        %v3800 = vpop.f32.mrf.mxu0
        %v3801 = vadd.f32 0.0, %v3800
        %3802 = vmatmul.bf16.gmra.mxu0 %v3716
        %v3803 = vpop.f32.mrf.mxu0
        %v3804 = vadd.f32 0.0, %v3803
        %v3805 = vpop.f32.mrf.mxu0
        %v3806 = vadd.f32 0.0, %v3805
        %3807 = vmatmul.bf16.gmra.mxu0 %v3719
        %v3808 = vpop.f32.mrf.mxu0
        %v3809 = vadd.f32 0.0, %v3808
        %v3810 = vpop.f32.mrf.mxu0
        %v3811 = vadd.f32 0.0, %v3810
        %3812 = vdwg.mxu0
        %v3813 = vadd.f32 %v3338, %v3734
        %v3814 = vadd.f32 %v3339, %v3736
        %v3815 = vadd.f32 %v3340, %v3739
        %v3816 = vadd.f32 %v3341, %v3741
        %v3817 = vadd.f32 %v3342, %v3744
        %v3818 = vadd.f32 %v3343, %v3746
        %v3819 = vadd.f32 %v3344, %v3749
        %v3820 = vadd.f32 %v3345, %v3751
        %v3821 = vadd.f32 %v3346, %v3754
        %v3822 = vadd.f32 %v3347, %v3756
        %v3823 = vadd.f32 %v3348, %v3759
        %v3824 = vadd.f32 %v3349, %v3761
        %v3825 = vadd.f32 %v3350, %v3764
        %v3826 = vadd.f32 %v3351, %v3766
        %v3827 = vadd.f32 %v3352, %v3769
        %v3828 = vadd.f32 %v3353, %v3771
        %v3829 = vadd.f32 %v3354, %v3774
        %v3830 = vadd.f32 %v3355, %v3776
        %v3831 = vadd.f32 %v3356, %v3779
        %v3832 = vadd.f32 %v3357, %v3781
        %v3833 = vadd.f32 %v3358, %v3784
        %v3834 = vadd.f32 %v3359, %v3786
        %v3835 = vadd.f32 %v3360, %v3789
        %v3836 = vadd.f32 %v3361, %v3791
        %v3837 = vadd.f32 %v3362, %v3794
        %v3838 = vadd.f32 %v3363, %v3796
        %v3839 = vadd.f32 %v3364, %v3799
        %v3840 = vadd.f32 %v3365, %v3801
        %v3841 = vadd.f32 %v3366, %v3804
        %v3842 = vadd.f32 %v3367, %v3806
        %v3843 = vadd.f32 %v3368, %v3809
        %v3844 = vadd.f32 %v3369, %v3811
        %v3845 = vld [vmem:[%s3436 + $0x4] sm:$0xf]
        %v3878 = vunpack.c.l.b16 %v3371
        %v3879 = vunpack.c.l.b16 %v3372
        %v3880 = vunpack.c.l.b16 %v3373
        %v3881 = vunpack.c.l.b16 %v3374
        %v3882 = vunpack.c.l.b16 %v3375
        %v3883 = vunpack.c.l.b16 %v3376
        %v3884 = vunpack.c.l.b16 %v3377
        %v3885 = vunpack.c.l.b16 %v3378
        %v3886 = vunpack.c.l.b16 %v3379
        %v3887 = vunpack.c.l.b16 %v3380
        %v3888 = vunpack.c.l.b16 %v3381
        %v3889 = vunpack.c.l.b16 %v3382
        %v3890 = vunpack.c.l.b16 %v3383
        %v3891 = vunpack.c.l.b16 %v3384
        %v3892 = vunpack.c.l.b16 %v3385
        %v3893 = vunpack.c.l.b16 %v3386
        %v3894 = vunpack.c.l.b16 %v3387
        %v3895 = vunpack.c.l.b16 %v3388
        %v3896 = vunpack.c.l.b16 %v3389
        %v3897 = vunpack.c.l.b16 %v3390
        %v3898 = vunpack.c.l.b16 %v3391
        %v3899 = vunpack.c.l.b16 %v3392
        %v3900 = vunpack.c.l.b16 %v3393
        %v3901 = vunpack.c.l.b16 %v3394
        %v3902 = vunpack.c.l.b16 %v3395
        %v3903 = vunpack.c.l.b16 %v3396
        %v3904 = vunpack.c.l.b16 %v3397
        %v3905 = vunpack.c.l.b16 %v3398
        %v3906 = vunpack.c.l.b16 %v3399
        %v3907 = vunpack.c.l.b16 %v3400
        %v3908 = vunpack.c.l.b16 %v3401
        %v3909 = vunpack.c.l.b16 %v3402
        %v3910 = vpack.c.b16 %v3879, %v3878
        %v3911 = vpack.c.b16 %v3881, %v3880
        %v3912 = vpack.c.b16 %v3883, %v3882
        %v3913 = vpack.c.b16 %v3885, %v3884
        %v3914 = vpack.c.b16 %v3887, %v3886
        %v3915 = vpack.c.b16 %v3889, %v3888
        %v3916 = vpack.c.b16 %v3891, %v3890
        %v3917 = vpack.c.b16 %v3893, %v3892
        %v3918 = vpack.c.b16 %v3895, %v3894
        %v3919 = vpack.c.b16 %v3897, %v3896
        %v3920 = vpack.c.b16 %v3899, %v3898
        %v3921 = vpack.c.b16 %v3901, %v3900
        %v3922 = vpack.c.b16 %v3903, %v3902
        %v3923 = vpack.c.b16 %v3905, %v3904
        %v3924 = vpack.c.b16 %v3907, %v3906
        %v3925 = vpack.c.b16 %v3909, %v3908
        %v3927 = vsel %vm1158, %v3910, 0
        %v3930 = vsel %vm1158, %v3911, 0
        %v3933 = vsel %vm1158, %v3912, 0
        %v3936 = vsel %vm1158, %v3913, 0
        %v3939 = vsel %vm1158, %v3914, 0
        %v3942 = vsel %vm1158, %v3915, 0
        %v3945 = vsel %vm1158, %v3916, 0
        %v3948 = vsel %vm1158, %v3917, 0
        %v3951 = vsel %vm1158, %v3918, 0
        %v3954 = vsel %vm1158, %v3919, 0
        %v3957 = vsel %vm1158, %v3920, 0
        %v3960 = vsel %vm1158, %v3921, 0
        %v3963 = vsel %vm1158, %v3922, 0
        %v3966 = vsel %vm1158, %v3923, 0
        %v3969 = vsel %vm1158, %v3924, 0
        %v3972 = vsel %vm1158, %v3925, 0
        %v3975 = vsel %vm1207, %v3845, 0
        %3977 = vmatpush.bf16.msra.mxu0 0
        %3978 = vmatpush.bf16.msra.mxu0 0
        %3979 = vmatpush.bf16.msra.mxu0 0
        %3980 = vmatpush.bf16.msra.mxu0 0
        %3981 = vmatpush.bf16.msra.mxu0 0
        %3982 = vmatpush.bf16.msra.mxu0 0
        %3983 = vmatpush.bf16.msra.mxu0 0
        %3984 = vmatpush.bf16.msra.mxu0 %v3975
        %3985 = vmatmul.bf16.gmra.mxu0 %v3927
        %v3986 = vpop.f32.mrf.mxu0
        %v3987 = vadd.f32 0.0, %v3986
        %v3988 = vpop.f32.mrf.mxu0
        %v3989 = vadd.f32 0.0, %v3988
        %3990 = vmatmul.bf16.gmra.mxu0 %v3930
        %v3991 = vpop.f32.mrf.mxu0
        %v3992 = vadd.f32 0.0, %v3991
        %v3993 = vpop.f32.mrf.mxu0
        %v3994 = vadd.f32 0.0, %v3993
        %3995 = vmatmul.bf16.gmra.mxu0 %v3933
        %v3996 = vpop.f32.mrf.mxu0
        %v3997 = vadd.f32 0.0, %v3996
        %v3998 = vpop.f32.mrf.mxu0
        %v3999 = vadd.f32 0.0, %v3998
        %4000 = vmatmul.bf16.gmra.mxu0 %v3936
        %v4001 = vpop.f32.mrf.mxu0
        %v4002 = vadd.f32 0.0, %v4001
        %v4003 = vpop.f32.mrf.mxu0
        %v4004 = vadd.f32 0.0, %v4003
        %4005 = vmatmul.bf16.gmra.mxu0 %v3939
        %v4006 = vpop.f32.mrf.mxu0
        %v4007 = vadd.f32 0.0, %v4006
        %v4008 = vpop.f32.mrf.mxu0
        %v4009 = vadd.f32 0.0, %v4008
        %4010 = vmatmul.bf16.gmra.mxu0 %v3942
        %v4011 = vpop.f32.mrf.mxu0
        %v4012 = vadd.f32 0.0, %v4011
        %v4013 = vpop.f32.mrf.mxu0
        %v4014 = vadd.f32 0.0, %v4013
        %4015 = vmatmul.bf16.gmra.mxu0 %v3945
        %v4016 = vpop.f32.mrf.mxu0
        %v4017 = vadd.f32 0.0, %v4016
        %v4018 = vpop.f32.mrf.mxu0
        %v4019 = vadd.f32 0.0, %v4018
        %4020 = vmatmul.bf16.gmra.mxu0 %v3948
        %v4021 = vpop.f32.mrf.mxu0
        %v4022 = vadd.f32 0.0, %v4021
        %v4023 = vpop.f32.mrf.mxu0
        %v4024 = vadd.f32 0.0, %v4023
        %4025 = vmatmul.bf16.gmra.mxu0 %v3951
        %v4026 = vpop.f32.mrf.mxu0
        %v4027 = vadd.f32 0.0, %v4026
        %v4028 = vpop.f32.mrf.mxu0
        %v4029 = vadd.f32 0.0, %v4028
        %4030 = vmatmul.bf16.gmra.mxu0 %v3954
        %v4031 = vpop.f32.mrf.mxu0
        %v4032 = vadd.f32 0.0, %v4031
        %v4033 = vpop.f32.mrf.mxu0
        %v4034 = vadd.f32 0.0, %v4033
        %4035 = vmatmul.bf16.gmra.mxu0 %v3957
        %v4036 = vpop.f32.mrf.mxu0
        %v4037 = vadd.f32 0.0, %v4036
        %v4038 = vpop.f32.mrf.mxu0
        %v4039 = vadd.f32 0.0, %v4038
        %4040 = vmatmul.bf16.gmra.mxu0 %v3960
        %v4041 = vpop.f32.mrf.mxu0
        %v4042 = vadd.f32 0.0, %v4041
        %v4043 = vpop.f32.mrf.mxu0
        %v4044 = vadd.f32 0.0, %v4043
        %4045 = vmatmul.bf16.gmra.mxu0 %v3963
        %v4046 = vpop.f32.mrf.mxu0
        %v4047 = vadd.f32 0.0, %v4046
        %v4048 = vpop.f32.mrf.mxu0
        %v4049 = vadd.f32 0.0, %v4048
        %4050 = vmatmul.bf16.gmra.mxu0 %v3966
        %v4051 = vpop.f32.mrf.mxu0
        %v4052 = vadd.f32 0.0, %v4051
        %v4053 = vpop.f32.mrf.mxu0
        %v4054 = vadd.f32 0.0, %v4053
        %4055 = vmatmul.bf16.gmra.mxu0 %v3969
        %v4056 = vpop.f32.mrf.mxu0
        %v4057 = vadd.f32 0.0, %v4056
        %v4058 = vpop.f32.mrf.mxu0
        %v4059 = vadd.f32 0.0, %v4058
        %4060 = vmatmul.bf16.gmra.mxu0 %v3972
        %v4061 = vpop.f32.mrf.mxu0
        %v4062 = vadd.f32 0.0, %v4061
        %v4063 = vpop.f32.mrf.mxu0
        %v4064 = vadd.f32 0.0, %v4063
        %4065 = vdwg.mxu0
        %v4066 = vadd.f32 %v3813, %v3987
        %v4067 = vadd.f32 %v3814, %v3989
        %v4068 = vadd.f32 %v3815, %v3992
        %v4069 = vadd.f32 %v3816, %v3994
        %v4070 = vadd.f32 %v3817, %v3997
        %v4071 = vadd.f32 %v3818, %v3999
        %v4072 = vadd.f32 %v3819, %v4002
        %v4073 = vadd.f32 %v3820, %v4004
        %v4074 = vadd.f32 %v3821, %v4007
        %v4075 = vadd.f32 %v3822, %v4009
        %v4076 = vadd.f32 %v3823, %v4012
        %v4077 = vadd.f32 %v3824, %v4014
        %v4078 = vadd.f32 %v3825, %v4017
        %v4079 = vadd.f32 %v3826, %v4019
        %v4080 = vadd.f32 %v3827, %v4022
        %v4081 = vadd.f32 %v3828, %v4024
        %v4082 = vadd.f32 %v3829, %v4027
        %v4083 = vadd.f32 %v3830, %v4029
        %v4084 = vadd.f32 %v3831, %v4032
        %v4085 = vadd.f32 %v3832, %v4034
        %v4086 = vadd.f32 %v3833, %v4037
        %v4087 = vadd.f32 %v3834, %v4039
        %v4088 = vadd.f32 %v3835, %v4042
        %v4089 = vadd.f32 %v3836, %v4044
        %v4090 = vadd.f32 %v3837, %v4047
        %v4091 = vadd.f32 %v3838, %v4049
        %v4092 = vadd.f32 %v3839, %v4052
        %v4093 = vadd.f32 %v3840, %v4054
        %v4094 = vadd.f32 %v3841, %v4057
        %v4095 = vadd.f32 %v3842, %v4059
        %v4096 = vadd.f32 %v3843, %v4062
        %v4097 = vadd.f32 %v3844, %v4064
        %v4098 = vld [vmem:[#allocation2 + $0x14] sm:$0xf]
        %v4099 = vld [vmem:[#allocation2 + $0x18] sm:$0xf]
        %v4100 = vld [vmem:[#allocation2 + $0x1c] sm:$0xf]
        %v4101 = vld [vmem:[#allocation2 + $0x20] sm:$0xf]
        %v4102 = vld [vmem:[#allocation2 + $0x24] sm:$0xf]
        %v4103 = vld [vmem:[#allocation2 + $0x28] sm:$0xf]
        %v4104 = vld [vmem:[#allocation2 + $0x2c] sm:$0xf]
        %v4105 = vld [vmem:[#allocation2 + $0x30] sm:$0xf]
        %v4106 = vld [vmem:[#allocation2 + $0x34] sm:$0xf]
        %v4107 = vld [vmem:[#allocation2 + $0x38] sm:$0xf]
        %v4108 = vld [vmem:[#allocation2 + $0x3c] sm:$0xf]
        %v4109 = vld [vmem:[#allocation2 + $0x40] sm:$0xf]
        %v4110 = vld [vmem:[#allocation2 + $0x44] sm:$0xf]
        %v4111 = vld [vmem:[#allocation2 + $0x48] sm:$0xf]
        %v4112 = vld [vmem:[#allocation2 + $0x4c] sm:$0xf]
        %v4113 = vld [vmem:[#allocation2 + $0x50] sm:$0xf]
        %v4114 = vld [vmem:[#allocation2 + $0x54] sm:$0xf]
        %v4115 = vld [vmem:[#allocation2 + $0x58] sm:$0xf]
        %v4116 = vld [vmem:[#allocation2 + $0x5c] sm:$0xf]
        %v4117 = vld [vmem:[#allocation2 + $0x60] sm:$0xf]
        %v4118 = vld [vmem:[#allocation2 + $0x64] sm:$0xf]
        %v4119 = vld [vmem:[#allocation2 + $0x68] sm:$0xf]
        %v4120 = vld [vmem:[#allocation2 + $0x6c] sm:$0xf]
        %v4121 = vld [vmem:[#allocation2 + $0x70] sm:$0xf]
        %v4122 = vld [vmem:[#allocation2 + $0x74] sm:$0xf]
        %v4123 = vld [vmem:[#allocation2 + $0x78] sm:$0xf]
        %v4124 = vld [vmem:[#allocation2 + $0x7c] sm:$0xf]
        %v4125 = vld [vmem:[#allocation2 + $0x80] sm:$0xf]
        %v4126 = vld [vmem:[#allocation2 + $0x84] sm:$0xf]
        %v4127 = vld [vmem:[#allocation2 + $0x88] sm:$0xf]
        %v4128 = vld [vmem:[#allocation2 + $0x8c] sm:$0xf]
        %v4129 = vld [vmem:[#allocation2 + $0x90] sm:$0xf]
        %v4130 = vld [vmem:[#allocation2 + $0x94] sm:$0x1]
        %v4131 = vsel %vm1744, %v4098, 0
        %v4132 = vsel %vm1751, %v4099, 0
        %v4133 = vsel %vm1758, %v4100, 0
        %v4134 = vsel %vm1751, %v4101, 0
        %v4135 = vsel %vm1758, %v4102, 0
        %v4136 = vsel %vm1751, %v4103, 0
        %v4137 = vsel %vm1758, %v4104, 0
        %v4138 = vsel %vm1751, %v4105, 0
        %v4139 = vsel %vm1758, %v4106, 0
        %v4140 = vsel %vm1751, %v4107, 0
        %v4141 = vsel %vm1758, %v4108, 0
        %v4142 = vsel %vm1751, %v4109, 0
        %v4143 = vsel %vm1758, %v4110, 0
        %v4144 = vsel %vm1751, %v4111, 0
        %v4145 = vsel %vm1758, %v4112, 0
        %v4146 = vsel %vm1751, %v4113, 0
        %v4147 = vsel %vm1758, %v4114, 0
        %v4148 = vsel %vm1751, %v4115, 0
        %v4149 = vsel %vm1758, %v4116, 0
        %v4150 = vsel %vm1751, %v4117, 0
        %v4151 = vsel %vm1758, %v4118, 0
        %v4152 = vsel %vm1751, %v4119, 0
        %v4153 = vsel %vm1758, %v4120, 0
        %v4154 = vsel %vm1751, %v4121, 0
        %v4155 = vsel %vm1758, %v4122, 0
        %v4156 = vsel %vm1751, %v4123, 0
        %v4157 = vsel %vm1758, %v4124, 0
        %v4158 = vsel %vm1751, %v4125, 0
        %v4159 = vsel %vm1758, %v4126, 0
        %v4160 = vsel %vm1751, %v4127, 0
        %v4161 = vsel %vm1758, %v4128, 0
        %v4162 = vsel %vm1751, %v4129, 0
        %v4163 = vsel %vm1765, %v4130, 0
        %v4164 = vld [vmem:[%s3436 + $0x8] sm:$0xf]
        %v4198 = vunpack.c.l.b16 %v4131
        %v4199 = vunpack.c.l.b16 %v4132
        %v4200 = vunpack.c.l.b16 %v4133
        %v4201 = vunpack.c.l.b16 %v4134
        %v4202 = vunpack.c.l.b16 %v4135
        %v4203 = vunpack.c.l.b16 %v4136
        %v4204 = vunpack.c.l.b16 %v4137
        %v4205 = vunpack.c.l.b16 %v4138
        %v4206 = vunpack.c.l.b16 %v4139
        %v4207 = vunpack.c.l.b16 %v4140
        %v4208 = vunpack.c.l.b16 %v4141
        %v4209 = vunpack.c.l.b16 %v4142
        %v4210 = vunpack.c.l.b16 %v4143
        %v4211 = vunpack.c.l.b16 %v4144
        %v4212 = vunpack.c.l.b16 %v4145
        %v4213 = vunpack.c.l.b16 %v4146
        %v4214 = vunpack.c.l.b16 %v4147
        %v4215 = vunpack.c.l.b16 %v4148
        %v4216 = vunpack.c.l.b16 %v4149
        %v4217 = vunpack.c.l.b16 %v4150
        %v4218 = vunpack.c.l.b16 %v4151
        %v4219 = vunpack.c.l.b16 %v4152
        %v4220 = vunpack.c.l.b16 %v4153
        %v4221 = vunpack.c.l.b16 %v4154
        %v4222 = vunpack.c.l.b16 %v4155
        %v4223 = vunpack.c.l.b16 %v4156
        %v4224 = vunpack.c.l.b16 %v4157
        %v4225 = vunpack.c.l.b16 %v4158
        %v4226 = vunpack.c.l.b16 %v4159
        %v4227 = vunpack.c.l.b16 %v4160
        %v4228 = vunpack.c.l.b16 %v4161
        %v4229 = vunpack.c.l.b16 %v4162
        %v4230 = vunpack.c.l.b16 %v4163
        %v4231 = vpack.c.b16 %v4199, %v4198
        %v4232 = vpack.c.b16 %v4201, %v4200
        %v4233 = vpack.c.b16 %v4203, %v4202
        %v4234 = vpack.c.b16 %v4205, %v4204
        %v4235 = vpack.c.b16 %v4207, %v4206
        %v4236 = vpack.c.b16 %v4209, %v4208
        %v4237 = vpack.c.b16 %v4211, %v4210
        %v4238 = vpack.c.b16 %v4213, %v4212
        %v4239 = vpack.c.b16 %v4215, %v4214
        %v4240 = vpack.c.b16 %v4217, %v4216
        %v4241 = vpack.c.b16 %v4219, %v4218
        %v4242 = vpack.c.b16 %v4221, %v4220
        %v4243 = vpack.c.b16 %v4223, %v4222
        %v4244 = vpack.c.b16 %v4225, %v4224
        %v4245 = vpack.c.b16 %v4227, %v4226
        %v4246 = vpack.c.b16 %v4229, %v4228
        %v4247 = vpack.c.b16 %v4230, %v4230
        %v4249 = vshrl.u32 %v4231, 16
        %v4251 = vshll.u32 %v4231, 16
        %v4253 = vrot.slane %v4251, 1
        %v4254 = vor.u32 %v4249, %v4253
        %v4256 = vshll.u32 %v4232, 16
        %v4258 = vrot.slane %v4256, 1
        %v4259 = vsel %vm1883, %v4254, %v4258
        %v4260 = vshrl.u32 %v4232, 16
        %v4262 = vor.u32 %v4260, %v4258
        %v4264 = vshll.u32 %v4233, 16
        %v4266 = vrot.slane %v4264, 1
        %v4267 = vsel %vm1883, %v4262, %v4266
        %v4268 = vshrl.u32 %v4233, 16
        %v4270 = vor.u32 %v4268, %v4266
        %v4272 = vshll.u32 %v4234, 16
        %v4274 = vrot.slane %v4272, 1
        %v4275 = vsel %vm1883, %v4270, %v4274
        %v4276 = vshrl.u32 %v4234, 16
        %v4278 = vor.u32 %v4276, %v4274
        %v4280 = vshll.u32 %v4235, 16
        %v4282 = vrot.slane %v4280, 1
        %v4283 = vsel %vm1883, %v4278, %v4282
        %v4284 = vshrl.u32 %v4235, 16
        %v4286 = vor.u32 %v4284, %v4282
        %v4288 = vshll.u32 %v4236, 16
        %v4290 = vrot.slane %v4288, 1
        %v4291 = vsel %vm1883, %v4286, %v4290
        %v4292 = vshrl.u32 %v4236, 16
        %v4294 = vor.u32 %v4292, %v4290
        %v4296 = vshll.u32 %v4237, 16
        %v4298 = vrot.slane %v4296, 1
        %v4299 = vsel %vm1883, %v4294, %v4298
        %v4300 = vshrl.u32 %v4237, 16
        %v4302 = vor.u32 %v4300, %v4298
        %v4304 = vshll.u32 %v4238, 16
        %v4306 = vrot.slane %v4304, 1
        %v4307 = vsel %vm1883, %v4302, %v4306
        %v4308 = vshrl.u32 %v4238, 16
        %v4310 = vor.u32 %v4308, %v4306
        %v4312 = vshll.u32 %v4239, 16
        %v4314 = vrot.slane %v4312, 1
        %v4315 = vsel %vm1883, %v4310, %v4314
        %v4316 = vshrl.u32 %v4239, 16
        %v4318 = vor.u32 %v4316, %v4314
        %v4320 = vshll.u32 %v4240, 16
        %v4322 = vrot.slane %v4320, 1
        %v4323 = vsel %vm1883, %v4318, %v4322
        %v4324 = vshrl.u32 %v4240, 16
        %v4326 = vor.u32 %v4324, %v4322
        %v4328 = vshll.u32 %v4241, 16
        %v4330 = vrot.slane %v4328, 1
        %v4331 = vsel %vm1883, %v4326, %v4330
        %v4332 = vshrl.u32 %v4241, 16
        %v4334 = vor.u32 %v4332, %v4330
        %v4336 = vshll.u32 %v4242, 16
        %v4338 = vrot.slane %v4336, 1
        %v4339 = vsel %vm1883, %v4334, %v4338
        %v4340 = vshrl.u32 %v4242, 16
        %v4342 = vor.u32 %v4340, %v4338
        %v4344 = vshll.u32 %v4243, 16
        %v4346 = vrot.slane %v4344, 1
        %v4347 = vsel %vm1883, %v4342, %v4346
        %v4348 = vshrl.u32 %v4243, 16
        %v4350 = vor.u32 %v4348, %v4346
        %v4352 = vshll.u32 %v4244, 16
        %v4354 = vrot.slane %v4352, 1
        %v4355 = vsel %vm1883, %v4350, %v4354
        %v4356 = vshrl.u32 %v4244, 16
        %v4358 = vor.u32 %v4356, %v4354
        %v4360 = vshll.u32 %v4245, 16
        %v4362 = vrot.slane %v4360, 1
        %v4363 = vsel %vm1883, %v4358, %v4362
        %v4364 = vshrl.u32 %v4245, 16
        %v4366 = vor.u32 %v4364, %v4362
        %v4368 = vshll.u32 %v4246, 16
        %v4370 = vrot.slane %v4368, 1
        %v4371 = vsel %vm1883, %v4366, %v4370
        %v4372 = vshrl.u32 %v4246, 16
        %v4374 = vor.u32 %v4372, %v4370
        %v4376 = vshll.u32 %v4247, 16
        %v4378 = vrot.slane %v4376, 1
        %v4379 = vsel %vm1883, %v4374, %v4378
        %v4381 = vsel %vm1158, %v4259, 0
        %v4384 = vsel %vm1158, %v4267, 0
        %v4387 = vsel %vm1158, %v4275, 0
        %v4390 = vsel %vm1158, %v4283, 0
        %v4393 = vsel %vm1158, %v4291, 0
        %v4396 = vsel %vm1158, %v4299, 0
        %v4399 = vsel %vm1158, %v4307, 0
        %v4402 = vsel %vm1158, %v4315, 0
        %v4405 = vsel %vm1158, %v4323, 0
        %v4408 = vsel %vm1158, %v4331, 0
        %v4411 = vsel %vm1158, %v4339, 0
        %v4414 = vsel %vm1158, %v4347, 0
        %v4417 = vsel %vm1158, %v4355, 0
        %v4420 = vsel %vm1158, %v4363, 0
        %v4423 = vsel %vm1158, %v4371, 0
        %v4426 = vsel %vm1158, %v4379, 0
        %v4429 = vsel %vm1207, %v4164, 0
        %4431 = vmatpush.bf16.msra.mxu0 0
        %4432 = vmatpush.bf16.msra.mxu0 0
        %4433 = vmatpush.bf16.msra.mxu0 0
        %4434 = vmatpush.bf16.msra.mxu0 0
        %4435 = vmatpush.bf16.msra.mxu0 0
        %4436 = vmatpush.bf16.msra.mxu0 0
        %4437 = vmatpush.bf16.msra.mxu0 0
        %4438 = vmatpush.bf16.msra.mxu0 %v4429
        %4439 = vmatmul.bf16.gmra.mxu0 %v4381
        %v4440 = vpop.f32.mrf.mxu0
        %v4441 = vadd.f32 0.0, %v4440
        %v4442 = vpop.f32.mrf.mxu0
        %v4443 = vadd.f32 0.0, %v4442
        %4444 = vmatmul.bf16.gmra.mxu0 %v4384
        %v4445 = vpop.f32.mrf.mxu0
        %v4446 = vadd.f32 0.0, %v4445
        %v4447 = vpop.f32.mrf.mxu0
        %v4448 = vadd.f32 0.0, %v4447
        %4449 = vmatmul.bf16.gmra.mxu0 %v4387
        %v4450 = vpop.f32.mrf.mxu0
        %v4451 = vadd.f32 0.0, %v4450
        %v4452 = vpop.f32.mrf.mxu0
        %v4453 = vadd.f32 0.0, %v4452
        %4454 = vmatmul.bf16.gmra.mxu0 %v4390
        %v4455 = vpop.f32.mrf.mxu0
        %v4456 = vadd.f32 0.0, %v4455
        %v4457 = vpop.f32.mrf.mxu0
        %v4458 = vadd.f32 0.0, %v4457
        %4459 = vmatmul.bf16.gmra.mxu0 %v4393
        %v4460 = vpop.f32.mrf.mxu0
        %v4461 = vadd.f32 0.0, %v4460
        %v4462 = vpop.f32.mrf.mxu0
        %v4463 = vadd.f32 0.0, %v4462
        %4464 = vmatmul.bf16.gmra.mxu0 %v4396
        %v4465 = vpop.f32.mrf.mxu0
        %v4466 = vadd.f32 0.0, %v4465
        %v4467 = vpop.f32.mrf.mxu0
        %v4468 = vadd.f32 0.0, %v4467
        %4469 = vmatmul.bf16.gmra.mxu0 %v4399
        %v4470 = vpop.f32.mrf.mxu0
        %v4471 = vadd.f32 0.0, %v4470
        %v4472 = vpop.f32.mrf.mxu0
        %v4473 = vadd.f32 0.0, %v4472
        %4474 = vmatmul.bf16.gmra.mxu0 %v4402
        %v4475 = vpop.f32.mrf.mxu0
        %v4476 = vadd.f32 0.0, %v4475
        %v4477 = vpop.f32.mrf.mxu0
        %v4478 = vadd.f32 0.0, %v4477
        %4479 = vmatmul.bf16.gmra.mxu0 %v4405
        %v4480 = vpop.f32.mrf.mxu0
        %v4481 = vadd.f32 0.0, %v4480
        %v4482 = vpop.f32.mrf.mxu0
        %v4483 = vadd.f32 0.0, %v4482
        %4484 = vmatmul.bf16.gmra.mxu0 %v4408
        %v4485 = vpop.f32.mrf.mxu0
        %v4486 = vadd.f32 0.0, %v4485
        %v4487 = vpop.f32.mrf.mxu0
        %v4488 = vadd.f32 0.0, %v4487
        %4489 = vmatmul.bf16.gmra.mxu0 %v4411
        %v4490 = vpop.f32.mrf.mxu0
        %v4491 = vadd.f32 0.0, %v4490
        %v4492 = vpop.f32.mrf.mxu0
        %v4493 = vadd.f32 0.0, %v4492
        %4494 = vmatmul.bf16.gmra.mxu0 %v4414
        %v4495 = vpop.f32.mrf.mxu0
        %v4496 = vadd.f32 0.0, %v4495
        %v4497 = vpop.f32.mrf.mxu0
        %v4498 = vadd.f32 0.0, %v4497
        %4499 = vmatmul.bf16.gmra.mxu0 %v4417
        %v4500 = vpop.f32.mrf.mxu0
        %v4501 = vadd.f32 0.0, %v4500
        %v4502 = vpop.f32.mrf.mxu0
        %v4503 = vadd.f32 0.0, %v4502
        %4504 = vmatmul.bf16.gmra.mxu0 %v4420
        %v4505 = vpop.f32.mrf.mxu0
        %v4506 = vadd.f32 0.0, %v4505
        %v4507 = vpop.f32.mrf.mxu0
        %v4508 = vadd.f32 0.0, %v4507
        %4509 = vmatmul.bf16.gmra.mxu0 %v4423
        %v4510 = vpop.f32.mrf.mxu0
        %v4511 = vadd.f32 0.0, %v4510
        %v4512 = vpop.f32.mrf.mxu0
        %v4513 = vadd.f32 0.0, %v4512
        %4514 = vmatmul.bf16.gmra.mxu0 %v4426
        %v4515 = vpop.f32.mrf.mxu0
        %v4516 = vadd.f32 0.0, %v4515
        %v4517 = vpop.f32.mrf.mxu0
        %v4518 = vadd.f32 0.0, %v4517
        %4519 = vdwg.mxu0
        %v4520 = vadd.f32 %v4066, %v4441
        %v4521 = vadd.f32 %v4067, %v4443
        %v4522 = vadd.f32 %v4068, %v4446
        %v4523 = vadd.f32 %v4069, %v4448
        %v4524 = vadd.f32 %v4070, %v4451
        %v4525 = vadd.f32 %v4071, %v4453
        %v4526 = vadd.f32 %v4072, %v4456
        %v4527 = vadd.f32 %v4073, %v4458
        %v4528 = vadd.f32 %v4074, %v4461
        %v4529 = vadd.f32 %v4075, %v4463
        %v4530 = vadd.f32 %v4076, %v4466
        %v4531 = vadd.f32 %v4077, %v4468
        %v4532 = vadd.f32 %v4078, %v4471
        %v4533 = vadd.f32 %v4079, %v4473
        %v4534 = vadd.f32 %v4080, %v4476
        %v4535 = vadd.f32 %v4081, %v4478
        %v4536 = vadd.f32 %v4082, %v4481
        %v4537 = vadd.f32 %v4083, %v4483
        %v4538 = vadd.f32 %v4084, %v4486
        %v4539 = vadd.f32 %v4085, %v4488
        %v4540 = vadd.f32 %v4086, %v4491
        %v4541 = vadd.f32 %v4087, %v4493
        %v4542 = vadd.f32 %v4088, %v4496
        %v4543 = vadd.f32 %v4089, %v4498
        %v4544 = vadd.f32 %v4090, %v4501
        %v4545 = vadd.f32 %v4091, %v4503
        %v4546 = vadd.f32 %v4092, %v4506
        %v4547 = vadd.f32 %v4093, %v4508
        %v4548 = vadd.f32 %v4094, %v4511
        %v4549 = vadd.f32 %v4095, %v4513
        %v4550 = vadd.f32 %v4096, %v4516
        %v4551 = vadd.f32 %v4097, %v4518
        %v4552 = vld [vmem:[%s6] sm:$0x1]
        %v4554 = vperm.slane %v4552, 0
        %v4556 = vadd.f32 %v4520, %v4554
        %v4557 = vadd.f32 %v4521, %v4554
        %v4558 = vadd.f32 %v4522, %v4554
        %v4559 = vadd.f32 %v4523, %v4554
        %v4560 = vadd.f32 %v4524, %v4554
        %v4561 = vadd.f32 %v4525, %v4554
        %v4562 = vadd.f32 %v4526, %v4554
        %v4563 = vadd.f32 %v4527, %v4554
        %v4564 = vadd.f32 %v4528, %v4554
        %v4565 = vadd.f32 %v4529, %v4554
        %v4566 = vadd.f32 %v4530, %v4554
        %v4567 = vadd.f32 %v4531, %v4554
        %v4568 = vadd.f32 %v4532, %v4554
        %v4569 = vadd.f32 %v4533, %v4554
        %v4570 = vadd.f32 %v4534, %v4554
        %v4571 = vadd.f32 %v4535, %v4554
        %v4572 = vadd.f32 %v4536, %v4554
        %v4573 = vadd.f32 %v4537, %v4554
        %v4574 = vadd.f32 %v4538, %v4554
        %v4575 = vadd.f32 %v4539, %v4554
        %v4576 = vadd.f32 %v4540, %v4554
        %v4577 = vadd.f32 %v4541, %v4554
        %v4578 = vadd.f32 %v4542, %v4554
        %v4579 = vadd.f32 %v4543, %v4554
        %v4580 = vadd.f32 %v4544, %v4554
        %v4581 = vadd.f32 %v4545, %v4554
        %v4582 = vadd.f32 %v4546, %v4554
        %v4583 = vadd.f32 %v4547, %v4554
        %v4584 = vadd.f32 %v4548, %v4554
        %v4585 = vadd.f32 %v4549, %v4554
        %v4586 = vadd.f32 %v4550, %v4554
        %v4587 = vadd.f32 %v4551, %v4554
        %v4588 = vmax.f32 %v4556, 0.0
        %v4589 = vmax.f32 %v4557, 0.0
        %v4590 = vmax.f32 %v4558, 0.0
        %v4591 = vmax.f32 %v4559, 0.0
        %v4592 = vmax.f32 %v4560, 0.0
        %v4593 = vmax.f32 %v4561, 0.0
        %v4594 = vmax.f32 %v4562, 0.0
        %v4595 = vmax.f32 %v4563, 0.0
        %v4596 = vmax.f32 %v4564, 0.0
        %v4597 = vmax.f32 %v4565, 0.0
        %v4598 = vmax.f32 %v4566, 0.0
        %v4599 = vmax.f32 %v4567, 0.0
        %v4600 = vmax.f32 %v4568, 0.0
        %v4601 = vmax.f32 %v4569, 0.0
        %v4602 = vmax.f32 %v4570, 0.0
        %v4603 = vmax.f32 %v4571, 0.0
        %v4604 = vmax.f32 %v4572, 0.0
        %v4605 = vmax.f32 %v4573, 0.0
        %v4606 = vmax.f32 %v4574, 0.0
        %v4607 = vmax.f32 %v4575, 0.0
        %v4608 = vmax.f32 %v4576, 0.0
        %v4609 = vmax.f32 %v4577, 0.0
        %v4610 = vmax.f32 %v4578, 0.0
        %v4611 = vmax.f32 %v4579, 0.0
        %v4612 = vmax.f32 %v4580, 0.0
        %v4613 = vmax.f32 %v4581, 0.0
        %v4614 = vmax.f32 %v4582, 0.0
        %v4615 = vmax.f32 %v4583, 0.0
        %v4616 = vmax.f32 %v4584, 0.0
        %v4617 = vmax.f32 %v4585, 0.0
        %v4618 = vmax.f32 %v4586, 0.0
        %v4619 = vmax.f32 %v4587, 0.0
        %v4620 = vpack.c.bf16 %v4589, %v4588
        %v4621 = vpack.c.bf16 %v4591, %v4590
        %v4622 = vpack.c.bf16 %v4593, %v4592
        %v4623 = vpack.c.bf16 %v4595, %v4594
        %v4624 = vpack.c.bf16 %v4597, %v4596
        %v4625 = vpack.c.bf16 %v4599, %v4598
        %v4626 = vpack.c.bf16 %v4601, %v4600
        %v4627 = vpack.c.bf16 %v4603, %v4602
        %v4628 = vpack.c.bf16 %v4605, %v4604
        %v4629 = vpack.c.bf16 %v4607, %v4606
        %v4630 = vpack.c.bf16 %v4609, %v4608
        %v4631 = vpack.c.bf16 %v4611, %v4610
        %v4632 = vpack.c.bf16 %v4613, %v4612
        %v4633 = vpack.c.bf16 %v4615, %v4614
        %v4634 = vpack.c.bf16 %v4617, %v4616
        %v4635 = vpack.c.bf16 %v4619, %v4618
        %v4636 = vld [vmem:[%s7] sm:$0xf]
        %v4637 = vld [vmem:[%s8] sm:$0x1]
        %v4639 = vperm.slane %v4637, 0
        %v4642 = vsel %vm1158, %v4620, 0
        %v4645 = vsel %vm1158, %v4621, 0
        %v4648 = vsel %vm1158, %v4622, 0
        %v4651 = vsel %vm1158, %v4623, 0
        %v4654 = vsel %vm1158, %v4624, 0
        %v4657 = vsel %vm1158, %v4625, 0
        %v4660 = vsel %vm1158, %v4626, 0
        %v4663 = vsel %vm1158, %v4627, 0
        %v4666 = vsel %vm1158, %v4628, 0
        %v4669 = vsel %vm1158, %v4629, 0
        %v4672 = vsel %vm1158, %v4630, 0
        %v4675 = vsel %vm1158, %v4631, 0
        %v4678 = vsel %vm1158, %v4632, 0
        %v4681 = vsel %vm1158, %v4633, 0
        %v4684 = vsel %vm1158, %v4634, 0
        %v4687 = vsel %vm1158, %v4635, 0
        %v4690 = vsel %vm1207, %v4636, 0
        %4692 = vmatpush.bf16.msra.mxu0 0
        %4693 = vmatpush.bf16.msra.mxu0 0
        %4694 = vmatpush.bf16.msra.mxu0 0
        %4695 = vmatpush.bf16.msra.mxu0 0
        %4696 = vmatpush.bf16.msra.mxu0 0
        %4697 = vmatpush.bf16.msra.mxu0 0
        %4698 = vmatpush.bf16.msra.mxu0 0
        %4699 = vmatpush.bf16.msra.mxu0 %v4690
        %4700 = vmatmul.bf16.gmra.mxu0 %v4642
        %v4701 = vpop.f32.mrf.mxu0
        %v4702 = vadd.f32 %v4639, %v4701
        %v4703 = vpop.f32.mrf.mxu0
        %v4704 = vadd.f32 %v4639, %v4703
        %4705 = vmatmul.bf16.gmra.mxu0 %v4645
        %v4706 = vpop.f32.mrf.mxu0
        %v4707 = vadd.f32 %v4639, %v4706
        %v4708 = vpop.f32.mrf.mxu0
        %v4709 = vadd.f32 %v4639, %v4708
        %4710 = vmatmul.bf16.gmra.mxu0 %v4648
        %v4711 = vpop.f32.mrf.mxu0
        %v4712 = vadd.f32 %v4639, %v4711
        %v4713 = vpop.f32.mrf.mxu0
        %v4714 = vadd.f32 %v4639, %v4713
        %4715 = vmatmul.bf16.gmra.mxu0 %v4651
        %v4716 = vpop.f32.mrf.mxu0
        %v4717 = vadd.f32 %v4639, %v4716
        %v4718 = vpop.f32.mrf.mxu0
        %v4719 = vadd.f32 %v4639, %v4718
        %4720 = vmatmul.bf16.gmra.mxu0 %v4654
        %v4721 = vpop.f32.mrf.mxu0
        %v4722 = vadd.f32 %v4639, %v4721
        %v4723 = vpop.f32.mrf.mxu0
        %v4724 = vadd.f32 %v4639, %v4723
        %4725 = vmatmul.bf16.gmra.mxu0 %v4657
        %v4726 = vpop.f32.mrf.mxu0
        %v4727 = vadd.f32 %v4639, %v4726
        %v4728 = vpop.f32.mrf.mxu0
        %v4729 = vadd.f32 %v4639, %v4728
        %4730 = vmatmul.bf16.gmra.mxu0 %v4660
        %v4731 = vpop.f32.mrf.mxu0
        %v4732 = vadd.f32 %v4639, %v4731
        %v4733 = vpop.f32.mrf.mxu0
        %v4734 = vadd.f32 %v4639, %v4733
        %4735 = vmatmul.bf16.gmra.mxu0 %v4663
        %v4736 = vpop.f32.mrf.mxu0
        %v4737 = vadd.f32 %v4639, %v4736
        %v4738 = vpop.f32.mrf.mxu0
        %v4739 = vadd.f32 %v4639, %v4738
        %4740 = vmatmul.bf16.gmra.mxu0 %v4666
        %v4741 = vpop.f32.mrf.mxu0
        %v4742 = vadd.f32 %v4639, %v4741
        %v4743 = vpop.f32.mrf.mxu0
        %v4744 = vadd.f32 %v4639, %v4743
        %4745 = vmatmul.bf16.gmra.mxu0 %v4669
        %v4746 = vpop.f32.mrf.mxu0
        %v4747 = vadd.f32 %v4639, %v4746
        %v4748 = vpop.f32.mrf.mxu0
        %v4749 = vadd.f32 %v4639, %v4748
        %4750 = vmatmul.bf16.gmra.mxu0 %v4672
        %v4751 = vpop.f32.mrf.mxu0
        %v4752 = vadd.f32 %v4639, %v4751
        %v4753 = vpop.f32.mrf.mxu0
        %v4754 = vadd.f32 %v4639, %v4753
        %4755 = vmatmul.bf16.gmra.mxu0 %v4675
        %v4756 = vpop.f32.mrf.mxu0
        %v4757 = vadd.f32 %v4639, %v4756
        %v4758 = vpop.f32.mrf.mxu0
        %v4759 = vadd.f32 %v4639, %v4758
        %4760 = vmatmul.bf16.gmra.mxu0 %v4678
        %v4761 = vpop.f32.mrf.mxu0
        %v4762 = vadd.f32 %v4639, %v4761
        %v4763 = vpop.f32.mrf.mxu0
        %v4764 = vadd.f32 %v4639, %v4763
        %4765 = vmatmul.bf16.gmra.mxu0 %v4681
        %v4766 = vpop.f32.mrf.mxu0
        %v4767 = vadd.f32 %v4639, %v4766
        %v4768 = vpop.f32.mrf.mxu0
        %v4769 = vadd.f32 %v4639, %v4768
        %4770 = vmatmul.bf16.gmra.mxu0 %v4684
        %v4771 = vpop.f32.mrf.mxu0
        %v4772 = vadd.f32 %v4639, %v4771
        %v4773 = vpop.f32.mrf.mxu0
        %v4774 = vadd.f32 %v4639, %v4773
        %4775 = vmatmul.bf16.gmra.mxu0 %v4687
        %v4776 = vpop.f32.mrf.mxu0
        %v4777 = vadd.f32 %v4639, %v4776
        %v4778 = vpop.f32.mrf.mxu0
        %v4779 = vadd.f32 %v4639, %v4778
        %4780 = vdwg.mxu0
        %v4781 = vld [vmem:[%s429] sm:$0xf]
        %v4782 = vld [vmem:[%s429 + $0x4] sm:$0xf]
        %v4783 = vld [vmem:[%s429 + $0x8] sm:$0xf]
        %v4784 = vld [vmem:[%s429 + $0xc] sm:$0xf]
        %v4785 = vld [vmem:[%s429 + $0x10] sm:$0xf]
        %v4786 = vld [vmem:[%s429 + $0x14] sm:$0xf]
        %v4787 = vld [vmem:[%s429 + $0x18] sm:$0xf]
        %v4788 = vld [vmem:[%s429 + $0x1c] sm:$0xf]
        %v4789 = vld [vmem:[%s429 + $0x20] sm:$0xf]
        %v4790 = vld [vmem:[%s429 + $0x24] sm:$0xf]
        %v4791 = vld [vmem:[%s429 + $0x28] sm:$0xf]
        %v4792 = vld [vmem:[%s429 + $0x2c] sm:$0xf]
        %v4793 = vld [vmem:[%s429 + $0x30] sm:$0xf]
        %v4794 = vld [vmem:[%s429 + $0x34] sm:$0xf]
        %v4795 = vld [vmem:[%s429 + $0x38] sm:$0xf]
        %v4796 = vld [vmem:[%s429 + $0x3c] sm:$0xf]
        %v4797 = vld [vmem:[%s429 + $0x40] sm:$0xf]
        %v4798 = vld [vmem:[%s429 + $0x44] sm:$0xf]
        %v4799 = vld [vmem:[%s429 + $0x48] sm:$0xf]
        %v4800 = vld [vmem:[%s429 + $0x4c] sm:$0xf]
        %v4801 = vld [vmem:[%s429 + $0x50] sm:$0xf]
        %v4802 = vld [vmem:[%s429 + $0x54] sm:$0xf]
        %v4803 = vld [vmem:[%s429 + $0x58] sm:$0xf]
        %v4804 = vld [vmem:[%s429 + $0x5c] sm:$0xf]
        %v4805 = vld [vmem:[%s429 + $0x60] sm:$0xf]
        %v4806 = vld [vmem:[%s429 + $0x64] sm:$0xf]
        %v4807 = vld [vmem:[%s429 + $0x68] sm:$0xf]
        %v4808 = vld [vmem:[%s429 + $0x6c] sm:$0xf]
        %v4809 = vld [vmem:[%s429 + $0x70] sm:$0xf]
        %v4810 = vld [vmem:[%s429 + $0x74] sm:$0xf]
        %v4811 = vld [vmem:[%s429 + $0x78] sm:$0xf]
        %v4812 = vld [vmem:[%s429 + $0x7c] sm:$0xf]
        %v4813 = vunpack.c.l.bf16 %v4781
        %v4814 = vunpack.c.l.bf16 %v4782
        %v4815 = vunpack.c.l.bf16 %v4783
        %v4816 = vunpack.c.l.bf16 %v4784
        %v4817 = vunpack.c.l.bf16 %v4785
        %v4818 = vunpack.c.l.bf16 %v4786
        %v4819 = vunpack.c.l.bf16 %v4787
        %v4820 = vunpack.c.l.bf16 %v4788
        %v4821 = vunpack.c.l.bf16 %v4789
        %v4822 = vunpack.c.l.bf16 %v4790
        %v4823 = vunpack.c.l.bf16 %v4791
        %v4824 = vunpack.c.l.bf16 %v4792
        %v4825 = vunpack.c.l.bf16 %v4793
        %v4826 = vunpack.c.l.bf16 %v4794
        %v4827 = vunpack.c.l.bf16 %v4795
        %v4828 = vunpack.c.l.bf16 %v4796
        %v4829 = vunpack.c.l.bf16 %v4797
        %v4830 = vunpack.c.l.bf16 %v4798
        %v4831 = vunpack.c.l.bf16 %v4799
        %v4832 = vunpack.c.l.bf16 %v4800
        %v4833 = vunpack.c.l.bf16 %v4801
        %v4834 = vunpack.c.l.bf16 %v4802
        %v4835 = vunpack.c.l.bf16 %v4803
        %v4836 = vunpack.c.l.bf16 %v4804
        %v4837 = vunpack.c.l.bf16 %v4805
        %v4838 = vunpack.c.l.bf16 %v4806
        %v4839 = vunpack.c.l.bf16 %v4807
        %v4840 = vunpack.c.l.bf16 %v4808
        %v4841 = vunpack.c.l.bf16 %v4809
        %v4842 = vunpack.c.l.bf16 %v4810
        %v4843 = vunpack.c.l.bf16 %v4811
        %v4844 = vunpack.c.l.bf16 %v4812
        %v4845 = vadd.f32 %v4702, %v4813
        %v4846 = vadd.f32 %v4704, %v4814
        %v4847 = vadd.f32 %v4707, %v4815
        %v4848 = vadd.f32 %v4709, %v4816
        %v4849 = vadd.f32 %v4712, %v4817
        %v4850 = vadd.f32 %v4714, %v4818
        %v4851 = vadd.f32 %v4717, %v4819
        %v4852 = vadd.f32 %v4719, %v4820
        %v4853 = vadd.f32 %v4722, %v4821
        %v4854 = vadd.f32 %v4724, %v4822
        %v4855 = vadd.f32 %v4727, %v4823
        %v4856 = vadd.f32 %v4729, %v4824
        %v4857 = vadd.f32 %v4732, %v4825
        %v4858 = vadd.f32 %v4734, %v4826
        %v4859 = vadd.f32 %v4737, %v4827
        %v4860 = vadd.f32 %v4739, %v4828
        %v4861 = vadd.f32 %v4742, %v4829
        %v4862 = vadd.f32 %v4744, %v4830
        %v4863 = vadd.f32 %v4747, %v4831
        %v4864 = vadd.f32 %v4749, %v4832
        %v4865 = vadd.f32 %v4752, %v4833
        %v4866 = vadd.f32 %v4754, %v4834
        %v4867 = vadd.f32 %v4757, %v4835
        %v4868 = vadd.f32 %v4759, %v4836
        %v4869 = vadd.f32 %v4762, %v4837
        %v4870 = vadd.f32 %v4764, %v4838
        %v4871 = vadd.f32 %v4767, %v4839
        %v4872 = vadd.f32 %v4769, %v4840
        %v4873 = vadd.f32 %v4772, %v4841
        %v4874 = vadd.f32 %v4774, %v4842
        %v4875 = vadd.f32 %v4777, %v4843
        %v4876 = vadd.f32 %v4779, %v4844
        %v4877 = vmax.f32 %v4845, 0.0
        %v4878 = vmax.f32 %v4846, 0.0
        %v4879 = vmax.f32 %v4847, 0.0
        %v4880 = vmax.f32 %v4848, 0.0
        %v4881 = vmax.f32 %v4849, 0.0
        %v4882 = vmax.f32 %v4850, 0.0
        %v4883 = vmax.f32 %v4851, 0.0
        %v4884 = vmax.f32 %v4852, 0.0
        %v4885 = vmax.f32 %v4853, 0.0
        %v4886 = vmax.f32 %v4854, 0.0
        %v4887 = vmax.f32 %v4855, 0.0
        %v4888 = vmax.f32 %v4856, 0.0
        %v4889 = vmax.f32 %v4857, 0.0
        %v4890 = vmax.f32 %v4858, 0.0
        %v4891 = vmax.f32 %v4859, 0.0
        %v4892 = vmax.f32 %v4860, 0.0
        %v4893 = vmax.f32 %v4861, 0.0
        %v4894 = vmax.f32 %v4862, 0.0
        %v4895 = vmax.f32 %v4863, 0.0
        %v4896 = vmax.f32 %v4864, 0.0
        %v4897 = vmax.f32 %v4865, 0.0
        %v4898 = vmax.f32 %v4866, 0.0
        %v4899 = vmax.f32 %v4867, 0.0
        %v4900 = vmax.f32 %v4868, 0.0
        %v4901 = vmax.f32 %v4869, 0.0
        %v4902 = vmax.f32 %v4870, 0.0
        %v4903 = vmax.f32 %v4871, 0.0
        %v4904 = vmax.f32 %v4872, 0.0
        %v4905 = vmax.f32 %v4873, 0.0
        %v4906 = vmax.f32 %v4874, 0.0
        %v4907 = vmax.f32 %v4875, 0.0
        %v4908 = vmax.f32 %v4876, 0.0
        %v4909 = vpack.c.bf16 %v4877, %v4877
        %v4910 = vpack.c.bf16 %v4878, %v4878
        %v4911 = vpack.c.bf16 %v4879, %v4879
        %v4912 = vpack.c.bf16 %v4880, %v4880
        %v4913 = vpack.c.bf16 %v4881, %v4881
        %v4914 = vpack.c.bf16 %v4882, %v4882
        %v4915 = vpack.c.bf16 %v4883, %v4883
        %v4916 = vpack.c.bf16 %v4884, %v4884
        %v4917 = vpack.c.bf16 %v4885, %v4885
        %v4918 = vpack.c.bf16 %v4886, %v4886
        %v4919 = vpack.c.bf16 %v4887, %v4887
        %v4920 = vpack.c.bf16 %v4888, %v4888
        %v4921 = vpack.c.bf16 %v4889, %v4889
        %v4922 = vpack.c.bf16 %v4890, %v4890
        %v4923 = vpack.c.bf16 %v4891, %v4891
        %v4924 = vpack.c.bf16 %v4892, %v4892
        %v4925 = vpack.c.bf16 %v4893, %v4893
        %v4926 = vpack.c.bf16 %v4894, %v4894
        %v4927 = vpack.c.bf16 %v4895, %v4895
        %v4928 = vpack.c.bf16 %v4896, %v4896
        %v4929 = vpack.c.bf16 %v4897, %v4897
        %v4930 = vpack.c.bf16 %v4898, %v4898
        %v4931 = vpack.c.bf16 %v4899, %v4899
        %v4932 = vpack.c.bf16 %v4900, %v4900
        %v4933 = vpack.c.bf16 %v4901, %v4901
        %v4934 = vpack.c.bf16 %v4902, %v4902
        %v4935 = vpack.c.bf16 %v4903, %v4903
        %v4936 = vpack.c.bf16 %v4904, %v4904
        %v4937 = vpack.c.bf16 %v4905, %v4905
        %v4938 = vpack.c.bf16 %v4906, %v4906
        %v4939 = vpack.c.bf16 %v4907, %v4907
        %v4940 = vpack.c.bf16 %v4908, %v4908
        %vm4941 = vcmask 257024
        %4942 = vst.msk [vmem:[%s484] sm:$0xf] %vm4941, %v4909
        %4943 = vst.msk [vmem:[%s484 + $0x4] sm:$0xf] %vm4941, %v4910
        %4944 = vst.msk [vmem:[%s484 + $0x8] sm:$0xf] %vm4941, %v4911
        %4945 = vst.msk [vmem:[%s484 + $0xc] sm:$0xf] %vm4941, %v4912
        %4946 = vst.msk [vmem:[%s484 + $0x10] sm:$0xf] %vm4941, %v4913
        %4947 = vst.msk [vmem:[%s484 + $0x14] sm:$0xf] %vm4941, %v4914
        %4948 = vst.msk [vmem:[%s484 + $0x18] sm:$0xf] %vm4941, %v4915
        %4949 = vst.msk [vmem:[%s484 + $0x1c] sm:$0xf] %vm4941, %v4916
        %4950 = vst.msk [vmem:[%s484 + $0x20] sm:$0xf] %vm4941, %v4917
        %4951 = vst.msk [vmem:[%s484 + $0x24] sm:$0xf] %vm4941, %v4918
        %4952 = vst.msk [vmem:[%s484 + $0x28] sm:$0xf] %vm4941, %v4919
        %4953 = vst.msk [vmem:[%s484 + $0x2c] sm:$0xf] %vm4941, %v4920
        %4954 = vst.msk [vmem:[%s484 + $0x30] sm:$0xf] %vm4941, %v4921
        %4955 = vst.msk [vmem:[%s484 + $0x34] sm:$0xf] %vm4941, %v4922
        %4956 = vst.msk [vmem:[%s484 + $0x38] sm:$0xf] %vm4941, %v4923
        %4957 = vst.msk [vmem:[%s484 + $0x3c] sm:$0xf] %vm4941, %v4924
        %4958 = vst.msk [vmem:[%s484 + $0x40] sm:$0xf] %vm4941, %v4925
        %4959 = vst.msk [vmem:[%s484 + $0x44] sm:$0xf] %vm4941, %v4926
        %4960 = vst.msk [vmem:[%s484 + $0x48] sm:$0xf] %vm4941, %v4927
        %4961 = vst.msk [vmem:[%s484 + $0x4c] sm:$0xf] %vm4941, %v4928
        %4962 = vst.msk [vmem:[%s484 + $0x50] sm:$0xf] %vm4941, %v4929
        %4963 = vst.msk [vmem:[%s484 + $0x54] sm:$0xf] %vm4941, %v4930
        %4964 = vst.msk [vmem:[%s484 + $0x58] sm:$0xf] %vm4941, %v4931
        %4965 = vst.msk [vmem:[%s484 + $0x5c] sm:$0xf] %vm4941, %v4932
        %4966 = vst.msk [vmem:[%s484 + $0x60] sm:$0xf] %vm4941, %v4933
        %4967 = vst.msk [vmem:[%s484 + $0x64] sm:$0xf] %vm4941, %v4934
        %4968 = vst.msk [vmem:[%s484 + $0x68] sm:$0xf] %vm4941, %v4935
        %4969 = vst.msk [vmem:[%s484 + $0x6c] sm:$0xf] %vm4941, %v4936
        %4970 = vst.msk [vmem:[%s484 + $0x70] sm:$0xf] %vm4941, %v4937
        %4971 = vst.msk [vmem:[%s484 + $0x74] sm:$0xf] %vm4941, %v4938
        %4972 = vst.msk [vmem:[%s484 + $0x78] sm:$0xf] %vm4941, %v4939
        %4973 = vst.msk [vmem:[%s484 + $0x7c] sm:$0xf] %vm4941, %v4940
        %s4974 = sand.u32 %s277, 1
        %s4975 = scalar_lea.sflag [#allocation5], %s4974
        %s4976 = sand.u32 %s277, 1
        %s4977 = smul.addr %s4976, 128
        %s4978 = scalar_lea.vmem [#allocation9], %s4977
        // Predicated region
        $region85: #{bottleneck_forward.1} parent=55 // pred_check
          %p4979 = pneg %p287
        $region86: #{bottleneck_forward.1} parent=55 // pred_check_branch
          %4981 = sbr.rel (%p4979) target = $region88
        $region87: #{bottleneck_forward.1} parent=55 // pred_region
          %s4982 = smul.u32 16, %s34
          %4984 = vsyncadd %s4975, 0
          %s4985 = smul.addr %s4982, 2
          %s4986 = smul.addr %s33, 32
          %s4987 = sadd.s32 %s4985, %s4986
          %s4988 = smul.addr %s4987, 4
          %s4989 = scalar_lea.hbm %s9, %s4988
          %s4990 = sshll.u32 %s4978, 4
          %s4991 = int_to_ptr.vmem [resolvable:$true] %s4990
          %s4992 = sshll.u32 %s4989, 4
          %s4993 = int_to_ptr.hbm [resolvable:$true] %s4992
          %4998 = dma.vmem_to_hbm [thread:$0]  %s4991, 2048, %s4993, %s4975, 64, 64, 4
        $region88: #{bottleneck_forward.1} parent=55 // pred_fallthru
          _
      $region56: #{bottleneck_forward.1} parent=5 // pred_fallthru
        _
      %p4999 = scmp.le.s32.totalorder 2, %s24
      // Predicated region
      $region89: #{bottleneck_forward.1} parent=5 // pred_check
        %p5000 = pneg %p4999
      $region90: #{bottleneck_forward.1} parent=5 // pred_check_branch
        %5002 = sbr.rel (%p5000) target = $region92
      $region91: #{bottleneck_forward.1} parent=5 // pred_region
        %s5003 = ssub.s32 %s24, 2
        // Predicated region
        $region93: #{bottleneck_forward.1} parent=91 // pred_check
          %p5004 = pneg %p293
        $region94: #{bottleneck_forward.1} parent=91 // pred_check_branch
          %5006 = sbr.rel (%p5004) target = $region96
        $region95: #{bottleneck_forward.1} parent=91 // pred_region
          %s5007 = sand.u32 %s278, 1
          %s5008 = scalar_lea.sflag [#allocation5], %s5007
          %s5009 = sand.u32 %s278, 1
          %s5010 = smul.addr %s5009, 128
          %s5011 = scalar_lea.vmem [#allocation9], %s5010
          %5013 = dma.done %s5008, 2048
        $region96: #{bottleneck_forward.1} parent=91 // pred_fallthru
          _
      $region92: #{bottleneck_forward.1} parent=5 // pred_fallthru
        _
    $region6: #{bottleneck_forward.1} parent=1 // loop_footer
      %s28 = sadd.s32 1, %s24
    $region7: #{bottleneck_forward.1} parent=1 // loop_footer_branch
      %23 = sbr.rel target = $region3
    $region8: #{bottleneck_forward.1} parent=1 // loop_exit
      _
    %5014 = vsyncpa [#allocation4], 1
    %s5015 = scalar_lea.sflag [#allocation4], 1
    %5016 = vsyncpa %s5015, 1
    %5017 = vsyncpa [#allocation7], 1
    %s5018 = scalar_lea.sflag [#allocation7], 1
    %5019 = vsyncpa %s5018, 1
    %5020 = vsyncpa [#allocation5], 1
    %s5021 = scalar_lea.sflag [#allocation5], 1
    %5022 = vsyncpa %s5021, 1

</llo_original>
